<compile_context>
chip_gen: v7x
topology: tpu7x:2x2x1
jax: 0.10.0
libtpu: 0.0.40
codegen_flags: <defaults>
</compile_context>

<pallas_src>
import jax
import jax.numpy as jnp
from jax.experimental import pallas as pl
from jax.experimental.pallas import tpu as pltpu

TICKERS = ['AAPL', 'MSFT', 'GOOGL', 'AMZN', 'META', 'NVDA', 'TSLA']
N_OUT = len(TICKERS)

D_MODEL = 20          # input_dim
N_HEADS = 5           # 20 % 5 == 0 -> module keeps 5 heads
HEAD_DIM = D_MODEL // N_HEADS
DIM_FF = 2048         # nn.TransformerEncoderLayer default dim_feedforward
N_LAYERS = 2
LN_EPS = 1e-5         # nn.LayerNorm default eps
SEQ = 8
BATCH = 2
LANE = 128            # lane-tile width used for the packed QKV weight


def _layernorm(y, gamma, beta):
    mu = jnp.mean(y, axis=-1, keepdims=True)
    var = jnp.mean(jnp.square(y - mu), axis=-1, keepdims=True)
    return (y - mu) * jax.lax.rsqrt(var + LN_EPS) * gamma + beta


def fused_trader_kernel(x_ref, qkv_w_ref, qkv_b_ref, wo_ref, bo_ref,
                        ln_g_ref, ln_b_ref, w1_ref, b1_ref, w2_ref, b2_ref,
                        m_ref, mt_ref, head_w_ref, head_b_ref,
                        o_ref, x_scr):
    """One grid step == one TransformerEncoderLayer; last step also does head+tanh."""
    B, S, D = x_ref.shape
    H = m_ref.shape[1]
    dh = D // H
    scale = 1.0 / (dh ** 0.5)
    l = pl.program_id(0)
    n_layers = pl.num_programs(0)

    # ---- layer 0: load the input tokens into the activation carry ----
    @pl.when(l == 0)
    def _():
        x_scr[...] = x_ref[...].reshape(B * S, D)

    m = m_ref[...]                       # (D, H) head-indicator (0/1), bf16
    mt = mt_ref[...]                     # (H, D)

    x = x_scr[...]                       # (B*S, D) f32 activations
    xb = x.astype(jnp.bfloat16)

    # ---- fused QKV: one (B*S, D)x(D, 3*128) matmul; slices are lane-tile aligned ----
    qkv = jnp.dot(xb, qkv_w_ref[...],
                  preferred_element_type=jnp.float32) + qkv_b_ref[...]   # (B*S, 384)
    k4 = qkv[:, LANE:LANE + D].reshape(B, 1, S, D)
    v4 = qkv[:, 2 * LANE:2 * LANE + D].reshape(B, 1, S, D)

    def attention(q4):
        """q4: (B, Sq, 1, D) -> per-query context (B*Sq, D).

        Per-head scores via an elementwise q*k outer product (VPU) plus a
        (rows, D)@(D, H) head-indicator matmul; probs expanded back to
        per-channel weights with the (H, D) transpose indicator.
        """
        Sq = q4.shape[1]
        prod = q4 * k4                                                   # (B,Sq,S,D)
        scores = jnp.dot(prod.reshape(B * Sq * S, D).astype(jnp.bfloat16), m,
                         preferred_element_type=jnp.float32) * scale
        scores = scores.reshape(B, Sq, S, H)
        scores = scores - jnp.max(scores, axis=2, keepdims=True)
        p = jnp.exp(scores)
        inv = pl.reciprocal(jnp.sum(p, axis=2, keepdims=True), approx=True)
        p = p * inv                                                      # (B,Sq,S,H)
        p_exp = jnp.dot(p.reshape(B * Sq * S, H).astype(jnp.bfloat16), mt,
                        preferred_element_type=jnp.float32).reshape(B, Sq, S, D)
        return jnp.sum(p_exp * v4, axis=2).reshape(B * Sq, D)

    def encoder_tail(x_in, ctx):
        """out-proj + Add&Norm1 + FF(relu) + Add&Norm2 on (rows, D)."""
        attn = jnp.dot(ctx.astype(jnp.bfloat16), wo_ref[...],
                       preferred_element_type=jnp.float32) + bo_ref[...]
        y = _layernorm(x_in + attn, ln_g_ref[0:1, :], ln_b_ref[0:1, :])
        h1 = jnp.dot(y.astype(jnp.bfloat16), w1_ref[...],
                     preferred_element_type=jnp.float32) + b1_ref[...]
        h1 = jnp.maximum(h1, 0.0)
        h2 = jnp.dot(h1.astype(jnp.bfloat16), w2_ref[...],
                     preferred_element_type=jnp.float32) + b2_ref[...]
        return _layernorm(y + h2, ln_g_ref[1:2, :], ln_b_ref[1:2, :])

    # ---- non-final layers: full-sequence update of the activation carry ----
    @pl.when(l < n_layers - 1)
    def _():
        q4 = qkv[:, 0:D].reshape(B, S, 1, D)
        ctx = attention(q4)                           # (B*S, D)
        x_scr[...] = encoder_tail(x, ctx)

    # ---- final layer: only the last token of each window feeds the head ----
    @pl.when(l == n_layers - 1)
    def _():
        x_last = x.reshape(B, S, D)[:, S - 1, :]                          # (B, D)
        q4 = qkv[:, 0:D].reshape(B, S, D)[:, S - 1, :].reshape(B, 1, 1, D)
        ctx = attention(q4)                                               # (B, D)
        x_out = encoder_tail(x_last, ctx)                                 # (B, D)
        o_ref[...] = jnp.tanh(
            jnp.dot(x_out.astype(jnp.bfloat16), head_w_ref[...],
                    preferred_element_type=jnp.float32) + head_b_ref[...])


def pack_params(params):
    """One-time repack of PyTorch-layout params into the kernel layout.

    Call ONCE at model-load time (outside the jitted forward); the packed
    arrays are then passed straight into every call, so no per-call
    transpose / stack / bf16-cast XLA ops or HBM round-trips.
    """
    D = D_MODEL
    layers = params["layers"]

    def stack(fn):
        return jnp.stack([fn(lp) for lp in layers])

    def pack_qkv_w(lp):
        # Wq/Wk/Wv side by side at lane offsets 0 / 128 / 256 (tile aligned).
        w = jnp.zeros((D, 3 * LANE), jnp.float32)
        for i in range(3):
            w = w.at[:, i * LANE:i * LANE + D].set(lp["in_proj_w"][i * D:(i + 1) * D].T)
        return w

    def pack_qkv_b(lp):
        b = jnp.zeros((1, 3 * LANE), jnp.float32)
        for i in range(3):
            b = b.at[0, i * LANE:i * LANE + D].set(lp["in_proj_b"][i * D:(i + 1) * D])
        return b

    # head-indicator matrix: m[d, h] = 1 iff channel d belongs to head h
    head_ids = jnp.arange(D) // HEAD_DIM
    m = (head_ids[:, None] == jnp.arange(N_HEADS)[None, :]).astype(jnp.bfloat16)

    return {
        # matmul operands pre-cast to bf16 (single-pass MXU path); biases / LN stay f32
        "qkv_w": stack(pack_qkv_w).astype(jnp.bfloat16),                   # (L, D, 384)
        "qkv_b": stack(pack_qkv_b),                                        # (L, 1, 384)
        "wo": stack(lambda lp: lp["out_proj_w"].T).astype(jnp.bfloat16),   # (L, D, D)
        "bo": stack(lambda lp: lp["out_proj_b"].reshape(1, D)),            # (L, 1, D)
        "ln_g": stack(lambda lp: jnp.stack([lp["ln1_g"], lp["ln2_g"]])),   # (L, 2, D)
        "ln_b": stack(lambda lp: jnp.stack([lp["ln1_b"], lp["ln2_b"]])),   # (L, 2, D)
        "w1": stack(lambda lp: lp["ff1_w"].T).astype(jnp.bfloat16),        # (L, D, DFF)
        "b1": stack(lambda lp: lp["ff1_b"].reshape(1, DIM_FF)),            # (L, 1, DFF)
        "w2": stack(lambda lp: lp["ff2_w"].T).astype(jnp.bfloat16),        # (L, DFF, D)
        "b2": stack(lambda lp: lp["ff2_b"].reshape(1, D)),                 # (L, 1, D)
        "m": m,                                                            # (D, H)
        "mt": m.T,                                                         # (H, D)
        "head_w": params["head_w"].T.astype(jnp.bfloat16),                 # (D, N_OUT)
        "head_b": params["head_b"].reshape(1, N_OUT),                      # (1, N_OUT)
    }


@jax.jit
def transformer_trader(x, packed):
    B, S, D = x.shape
    L = packed["w1"].shape[0]
    grid_spec = pltpu.PrefetchScalarGridSpec(
        num_scalar_prefetch=0,
        grid=(L,),
        in_specs=[
            # activations: full array, resident across all layer steps
            pl.BlockSpec((B, S, D), lambda l: (0, 0, 0)),
            # per-layer weights: streamed (double-buffered) one layer at a time
            pl.BlockSpec((None, D, 3 * LANE), lambda l: (l, 0, 0)),   # qkv_w
            pl.BlockSpec((None, 1, 3 * LANE), lambda l: (l, 0, 0)),   # qkv_b
            pl.BlockSpec((None, D, D), lambda l: (l, 0, 0)),          # wo
            pl.BlockSpec((None, 1, D), lambda l: (l, 0, 0)),          # bo
            pl.BlockSpec((None, 2, D), lambda l: (l, 0, 0)),          # ln_g
            pl.BlockSpec((None, 2, D), lambda l: (l, 0, 0)),          # ln_b
            pl.BlockSpec((None, D, DIM_FF), lambda l: (l, 0, 0)),     # w1
            pl.BlockSpec((None, 1, DIM_FF), lambda l: (l, 0, 0)),     # b1
            pl.BlockSpec((None, DIM_FF, D), lambda l: (l, 0, 0)),     # w2
            pl.BlockSpec((None, 1, D), lambda l: (l, 0, 0)),          # b2
            # layer-invariant constants / head
            pl.BlockSpec((D, N_HEADS), lambda l: (0, 0)),             # m
            pl.BlockSpec((N_HEADS, D), lambda l: (0, 0)),             # mt
            pl.BlockSpec((D, N_OUT), lambda l: (0, 0)),               # head_w
            pl.BlockSpec((1, N_OUT), lambda l: (0, 0)),               # head_b
        ],
        out_specs=pl.BlockSpec((B, N_OUT), lambda l: (0, 0)),
        scratch_shapes=[pltpu.VMEM((B * S, D), jnp.float32)],          # activation carry
    )
    return pl.pallas_call(
        fused_trader_kernel,
        out_shape=jax.ShapeDtypeStruct((B, N_OUT), jnp.float32),
        grid_spec=grid_spec,
        compiler_params=pltpu.CompilerParams(
            dimension_semantics=("arbitrary",)),   # layers are sequential
    )(x, packed["qkv_w"], packed["qkv_b"], packed["wo"], packed["bo"],
      packed["ln_g"], packed["ln_b"], packed["w1"], packed["b1"],
      packed["w2"], packed["b2"], packed["m"], packed["mt"],
      packed["head_w"], packed["head_b"])


# -------------------- pure-JAX reference (f32) for validation --------------------
def reference_forward(x, params):
    B, S, D = x.shape
    h = x
    for lp in params["layers"]:
        wq, wk, wv = jnp.split(lp["in_proj_w"], 3, axis=0)
        bq, bk, bv = jnp.split(lp["in_proj_b"], 3)
        q = h @ wq.T + bq
        k = h @ wk.T + bk
        v = h @ wv.T + bv
        qh = q.reshape(B, S, N_HEADS, HEAD_DIM).transpose(0, 2, 1, 3)
        kh = k.reshape(B, S, N_HEADS, HEAD_DIM).transpose(0, 2, 1, 3)
        vh = v.reshape(B, S, N_HEADS, HEAD_DIM).transpose(0, 2, 1, 3)
        s = jnp.einsum('bhqd,bhkd->bhqk', qh, kh) / (HEAD_DIM ** 0.5)
        p = jax.nn.softmax(s, axis=-1)
        ctx = jnp.einsum('bhqk,bhkd->bhqd', p, vh).transpose(0, 2, 1, 3).reshape(B, S, D)
        attn = ctx @ lp["out_proj_w"].T + lp["out_proj_b"]
        h1 = _layernorm(h + attn, lp["ln1_g"], lp["ln1_b"])
        ff = jnp.maximum(h1 @ lp["ff1_w"].T + lp["ff1_b"], 0.0) @ lp["ff2_w"].T + lp["ff2_b"]
        h = _layernorm(h1 + ff, lp["ln2_g"], lp["ln2_b"])
    out = h[:, -1, :] @ params["head_w"].T + params["head_b"]
    return jnp.tanh(out)


def init_params(key):
    """Parameters in PyTorch nn.Module layout (out_features, in_features)."""
    params = {"layers": []}
    scale = 0.05
    for _ in range(N_LAYERS):
        keys = jax.random.split(key, 7)
        key = keys[0]
        lp = {
            "in_proj_w": scale * jax.random.normal(keys[1], (3 * D_MODEL, D_MODEL), jnp.float32),
            "in_proj_b": scale * jax.random.normal(keys[2], (3 * D_MODEL,), jnp.float32),
            "out_proj_w": scale * jax.random.normal(keys[3], (D_MODEL, D_MODEL), jnp.float32),
            "out_proj_b": jnp.zeros((D_MODEL,), jnp.float32),
            "ln1_g": jnp.ones((D_MODEL,), jnp.float32),
            "ln1_b": jnp.zeros((D_MODEL,), jnp.float32),
            "ff1_w": scale * jax.random.normal(keys[4], (DIM_FF, D_MODEL), jnp.float32),
            "ff1_b": scale * jax.random.normal(keys[5], (DIM_FF,), jnp.float32),
            "ff2_w": scale * jax.random.normal(keys[6], (D_MODEL, DIM_FF), jnp.float32),
            "ff2_b": jnp.zeros((D_MODEL,), jnp.float32),
            "ln2_g": jnp.ones((D_MODEL,), jnp.float32),
            "ln2_b": jnp.zeros((D_MODEL,), jnp.float32),
        }
        params["layers"].append(lp)
    kw, kb = jax.random.split(key)
    params["head_w"] = scale * jax.random.normal(kw, (N_OUT, D_MODEL), jnp.float32)
    params["head_b"] = scale * jax.random.normal(kb, (N_OUT,), jnp.float32)
    return params


if __name__ == "__main__":
    root = jax.random.PRNGKey(0)
    kx, kp = jax.random.split(root)
    x = jax.random.normal(kx, (BATCH, SEQ, D_MODEL), jnp.float32)
    params = init_params(kp)

    # Pack ONCE at "model load"; every forward call reuses the packed arrays.
    packed = pack_params(params)

    out = transformer_trader(x, packed)
    out = jax.block_until_ready(out)

    assert out.shape == (BATCH, N_OUT), out.shape
    assert bool(jnp.all(jnp.isfinite(out)))
    assert bool(jnp.all(jnp.abs(out) <= 1.0))   # tanh range

    # numerical check vs f32 pure-JAX reference (bf16 matmul inputs + approx
    # reciprocal introduce only small drift)
    ref = reference_forward(x, params)
    assert bool(jnp.max(jnp.abs(out - ref)) < 5e-2), float(jnp.max(jnp.abs(out - ref)))

    # TODO(synk): nn.Dropout(p=0.1) inside the encoder layers is treated as
    # identity (inference semantics); no in-kernel dropout RNG is implemented.
    print("KERNEL_OK")
</pallas_src>

<mosaic_0001>
module attributes {stable_mosaic.version = 11 : i64} {
  func.func @fused_trader_kernel(%arg0: i32, %arg1: memref<2x8x20xf32, #tpu.memory_space<vmem>>, %arg2: memref<1x20x384xbf16, #tpu.memory_space<vmem>>, %arg3: memref<1x1x384xf32, #tpu.memory_space<vmem>>, %arg4: memref<1x20x20xbf16, #tpu.memory_space<vmem>>, %arg5: memref<1x1x20xf32, #tpu.memory_space<vmem>>, %arg6: memref<1x2x20xf32, #tpu.memory_space<vmem>>, %arg7: memref<1x2x20xf32, #tpu.memory_space<vmem>>, %arg8: memref<1x20x2048xbf16, #tpu.memory_space<vmem>>, %arg9: memref<1x1x2048xf32, #tpu.memory_space<vmem>>, %arg10: memref<1x2048x20xbf16, #tpu.memory_space<vmem>>, %arg11: memref<1x1x20xf32, #tpu.memory_space<vmem>>, %arg12: memref<20x5xbf16, #tpu.memory_space<vmem>>, %arg13: memref<5x20xbf16, #tpu.memory_space<vmem>>, %arg14: memref<20x7xbf16, #tpu.memory_space<vmem>>, %arg15: memref<1x7xf32, #tpu.memory_space<vmem>>, %arg16: memref<2x7xf32, #tpu.memory_space<vmem>>, %arg17: memref<16x20xf32, #tpu.memory_space<vmem>>) attributes {dimension_semantics = [#tpu.dimension_semantics<arbitrary>], iteration_bounds = array<i64: 2>, scalar_prefetch = 0 : i64, scratch_operands = 1 : i64, tpu.core_type = #tpu.core_type<tc>, window_params = [{pipeline_mode = #tpu.pipeline_mode<synchronous>, transform_indices = @transform_0, window_bounds = array<i64: 2, 8, 20>}, {transform_indices = @transform_1, window_bounds = array<i64: 1, 20, 384>}, {transform_indices = @transform_2, window_bounds = array<i64: 1, 1, 384>}, {transform_indices = @transform_3, window_bounds = array<i64: 1, 20, 20>}, {transform_indices = @transform_4, window_bounds = array<i64: 1, 1, 20>}, {transform_indices = @transform_5, window_bounds = array<i64: 1, 2, 20>}, {transform_indices = @transform_6, window_bounds = array<i64: 1, 2, 20>}, {transform_indices = @transform_7, window_bounds = array<i64: 1, 20, 2048>}, {transform_indices = @transform_8, window_bounds = array<i64: 1, 1, 2048>}, {transform_indices = @transform_9, window_bounds = array<i64: 1, 2048, 20>}, {transform_indices = @transform_10, window_bounds = array<i64: 1, 1, 20>}, {pipeline_mode = #tpu.pipeline_mode<synchronous>, transform_indices = @transform_11, window_bounds = array<i64: 20, 5>}, {pipeline_mode = #tpu.pipeline_mode<synchronous>, transform_indices = @transform_12, window_bounds = array<i64: 5, 20>}, {pipeline_mode = #tpu.pipeline_mode<synchronous>, transform_indices = @transform_13, window_bounds = array<i64: 20, 7>}, {pipeline_mode = #tpu.pipeline_mode<synchronous>, transform_indices = @transform_14, window_bounds = array<i64: 1, 7>}, {pipeline_mode = #tpu.pipeline_mode<synchronous>, transform_indices = @transform_15, window_bounds = array<i64: 2, 7>}]} {
    %c0_i32 = arith.constant 0 : i32
    %0 = arith.cmpi eq, %arg0, %c0_i32 : i32
    %1 = arith.extui %0 : i1 to i32
    %c0_i32_0 = arith.constant 0 : i32
    %2 = arith.cmpi ne, %1, %c0_i32_0 : i32
    scf.if %2 {
      %c0_15 = arith.constant 0 : index
      %c0_16 = arith.constant 0 : index
      %c0_17 = arith.constant 0 : index
      %24 = vector.load %arg1[%c0_15, %c0_16, %c0_17] : memref<2x8x20xf32, #tpu.memory_space<vmem>>, vector<2x8x20xf32>
      %25 = vector.shape_cast %24 : vector<2x8x20xf32> to vector<16x20xf32>
      %c0_18 = arith.constant 0 : index
      %c0_19 = arith.constant 0 : index
      %26 = vector.load %arg17[%c0_18, %c0_19] : memref<16x20xf32, #tpu.memory_space<vmem>>, vector<16x20xf32>
      tpu.vector_store %arg17[%c0_18, %c0_19], %25 {strides = array<i32>} : memref<16x20xf32, #tpu.memory_space<vmem>>, vector<16x20xf32>,
    } else {
    }
    %c0 = arith.constant 0 : index
    %c0_1 = arith.constant 0 : index
    %3 = vector.load %arg12[%c0, %c0_1] : memref<20x5xbf16, #tpu.memory_space<vmem>>, vector<20x5xbf16>
    %c0_2 = arith.constant 0 : index
    %c0_3 = arith.constant 0 : index
    %4 = vector.load %arg13[%c0_2, %c0_3] : memref<5x20xbf16, #tpu.memory_space<vmem>>, vector<5x20xbf16>
    %c0_4 = arith.constant 0 : index
    %c0_5 = arith.constant 0 : index
    %5 = vector.load %arg17[%c0_4, %c0_5] : memref<16x20xf32, #tpu.memory_space<vmem>>, vector<16x20xf32>
    %6 = arith.truncf %5 : vector<16x20xf32> to vector<16x20xbf16>
    %c0_6 = arith.constant 0 : index
    %c0_7 = arith.constant 0 : index
    %c0_8 = arith.constant 0 : index
    %7 = vector.load %arg2[%c0_6, %c0_7, %c0_8] : memref<1x20x384xbf16, #tpu.memory_space<vmem>>, vector<1x20x384xbf16>
    %8 = vector.shape_cast %7 : vector<1x20x384xbf16> to vector<20x384xbf16>
    %cst = arith.constant dense<0.000000e+00> : vector<16x384xf32>
    %9 = tpu.matmul %6, %8, %cst {dimension_numbers = #tpu.dot_dimension_numbers<[1], [0], [0], [1], [0, 0, 1, 1], [], []>} : vector<16x20xbf16>, vector<20x384xbf16>, vector<16x384xf32> -> vector<16x384xf32>
    %c0_9 = arith.constant 0 : index
    %c0_10 = arith.constant 0 : index
    %c0_11 = arith.constant 0 : index
    %10 = vector.load %arg3[%c0_9, %c0_10, %c0_11] : memref<1x1x384xf32, #tpu.memory_space<vmem>>, vector<1x1x384xf32>
    %11 = vector.shape_cast %10 : vector<1x1x384xf32> to vector<1x384xf32>
    %12 = vector.broadcast %11 : vector<1x384xf32> to vector<16x384xf32>
    %13 = arith.addf %9, %12 : vector<16x384xf32>
    %14 = vector.extract_strided_slice %13 {offsets = [0, 128], sizes = [16, 20], strides = [1, 1]} : vector<16x384xf32> to vector<16x20xf32>
    %15 = vector.shape_cast %14 : vector<16x20xf32> to vector<2x1x8x20xf32>
    %16 = vector.extract_strided_slice %13 {offsets = [0, 256], sizes = [16, 20], strides = [1, 1]} : vector<16x384xf32> to vector<16x20xf32>
    %17 = vector.shape_cast %16 : vector<16x20xf32> to vector<2x1x8x20xf32>
    %c1_i32 = arith.constant 1 : i32
    %18 = arith.cmpi slt, %arg0, %c1_i32 : i32
    %19 = arith.extui %18 : i1 to i32
    %c0_i32_12 = arith.constant 0 : i32
    %20 = arith.cmpi ne, %19, %c0_i32_12 : i32
    scf.if %20 {
      %24 = vector.extract_strided_slice %13 {offsets = [0, 0], sizes = [16, 20], strides = [1, 1]} : vector<16x384xf32> to vector<16x20xf32>
      %25 = vector.shape_cast %24 : vector<16x20xf32> to vector<2x8x1x20xf32>
      %26 = vector.broadcast %25 : vector<2x8x1x20xf32> to vector<2x8x8x20xf32>
      %27 = vector.broadcast %15 : vector<2x1x8x20xf32> to vector<2x8x8x20xf32>
      %28 = arith.mulf %26, %27 : vector<2x8x8x20xf32>
      %29 = vector.shape_cast %28 : vector<2x8x8x20xf32> to vector<128x20xf32>
      %30 = arith.truncf %29 : vector<128x20xf32> to vector<128x20xbf16>
      %cst_15 = arith.constant dense<0.000000e+00> : vector<128x5xf32>
      %31 = tpu.matmul %30, %3, %cst_15 {dimension_numbers = #tpu.dot_dimension_numbers<[1], [0], [0], [1], [0, 0, 1, 1], [], []>} : vector<128x20xbf16>, vector<20x5xbf16>, vector<128x5xf32> -> vector<128x5xf32>
      %cst_16 = arith.constant 5.000000e-01 : f32
      %32 = vector.broadcast %cst_16 : f32 to vector<128x5xf32>
      %33 = arith.mulf %31, %32 : vector<128x5xf32>
      %34 = vector.shape_cast %33 : vector<128x5xf32> to vector<2x8x8x5xf32>
      %cst_17 = arith.constant dense<0xFF800000> : vector<2x8x5xf32>
      %35 = vector.multi_reduction <maximumf>, %34, %cst_17 [2] : vector<2x8x8x5xf32> to vector<2x8x5xf32>
      %36 = vector.shape_cast %35 : vector<2x8x5xf32> to vector<2x8x1x5xf32>
      %37 = vector.broadcast %36 : vector<2x8x1x5xf32> to vector<2x8x8x5xf32>
      %38 = arith.subf %34, %37 : vector<2x8x8x5xf32>
      %39 = math.exp %38 : vector<2x8x8x5xf32>
      %cst_18 = arith.constant dense<0.000000e+00> : vector<2x8x5xf32>
      %40 = vector.multi_reduction <add>, %39, %cst_18 [2] : vector<2x8x8x5xf32> to vector<2x8x5xf32>
      %41 = vector.shape_cast %40 : vector<2x8x5xf32> to vector<2x8x1x5xf32>
      %42 = tpu.reciprocal %41 {approx = true} : vector<2x8x1x5xf32> -> vector<2x8x1x5xf32>
      %43 = vector.broadcast %42 : vector<2x8x1x5xf32> to vector<2x8x8x5xf32>
      %44 = arith.mulf %39, %43 : vector<2x8x8x5xf32>
      %45 = vector.shape_cast %44 : vector<2x8x8x5xf32> to vector<128x5xf32>
      %46 = arith.truncf %45 : vector<128x5xf32> to vector<128x5xbf16>
      %cst_19 = arith.constant dense<0.000000e+00> : vector<128x20xf32>
      %47 = tpu.matmul %46, %4, %cst_19 {dimension_numbers = #tpu.dot_dimension_numbers<[1], [0], [0], [1], [0, 0, 1, 1], [], []>} : vector<128x5xbf16>, vector<5x20xbf16>, vector<128x20xf32> -> vector<128x20xf32>
      %48 = vector.shape_cast %47 : vector<128x20xf32> to vector<2x8x8x20xf32>
      %49 = vector.broadcast %17 : vector<2x1x8x20xf32> to vector<2x8x8x20xf32>
      %50 = arith.mulf %48, %49 : vector<2x8x8x20xf32>
      %cst_20 = arith.constant dense<0.000000e+00> : vector<2x8x20xf32>
      %51 = vector.multi_reduction <add>, %50, %cst_20 [2] : vector<2x8x8x20xf32> to vector<2x8x20xf32>
      %52 = vector.shape_cast %51 : vector<2x8x20xf32> to vector<16x20xf32>
      %53 = arith.truncf %52 : vector<16x20xf32> to vector<16x20xbf16>
      %c0_21 = arith.constant 0 : index
      %c0_22 = arith.constant 0 : index
      %c0_23 = arith.constant 0 : index
      %54 = vector.load %arg4[%c0_21, %c0_22, %c0_23] : memref<1x20x20xbf16, #tpu.memory_space<vmem>>, vector<1x20x20xbf16>
      %55 = vector.shape_cast %54 : vector<1x20x20xbf16> to vector<20x20xbf16>
      %cst_24 = arith.constant dense<0.000000e+00> : vector<16x20xf32>
      %56 = tpu.matmul %53, %55, %cst_24 {dimension_numbers = #tpu.dot_dimension_numbers<[1], [0], [0], [1], [0, 0, 1, 1], [], []>} : vector<16x20xbf16>, vector<20x20xbf16>, vector<16x20xf32> -> vector<16x20xf32>
      %c0_25 = arith.constant 0 : index
      %c0_26 = arith.constant 0 : index
      %c0_27 = arith.constant 0 : index
      %57 = vector.load %arg5[%c0_25, %c0_26, %c0_27] : memref<1x1x20xf32, #tpu.memory_space<vmem>>, vector<1x1x20xf32>
      %58 = vector.shape_cast %57 : vector<1x1x20xf32> to vector<1x20xf32>
      %59 = vector.broadcast %58 : vector<1x20xf32> to vector<16x20xf32>
      %60 = arith.addf %56, %59 : vector<16x20xf32>
      %61 = arith.addf %5, %60 : vector<16x20xf32>
      %c0_28 = arith.constant 0 : index
      %c0_29 = arith.constant 0 : index
      %c0_30 = arith.constant 0 : index
      %62 = vector.load %arg6[%c0_28, %c0_29, %c0_30] : memref<1x2x20xf32, #tpu.memory_space<vmem>>, vector<1x1x20xf32>
      %63 = vector.shape_cast %62 : vector<1x1x20xf32> to vector<1x20xf32>
      %c0_31 = arith.constant 0 : index
      %c0_32 = arith.constant 0 : index
      %c0_33 = arith.constant 0 : index
      %64 = vector.load %arg7[%c0_31, %c0_32, %c0_33] : memref<1x2x20xf32, #tpu.memory_space<vmem>>, vector<1x1x20xf32>
      %65 = vector.shape_cast %64 : vector<1x1x20xf32> to vector<1x20xf32>
      %cst_34 = arith.constant dense<0.000000e+00> : vector<16xf32>
      %66 = vector.multi_reduction <add>, %61, %cst_34 [1] : vector<16x20xf32> to vector<16xf32>
      %67 = vector.shape_cast %66 : vector<16xf32> to vector<16x1xf32>
      %cst_35 = arith.constant 2.000000e+01 : f32
      %68 = vector.broadcast %cst_35 : f32 to vector<16x1xf32>
      %69 = arith.divf %67, %68 : vector<16x1xf32>
      %70 = vector.broadcast %69 : vector<16x1xf32> to vector<16x20xf32>
      %71 = arith.subf %61, %70 : vector<16x20xf32>
      %72 = arith.mulf %71, %71 : vector<16x20xf32>
      %cst_36 = arith.constant dense<0.000000e+00> : vector<16xf32>
      %73 = vector.multi_reduction <add>, %72, %cst_36 [1] : vector<16x20xf32> to vector<16xf32>
      %74 = vector.shape_cast %73 : vector<16xf32> to vector<16x1xf32>
      %cst_37 = arith.constant 2.000000e+01 : f32
      %75 = vector.broadcast %cst_37 : f32 to vector<16x1xf32>
      %76 = arith.divf %74, %75 : vector<16x1xf32>
      %77 = vector.broadcast %69 : vector<16x1xf32> to vector<16x20xf32>
      %78 = arith.subf %61, %77 : vector<16x20xf32>
      %cst_38 = arith.constant 9.99999974E-6 : f32
      %79 = vector.broadcast %cst_38 : f32 to vector<16x1xf32>
      %80 = arith.addf %76, %79 : vector<16x1xf32>
      %81 = math.rsqrt %80 : vector<16x1xf32>
      %82 = vector.broadcast %81 : vector<16x1xf32> to vector<16x20xf32>
      %83 = arith.mulf %78, %82 : vector<16x20xf32>
      %84 = vector.broadcast %63 : vector<1x20xf32> to vector<16x20xf32>
      %85 = arith.mulf %83, %84 : vector<16x20xf32>
      %86 = vector.broadcast %65 : vector<1x20xf32> to vector<16x20xf32>
      %87 = arith.addf %85, %86 : vector<16x20xf32>
      %88 = arith.truncf %87 : vector<16x20xf32> to vector<16x20xbf16>
      %c0_39 = arith.constant 0 : index
      %c0_40 = arith.constant 0 : index
      %c0_41 = arith.constant 0 : index
      %89 = vector.load %arg8[%c0_39, %c0_40, %c0_41] : memref<1x20x2048xbf16, #tpu.memory_space<vmem>>, vector<1x20x2048xbf16>
      %90 = vector.shape_cast %89 : vector<1x20x2048xbf16> to vector<20x2048xbf16>
      %cst_42 = arith.constant dense<0.000000e+00> : vector<16x2048xf32>
      %91 = tpu.matmul %88, %90, %cst_42 {dimension_numbers = #tpu.dot_dimension_numbers<[1], [0], [0], [1], [0, 0, 1, 1], [], []>} : vector<16x20xbf16>, vector<20x2048xbf16>, vector<16x2048xf32> -> vector<16x2048xf32>
      %c0_43 = arith.constant 0 : index
      %c0_44 = arith.constant 0 : index
      %c0_45 = arith.constant 0 : index
      %92 = vector.load %arg9[%c0_43, %c0_44, %c0_45] : memref<1x1x2048xf32, #tpu.memory_space<vmem>>, vector<1x1x2048xf32>
      %93 = vector.shape_cast %92 : vector<1x1x2048xf32> to vector<1x2048xf32>
      %94 = vector.broadcast %93 : vector<1x2048xf32> to vector<16x2048xf32>
      %95 = arith.addf %91, %94 : vector<16x2048xf32>
      %cst_46 = arith.constant 0.000000e+00 : f32
      %96 = vector.broadcast %cst_46 : f32 to vector<16x2048xf32>
      %97 = arith.maximumf %95, %96 : vector<16x2048xf32>
      %98 = arith.truncf %97 : vector<16x2048xf32> to vector<16x2048xbf16>
      %c0_47 = arith.constant 0 : index
      %c0_48 = arith.constant 0 : index
      %c0_49 = arith.constant 0 : index
      %99 = vector.load %arg10[%c0_47, %c0_48, %c0_49] : memref<1x2048x20xbf16, #tpu.memory_space<vmem>>, vector<1x2048x20xbf16>
      %100 = vector.shape_cast %99 : vector<1x2048x20xbf16> to vector<2048x20xbf16>
      %cst_50 = arith.constant dense<0.000000e+00> : vector<16x20xf32>
      %101 = tpu.matmul %98, %100, %cst_50 {dimension_numbers = #tpu.dot_dimension_numbers<[1], [0], [0], [1], [0, 0, 1, 1], [], []>} : vector<16x2048xbf16>, vector<2048x20xbf16>, vector<16x20xf32> -> vector<16x20xf32>
      %c0_51 = arith.constant 0 : index
      %c0_52 = arith.constant 0 : index
      %c0_53 = arith.constant 0 : index
      %102 = vector.load %arg11[%c0_51, %c0_52, %c0_53] : memref<1x1x20xf32, #tpu.memory_space<vmem>>, vector<1x1x20xf32>
      %103 = vector.shape_cast %102 : vector<1x1x20xf32> to vector<1x20xf32>
      %104 = vector.broadcast %103 : vector<1x20xf32> to vector<16x20xf32>
      %105 = arith.addf %101, %104 : vector<16x20xf32>
      %106 = arith.addf %87, %105 : vector<16x20xf32>
      %c0_54 = arith.constant 0 : index
      %c1 = arith.constant 1 : index
      %c0_55 = arith.constant 0 : index
      %107 = vector.load %arg6[%c0_54, %c1, %c0_55] : memref<1x2x20xf32, #tpu.memory_space<vmem>>, vector<1x1x20xf32>
      %108 = vector.shape_cast %107 : vector<1x1x20xf32> to vector<1x20xf32>
      %c0_56 = arith.constant 0 : index
      %c1_57 = arith.constant 1 : index
      %c0_58 = arith.constant 0 : index
      %109 = vector.load %arg7[%c0_56, %c1_57, %c0_58] : memref<1x2x20xf32, #tpu.memory_space<vmem>>, vector<1x1x20xf32>
      %110 = vector.shape_cast %109 : vector<1x1x20xf32> to vector<1x20xf32>
      %cst_59 = arith.constant dense<0.000000e+00> : vector<16xf32>
      %111 = vector.multi_reduction <add>, %106, %cst_59 [1] : vector<16x20xf32> to vector<16xf32>
      %112 = vector.shape_cast %111 : vector<16xf32> to vector<16x1xf32>
      %cst_60 = arith.constant 2.000000e+01 : f32
      %113 = vector.broadcast %cst_60 : f32 to vector<16x1xf32>
      %114 = arith.divf %112, %113 : vector<16x1xf32>
      %115 = vector.broadcast %114 : vector<16x1xf32> to vector<16x20xf32>
      %116 = arith.subf %106, %115 : vector<16x20xf32>
      %117 = arith.mulf %116, %116 : vector<16x20xf32>
      %cst_61 = arith.constant dense<0.000000e+00> : vector<16xf32>
      %118 = vector.multi_reduction <add>, %117, %cst_61 [1] : vector<16x20xf32> to vector<16xf32>
      %119 = vector.shape_cast %118 : vector<16xf32> to vector<16x1xf32>
      %cst_62 = arith.constant 2.000000e+01 : f32
      %120 = vector.broadcast %cst_62 : f32 to vector<16x1xf32>
      %121 = arith.divf %119, %120 : vector<16x1xf32>
      %122 = vector.broadcast %114 : vector<16x1xf32> to vector<16x20xf32>
      %123 = arith.subf %106, %122 : vector<16x20xf32>
      %cst_63 = arith.constant 9.99999974E-6 : f32
      %124 = vector.broadcast %cst_63 : f32 to vector<16x1xf32>
      %125 = arith.addf %121, %124 : vector<16x1xf32>
      %126 = math.rsqrt %125 : vector<16x1xf32>
      %127 = vector.broadcast %126 : vector<16x1xf32> to vector<16x20xf32>
      %128 = arith.mulf %123, %127 : vector<16x20xf32>
      %129 = vector.broadcast %108 : vector<1x20xf32> to vector<16x20xf32>
      %130 = arith.mulf %128, %129 : vector<16x20xf32>
      %131 = vector.broadcast %110 : vector<1x20xf32> to vector<16x20xf32>
      %132 = arith.addf %130, %131 : vector<16x20xf32>
      %c0_64 = arith.constant 0 : index
      %c0_65 = arith.constant 0 : index
      %133 = vector.load %arg17[%c0_64, %c0_65] : memref<16x20xf32, #tpu.memory_space<vmem>>, vector<16x20xf32>
      tpu.vector_store %arg17[%c0_64, %c0_65], %132 {strides = array<i32>} : memref<16x20xf32, #tpu.memory_space<vmem>>, vector<16x20xf32>,
    } else {
    }
    %c1_i32_13 = arith.constant 1 : i32
    %21 = arith.cmpi eq, %arg0, %c1_i32_13 : i32
    %22 = arith.extui %21 : i1 to i32
    %c0_i32_14 = arith.constant 0 : i32
    %23 = arith.cmpi ne, %22, %c0_i32_14 : i32
    scf.if %23 {
      %24 = vector.shape_cast %5 : vector<16x20xf32> to vector<2x8x20xf32>
      %25 = vector.extract_strided_slice %24 {offsets = [0, 7, 0], sizes = [2, 1, 20], strides = [1, 1, 1]} : vector<2x8x20xf32> to vector<2x1x20xf32>
      %26 = vector.shape_cast %25 : vector<2x1x20xf32> to vector<2x20xf32>
      %27 = vector.extract_strided_slice %13 {offsets = [0, 0], sizes = [16, 20], strides = [1, 1]} : vector<16x384xf32> to vector<16x20xf32>
      %28 = vector.shape_cast %27 : vector<16x20xf32> to vector<2x8x20xf32>
      %29 = vector.extract_strided_slice %28 {offsets = [0, 7, 0], sizes = [2, 1, 20], strides = [1, 1, 1]} : vector<2x8x20xf32> to vector<2x1x20xf32>
      %30 = vector.shape_cast %29 : vector<2x1x20xf32> to vector<2x20xf32>
      %31 = vector.shape_cast %30 : vector<2x20xf32> to vector<2x1x1x20xf32>
      %32 = vector.broadcast %31 : vector<2x1x1x20xf32> to vector<2x1x8x20xf32>
      %33 = arith.mulf %32, %15 : vector<2x1x8x20xf32>
      %34 = vector.shape_cast %33 : vector<2x1x8x20xf32> to vector<16x20xf32>
      %35 = arith.truncf %34 : vector<16x20xf32> to vector<16x20xbf16>
      %cst_15 = arith.constant dense<0.000000e+00> : vector<16x5xf32>
      %36 = tpu.matmul %35, %3, %cst_15 {dimension_numbers = #tpu.dot_dimension_numbers<[1], [0], [0], [1], [0, 0, 1, 1], [], []>} : vector<16x20xbf16>, vector<20x5xbf16>, vector<16x5xf32> -> vector<16x5xf32>
      %cst_16 = arith.constant 5.000000e-01 : f32
      %37 = vector.broadcast %cst_16 : f32 to vector<16x5xf32>
      %38 = arith.mulf %36, %37 : vector<16x5xf32>
      %39 = vector.shape_cast %38 : vector<16x5xf32> to vector<2x1x8x5xf32>
      %cst_17 = arith.constant dense<0xFF800000> : vector<2x1x5xf32>
      %40 = vector.multi_reduction <maximumf>, %39, %cst_17 [2] : vector<2x1x8x5xf32> to vector<2x1x5xf32>
      %41 = vector.shape_cast %40 : vector<2x1x5xf32> to vector<2x1x1x5xf32>
      %42 = vector.broadcast %41 : vector<2x1x1x5xf32> to vector<2x1x8x5xf32>
      %43 = arith.subf %39, %42 : vector<2x1x8x5xf32>
      %44 = math.exp %43 : vector<2x1x8x5xf32>
      %cst_18 = arith.constant dense<0.000000e+00> : vector<2x1x5xf32>
      %45 = vector.multi_reduction <add>, %44, %cst_18 [2] : vector<2x1x8x5xf32> to vector<2x1x5xf32>
      %46 = vector.shape_cast %45 : vector<2x1x5xf32> to vector<2x1x1x5xf32>
      %47 = tpu.reciprocal %46 {approx = true} : vector<2x1x1x5xf32> -> vector<2x1x1x5xf32>
      %48 = vector.broadcast %47 : vector<2x1x1x5xf32> to vector<2x1x8x5xf32>
      %49 = arith.mulf %44, %48 : vector<2x1x8x5xf32>
      %50 = vector.shape_cast %49 : vector<2x1x8x5xf32> to vector<16x5xf32>
      %51 = arith.truncf %50 : vector<16x5xf32> to vector<16x5xbf16>
      %cst_19 = arith.constant dense<0.000000e+00> : vector<16x20xf32>
      %52 = tpu.matmul %51, %4, %cst_19 {dimension_numbers = #tpu.dot_dimension_numbers<[1], [0], [0], [1], [0, 0, 1, 1], [], []>} : vector<16x5xbf16>, vector<5x20xbf16>, vector<16x20xf32> -> vector<16x20xf32>
      %53 = vector.shape_cast %52 : vector<16x20xf32> to vector<2x1x8x20xf32>
      %54 = arith.mulf %53, %17 : vector<2x1x8x20xf32>
      %cst_20 = arith.constant dense<0.000000e+00> : vector<2x1x20xf32>
      %55 = vector.multi_reduction <add>, %54, %cst_20 [2] : vector<2x1x8x20xf32> to vector<2x1x20xf32>
      %56 = vector.shape_cast %55 : vector<2x1x20xf32> to vector<2x20xf32>
      %57 = arith.truncf %56 : vector<2x20xf32> to vector<2x20xbf16>
      %c0_21 = arith.constant 0 : index
      %c0_22 = arith.constant 0 : index
      %c0_23 = arith.constant 0 : index
      %58 = vector.load %arg4[%c0_21, %c0_22, %c0_23] : memref<1x20x20xbf16, #tpu.memory_space<vmem>>, vector<1x20x20xbf16>
      %59 = vector.shape_cast %58 : vector<1x20x20xbf16> to vector<20x20xbf16>
      %cst_24 = arith.constant dense<0.000000e+00> : vector<2x20xf32>
      %60 = tpu.matmul %57, %59, %cst_24 {dimension_numbers = #tpu.dot_dimension_numbers<[1], [0], [0], [1], [0, 0, 1, 1], [], []>} : vector<2x20xbf16>, vector<20x20xbf16>, vector<2x20xf32> -> vector<2x20xf32>
      %c0_25 = arith.constant 0 : index
      %c0_26 = arith.constant 0 : index
      %c0_27 = arith.constant 0 : index
      %61 = vector.load %arg5[%c0_25, %c0_26, %c0_27] : memref<1x1x20xf32, #tpu.memory_space<vmem>>, vector<1x1x20xf32>
      %62 = vector.shape_cast %61 : vector<1x1x20xf32> to vector<1x20xf32>
      %63 = vector.broadcast %62 : vector<1x20xf32> to vector<2x20xf32>
      %64 = arith.addf %60, %63 : vector<2x20xf32>
      %65 = arith.addf %26, %64 : vector<2x20xf32>
      %c0_28 = arith.constant 0 : index
      %c0_29 = arith.constant 0 : index
      %c0_30 = arith.constant 0 : index
      %66 = vector.load %arg6[%c0_28, %c0_29, %c0_30] : memref<1x2x20xf32, #tpu.memory_space<vmem>>, vector<1x1x20xf32>
      %67 = vector.shape_cast %66 : vector<1x1x20xf32> to vector<1x20xf32>
      %c0_31 = arith.constant 0 : index
      %c0_32 = arith.constant 0 : index
      %c0_33 = arith.constant 0 : index
      %68 = vector.load %arg7[%c0_31, %c0_32, %c0_33] : memref<1x2x20xf32, #tpu.memory_space<vmem>>, vector<1x1x20xf32>
      %69 = vector.shape_cast %68 : vector<1x1x20xf32> to vector<1x20xf32>
      %cst_34 = arith.constant dense<0.000000e+00> : vector<2xf32>
      %70 = vector.multi_reduction <add>, %65, %cst_34 [1] : vector<2x20xf32> to vector<2xf32>
      %71 = vector.shape_cast %70 : vector<2xf32> to vector<2x1xf32>
      %cst_35 = arith.constant 2.000000e+01 : f32
      %72 = vector.broadcast %cst_35 : f32 to vector<2x1xf32>
      %73 = arith.divf %71, %72 : vector<2x1xf32>
      %74 = vector.broadcast %73 : vector<2x1xf32> to vector<2x20xf32>
      %75 = arith.subf %65, %74 : vector<2x20xf32>
      %76 = arith.mulf %75, %75 : vector<2x20xf32>
      %cst_36 = arith.constant dense<0.000000e+00> : vector<2xf32>
      %77 = vector.multi_reduction <add>, %76, %cst_36 [1] : vector<2x20xf32> to vector<2xf32>
      %78 = vector.shape_cast %77 : vector<2xf32> to vector<2x1xf32>
      %cst_37 = arith.constant 2.000000e+01 : f32
      %79 = vector.broadcast %cst_37 : f32 to vector<2x1xf32>
      %80 = arith.divf %78, %79 : vector<2x1xf32>
      %81 = vector.broadcast %73 : vector<2x1xf32> to vector<2x20xf32>
      %82 = arith.subf %65, %81 : vector<2x20xf32>
      %cst_38 = arith.constant 9.99999974E-6 : f32
      %83 = vector.broadcast %cst_38 : f32 to vector<2x1xf32>
      %84 = arith.addf %80, %83 : vector<2x1xf32>
      %85 = math.rsqrt %84 : vector<2x1xf32>
      %86 = vector.broadcast %85 : vector<2x1xf32> to vector<2x20xf32>
      %87 = arith.mulf %82, %86 : vector<2x20xf32>
      %88 = vector.broadcast %67 : vector<1x20xf32> to vector<2x20xf32>
      %89 = arith.mulf %87, %88 : vector<2x20xf32>
      %90 = vector.broadcast %69 : vector<1x20xf32> to vector<2x20xf32>
      %91 = arith.addf %89, %90 : vector<2x20xf32>
      %92 = arith.truncf %91 : vector<2x20xf32> to vector<2x20xbf16>
      %c0_39 = arith.constant 0 : index
      %c0_40 = arith.constant 0 : index
      %c0_41 = arith.constant 0 : index
      %93 = vector.load %arg8[%c0_39, %c0_40, %c0_41] : memref<1x20x2048xbf16, #tpu.memory_space<vmem>>, vector<1x20x2048xbf16>
      %94 = vector.shape_cast %93 : vector<1x20x2048xbf16> to vector<20x2048xbf16>
      %cst_42 = arith.constant dense<0.000000e+00> : vector<2x2048xf32>
      %95 = tpu.matmul %92, %94, %cst_42 {dimension_numbers = #tpu.dot_dimension_numbers<[1], [0], [0], [1], [0, 0, 1, 1], [], []>} : vector<2x20xbf16>, vector<20x2048xbf16>, vector<2x2048xf32> -> vector<2x2048xf32>
      %c0_43 = arith.constant 0 : index
      %c0_44 = arith.constant 0 : index
      %c0_45 = arith.constant 0 : index
      %96 = vector.load %arg9[%c0_43, %c0_44, %c0_45] : memref<1x1x2048xf32, #tpu.memory_space<vmem>>, vector<1x1x2048xf32>
      %97 = vector.shape_cast %96 : vector<1x1x2048xf32> to vector<1x2048xf32>
      %98 = vector.broadcast %97 : vector<1x2048xf32> to vector<2x2048xf32>
      %99 = arith.addf %95, %98 : vector<2x2048xf32>
      %cst_46 = arith.constant 0.000000e+00 : f32
      %100 = vector.broadcast %cst_46 : f32 to vector<2x2048xf32>
      %101 = arith.maximumf %99, %100 : vector<2x2048xf32>
      %102 = arith.truncf %101 : vector<2x2048xf32> to vector<2x2048xbf16>
      %c0_47 = arith.constant 0 : index
      %c0_48 = arith.constant 0 : index
      %c0_49 = arith.constant 0 : index
      %103 = vector.load %arg10[%c0_47, %c0_48, %c0_49] : memref<1x2048x20xbf16, #tpu.memory_space<vmem>>, vector<1x2048x20xbf16>
      %104 = vector.shape_cast %103 : vector<1x2048x20xbf16> to vector<2048x20xbf16>
      %cst_50 = arith.constant dense<0.000000e+00> : vector<2x20xf32>
      %105 = tpu.matmul %102, %104, %cst_50 {dimension_numbers = #tpu.dot_dimension_numbers<[1], [0], [0], [1], [0, 0, 1, 1], [], []>} : vector<2x2048xbf16>, vector<2048x20xbf16>, vector<2x20xf32> -> vector<2x20xf32>
      %c0_51 = arith.constant 0 : index
      %c0_52 = arith.constant 0 : index
      %c0_53 = arith.constant 0 : index
      %106 = vector.load %arg11[%c0_51, %c0_52, %c0_53] : memref<1x1x20xf32, #tpu.memory_space<vmem>>, vector<1x1x20xf32>
      %107 = vector.shape_cast %106 : vector<1x1x20xf32> to vector<1x20xf32>
      %108 = vector.broadcast %107 : vector<1x20xf32> to vector<2x20xf32>
      %109 = arith.addf %105, %108 : vector<2x20xf32>
      %110 = arith.addf %91, %109 : vector<2x20xf32>
      %c0_54 = arith.constant 0 : index
      %c1 = arith.constant 1 : index
      %c0_55 = arith.constant 0 : index
      %111 = vector.load %arg6[%c0_54, %c1, %c0_55] : memref<1x2x20xf32, #tpu.memory_space<vmem>>, vector<1x1x20xf32>
      %112 = vector.shape_cast %111 : vector<1x1x20xf32> to vector<1x20xf32>
      %c0_56 = arith.constant 0 : index
      %c1_57 = arith.constant 1 : index
      %c0_58 = arith.constant 0 : index
      %113 = vector.load %arg7[%c0_56, %c1_57, %c0_58] : memref<1x2x20xf32, #tpu.memory_space<vmem>>, vector<1x1x20xf32>
      %114 = vector.shape_cast %113 : vector<1x1x20xf32> to vector<1x20xf32>
      %cst_59 = arith.constant dense<0.000000e+00> : vector<2xf32>
      %115 = vector.multi_reduction <add>, %110, %cst_59 [1] : vector<2x20xf32> to vector<2xf32>
      %116 = vector.shape_cast %115 : vector<2xf32> to vector<2x1xf32>
      %cst_60 = arith.constant 2.000000e+01 : f32
      %117 = vector.broadcast %cst_60 : f32 to vector<2x1xf32>
      %118 = arith.divf %116, %117 : vector<2x1xf32>
      %119 = vector.broadcast %118 : vector<2x1xf32> to vector<2x20xf32>
      %120 = arith.subf %110, %119 : vector<2x20xf32>
      %121 = arith.mulf %120, %120 : vector<2x20xf32>
      %cst_61 = arith.constant dense<0.000000e+00> : vector<2xf32>
      %122 = vector.multi_reduction <add>, %121, %cst_61 [1] : vector<2x20xf32> to vector<2xf32>
      %123 = vector.shape_cast %122 : vector<2xf32> to vector<2x1xf32>
      %cst_62 = arith.constant 2.000000e+01 : f32
      %124 = vector.broadcast %cst_62 : f32 to vector<2x1xf32>
      %125 = arith.divf %123, %124 : vector<2x1xf32>
      %126 = vector.broadcast %118 : vector<2x1xf32> to vector<2x20xf32>
      %127 = arith.subf %110, %126 : vector<2x20xf32>
      %cst_63 = arith.constant 9.99999974E-6 : f32
      %128 = vector.broadcast %cst_63 : f32 to vector<2x1xf32>
      %129 = arith.addf %125, %128 : vector<2x1xf32>
      %130 = math.rsqrt %129 : vector<2x1xf32>
      %131 = vector.broadcast %130 : vector<2x1xf32> to vector<2x20xf32>
      %132 = arith.mulf %127, %131 : vector<2x20xf32>
      %133 = vector.broadcast %112 : vector<1x20xf32> to vector<2x20xf32>
      %134 = arith.mulf %132, %133 : vector<2x20xf32>
      %135 = vector.broadcast %114 : vector<1x20xf32> to vector<2x20xf32>
      %136 = arith.addf %134, %135 : vector<2x20xf32>
      %137 = arith.truncf %136 : vector<2x20xf32> to vector<2x20xbf16>
      %c0_64 = arith.constant 0 : index
      %c0_65 = arith.constant 0 : index
      %138 = vector.load %arg14[%c0_64, %c0_65] : memref<20x7xbf16, #tpu.memory_space<vmem>>, vector<20x7xbf16>
      %cst_66 = arith.constant dense<0.000000e+00> : vector<2x7xf32>
      %139 = tpu.matmul %137, %138, %cst_66 {dimension_numbers = #tpu.dot_dimension_numbers<[1], [0], [0], [1], [0, 0, 1, 1], [], []>} : vector<2x20xbf16>, vector<20x7xbf16>, vector<2x7xf32> -> vector<2x7xf32>
      %c0_67 = arith.constant 0 : index
      %c0_68 = arith.constant 0 : index
      %140 = vector.load %arg15[%c0_67, %c0_68] : memref<1x7xf32, #tpu.memory_space<vmem>>, vector<1x7xf32>
      %141 = vector.broadcast %140 : vector<1x7xf32> to vector<2x7xf32>
      %142 = arith.addf %139, %141 : vector<2x7xf32>
      %143 = math.tanh %142 : vector<2x7xf32>
      %c0_69 = arith.constant 0 : index
      %c0_70 = arith.constant 0 : index
      %144 = vector.load %arg16[%c0_69, %c0_70] : memref<2x7xf32, #tpu.memory_space<vmem>>, vector<2x7xf32>
      tpu.vector_store %arg16[%c0_69, %c0_70], %143 {strides = array<i32>} : memref<2x7xf32, #tpu.memory_space<vmem>>, vector<2x7xf32>,
    } else {
    }
    return
  }
  func.func @transform_0(%arg0: i32) -> (i32, i32, i32) {
    %c0_i32 = arith.constant 0 : i32
    %c0_i32_0 = arith.constant 0 : i32
    %c0_i32_1 = arith.constant 0 : i32
    %c0_i32_2 = arith.constant 0 : i32
    return %c0_i32, %c0_i32_0, %c0_i32_1 : i32, i32, i32
  }
  func.func @transform_1(%arg0: i32) -> (i32, i32, i32) {
    %c0_i32 = arith.constant 0 : i32
    %c0_i32_0 = arith.constant 0 : i32
    %c0_i32_1 = arith.constant 0 : i32
    return %arg0, %c0_i32, %c0_i32_0 : i32, i32, i32
  }
  func.func @transform_2(%arg0: i32) -> (i32, i32, i32) {
    %c0_i32 = arith.constant 0 : i32
    %c0_i32_0 = arith.constant 0 : i32
    %c0_i32_1 = arith.constant 0 : i32
    return %arg0, %c0_i32, %c0_i32_0 : i32, i32, i32
  }
  func.func @transform_3(%arg0: i32) -> (i32, i32, i32) {
    %c0_i32 = arith.constant 0 : i32
    %c0_i32_0 = arith.constant 0 : i32
    %c0_i32_1 = arith.constant 0 : i32
    return %arg0, %c0_i32, %c0_i32_0 : i32, i32, i32
  }
  func.func @transform_4(%arg0: i32) -> (i32, i32, i32) {
    %c0_i32 = arith.constant 0 : i32
    %c0_i32_0 = arith.constant 0 : i32
    %c0_i32_1 = arith.constant 0 : i32
    return %arg0, %c0_i32, %c0_i32_0 : i32, i32, i32
  }
  func.func @transform_5(%arg0: i32) -> (i32, i32, i32) {
    %c0_i32 = arith.constant 0 : i32
    %c0_i32_0 = arith.constant 0 : i32
    %c0_i32_1 = arith.constant 0 : i32
    return %arg0, %c0_i32, %c0_i32_0 : i32, i32, i32
  }
  func.func @transform_6(%arg0: i32) -> (i32, i32, i32) {
    %c0_i32 = arith.constant 0 : i32
    %c0_i32_0 = arith.constant 0 : i32
    %c0_i32_1 = arith.constant 0 : i32
    return %arg0, %c0_i32, %c0_i32_0 : i32, i32, i32
  }
  func.func @transform_7(%arg0: i32) -> (i32, i32, i32) {
    %c0_i32 = arith.constant 0 : i32
    %c0_i32_0 = arith.constant 0 : i32
    %c0_i32_1 = arith.constant 0 : i32
    return %arg0, %c0_i32, %c0_i32_0 : i32, i32, i32
  }
  func.func @transform_8(%arg0: i32) -> (i32, i32, i32) {
    %c0_i32 = arith.constant 0 : i32
    %c0_i32_0 = arith.constant 0 : i32
    %c0_i32_1 = arith.constant 0 : i32
    return %arg0, %c0_i32, %c0_i32_0 : i32, i32, i32
  }
  func.func @transform_9(%arg0: i32) -> (i32, i32, i32) {
    %c0_i32 = arith.constant 0 : i32
    %c0_i32_0 = arith.constant 0 : i32
    %c0_i32_1 = arith.constant 0 : i32
    return %arg0, %c0_i32, %c0_i32_0 : i32, i32, i32
  }
  func.func @transform_10(%arg0: i32) -> (i32, i32, i32) {
    %c0_i32 = arith.constant 0 : i32
    %c0_i32_0 = arith.constant 0 : i32
    %c0_i32_1 = arith.constant 0 : i32
    return %arg0, %c0_i32, %c0_i32_0 : i32, i32, i32
  }
  func.func @transform_11(%arg0: i32) -> (i32, i32) {
    %c0_i32 = arith.constant 0 : i32
    %c0_i32_0 = arith.constant 0 : i32
    %c0_i32_1 = arith.constant 0 : i32
    return %c0_i32, %c0_i32_0 : i32, i32
  }
  func.func @transform_12(%arg0: i32) -> (i32, i32) {
    %c0_i32 = arith.constant 0 : i32
    %c0_i32_0 = arith.constant 0 : i32
    %c0_i32_1 = arith.constant 0 : i32
    return %c0_i32, %c0_i32_0 : i32, i32
  }
  func.func @transform_13(%arg0: i32) -> (i32, i32) {
    %c0_i32 = arith.constant 0 : i32
    %c0_i32_0 = arith.constant 0 : i32
    %c0_i32_1 = arith.constant 0 : i32
    return %c0_i32, %c0_i32_0 : i32, i32
  }
  func.func @transform_14(%arg0: i32) -> (i32, i32) {
    %c0_i32 = arith.constant 0 : i32
    %c0_i32_0 = arith.constant 0 : i32
    %c0_i32_1 = arith.constant 0 : i32
    return %c0_i32, %c0_i32_0 : i32, i32
  }
  func.func @transform_15(%arg0: i32) -> (i32, i32) {
    %c0_i32 = arith.constant 0 : i32
    %c0_i32_0 = arith.constant 0 : i32
    %c0_i32_1 = arith.constant 0 : i32
    return %c0_i32, %c0_i32_0 : i32, i32
  }
}

</mosaic_0001>

<llo_original>
// kernel: transformer_trader.1
$region0: #{transformer_trader.1}
  #allocation0 [shape = 'u32[]', space=smem, size = 0x4, offset = 0x4, fixed_abs, tag = 'smem constant byte address 0x4 - core index']
  #allocation1 [shape = 'u32[144,128]{1,0:T(1,128)}', space=vmem, size = 0x12000, scoped, tag = 'internal scratch']
  #allocation2 [shape = 'f32[16,20]{1,0:T(8,128)}', space=vmem, size = 0x2000, scoped, tag = 'scratch operand']
  %s0 = inlined_call_operand.vmem [shape: f32[2,8,20], index: 0, kind: input, shape index: {}]
  %s1 = inlined_call_operand.vmem [shape: bf16[2,20,384], index: 1, kind: input, shape index: {}]
  %s2 = inlined_call_operand.vmem [shape: f32[2,1,384], index: 2, kind: input, shape index: {}]
  %s3 = inlined_call_operand.vmem [shape: bf16[2,20,20], index: 3, kind: input, shape index: {}]
  %s4 = inlined_call_operand.vmem [shape: f32[2,1,20], index: 4, kind: input, shape index: {}]
  %s5 = inlined_call_operand.vmem [shape: f32[2,2,20], index: 5, kind: input, shape index: {}]
  %s6 = inlined_call_operand.vmem [shape: f32[2,2,20], index: 6, kind: input, shape index: {}]
  %s7 = inlined_call_operand.vmem [shape: bf16[2,20,2048], index: 7, kind: input, shape index: {}]
  %s8 = inlined_call_operand.vmem [shape: f32[2,1,2048], index: 8, kind: input, shape index: {}]
  %s9 = inlined_call_operand.vmem [shape: bf16[2,2048,20], index: 9, kind: input, shape index: {}]
  %s10 = inlined_call_operand.vmem [shape: f32[2,1,20], index: 10, kind: input, shape index: {}]
  %s11 = inlined_call_operand.vmem [shape: bf16[20,5], index: 11, kind: input, shape index: {}]
  %s12 = inlined_call_operand.vmem [shape: bf16[5,20], index: 12, kind: input, shape index: {}]
  %s13 = inlined_call_operand.vmem [shape: bf16[20,7], index: 13, kind: input, shape index: {}]
  %s14 = inlined_call_operand.vmem [shape: f32[1,7], index: 14, kind: input, shape index: {}]
  %s15 = inlined_call_operand.hbm [shape: f32[2,7], index: 15, kind: output, shape index: {}]
  %s16 = sld [smem:[#allocation0]]
  $region105: #{transformer_trader.1} parent=0
    _
  %s18 = ssub.s32 1, %s16
  %s19 = scalar_select 0, %s18, %s16
  $region1: #{transformer_trader.1} parent=0
    #allocation3 [shape = 'u8[1024]{0}', space=vmem, size = 0x400, scoped, tag = 'output window, operand 0, single buffered']
    #allocation4 [shape = 's32[2]{0}', space=sflag, size = 0x8, scoped, tag = 'scoped memory for transformer_trader.1']
    %20 = vsyncpa [#allocation4], 0
    loop: start=0, step=1, limit=4
    $region2: #{transformer_trader.1} parent=1 // loop_pre_header
      _
    $region3: #{transformer_trader.1} parent=1 // loop_header
      %s22 = sphi 0, %s26
      %p23 = scmp.ge.s32.totalorder %s22, 4
      %s30 = sphi 0, %s30
      %s32 = sphi 0, %s30
      %s33 = sphi 0, %s32
      %s47 = sphi 0, %s33
      %s53 = sphi 0, %s55
      %s56 = sphi 0, %s53
      %s57 = sphi 0, %s56
      %s73 = sphi 0, %s57
      %s79 = sphi 0, %s81
      %s82 = sphi 0, %s79
      %s83 = sphi 0, %s82
      %s99 = sphi 0, %s83
      %s105 = sphi 0, %s107
      %s108 = sphi 0, %s105
      %s109 = sphi 0, %s108
      %s125 = sphi 0, %s109
      %s131 = sphi 0, %s133
      %s134 = sphi 0, %s131
      %s135 = sphi 0, %s134
      %s151 = sphi 0, %s135
      %s157 = sphi 0, %s159
      %s160 = sphi 0, %s157
      %s161 = sphi 0, %s160
      %s177 = sphi 0, %s161
      %s183 = sphi 0, %s185
      %s186 = sphi 0, %s183
      %s187 = sphi 0, %s186
      %s203 = sphi 0, %s187
      %s209 = sphi 0, %s211
      %s212 = sphi 0, %s209
      %s213 = sphi 0, %s212
      %s229 = sphi 0, %s213
      %s235 = sphi 0, %s237
      %s238 = sphi 0, %s235
      %s239 = sphi 0, %s238
      %s255 = sphi 0, %s239
      %s261 = sphi 0, %s263
      %s264 = sphi 0, %s261
      %s265 = sphi 0, %s264
      %s281 = sphi 0, %s265
      %s287 = sphi 0, %s289
      %s290 = sphi 0, %s287
      %s291 = sphi 0, %s290
      %s307 = sphi 0, %s291
      %s311 = sphi 0, %s311
      %s313 = sphi 0, %s311
      %s314 = sphi 0, %s313
      %s328 = sphi 0, %s314
      %s332 = sphi 0, %s332
      %s334 = sphi 0, %s332
      %s335 = sphi 0, %s334
      %s349 = sphi 0, %s335
      %s353 = sphi 0, %s353
      %s355 = sphi 0, %s353
      %s356 = sphi 0, %s355
      %s370 = sphi 0, %s356
      %s374 = sphi 0, %s374
      %s376 = sphi 0, %s374
      %s377 = sphi 0, %s376
      %s391 = sphi 0, %s377
      %s395 = sphi 0, %s395
      %s397 = sphi 0, %s395
      %s398 = sphi 0, %s397
      %s412 = sphi 0, %s398
    $region4: #{transformer_trader.1} parent=1 // loop_header_branch
      %25 = sbr.rel (%p23) target = $region8
    $region5: #{transformer_trader.1} parent=1 // loop_body
      %s27 = ssub.s32 %s22, 1
      %s28 = ssub.s32 %s22, 2
      %s29 = sadd.s32 %s22, 1
      %s31 = sadd.s32 %s30, 1
      %p34 = scmp.eq.s32.totalorder %s22, 1
      %p35 = scmp.ne.s32.totalorder %s30, %s32
      %p36 = scmp.eq.s32.totalorder %s22, 0
      %p37 = por %p35, %p36
      %p38 = scmp.ne.s32.totalorder %s30, %s32
      %p39 = scmp.eq.s32.totalorder %s27, 1
      %p40 = por %p38, %p39
      %p41 = scmp.ne.s32.totalorder %s32, %s33
      %p42 = scmp.eq.s32.totalorder %s27, 0
      %p43 = por %p41, %p42
      %p44 = scmp.ne.s32.totalorder %s32, %s33
      %p45 = scmp.eq.s32.totalorder %s28, 1
      %p46 = por %p44, %p45
      %p48 = scmp.ne.s32.totalorder %s33, %s47
      %p49 = scmp.eq.s32.totalorder %s28, 0
      %p50 = por %p48, %p49
      %s51 = ssub.s32 %s22, %s29
      %p52 = scmp.eq.s32.totalorder %s51, 0
      %s54 = sadd.s32 %s53, 1
      %s55 = scalar_select %p52, %s53, %s54
      %p58 = pneg %p52
      %p59 = scmp.eq.s32.totalorder %s22, 1
      %p60 = por %p58, %p59
      %p61 = scmp.ne.s32.totalorder %s53, %s56
      %p62 = scmp.eq.s32.totalorder %s22, 0
      %p63 = por %p61, %p62
      %p64 = scmp.ne.s32.totalorder %s53, %s56
      %p65 = scmp.eq.s32.totalorder %s27, 1
      %p66 = por %p64, %p65
      %p67 = scmp.ne.s32.totalorder %s56, %s57
      %p68 = scmp.eq.s32.totalorder %s27, 0
      %p69 = por %p67, %p68
      %p70 = scmp.ne.s32.totalorder %s56, %s57
      %p71 = scmp.eq.s32.totalorder %s28, 1
      %p72 = por %p70, %p71
      %p74 = scmp.ne.s32.totalorder %s57, %s73
      %p75 = scmp.eq.s32.totalorder %s28, 0
      %p76 = por %p74, %p75
      %s77 = ssub.s32 %s22, %s29
      %p78 = scmp.eq.s32.totalorder %s77, 0
      %s80 = sadd.s32 %s79, 1
      %s81 = scalar_select %p78, %s79, %s80
      %p84 = pneg %p78
      %p85 = scmp.eq.s32.totalorder %s22, 1
      %p86 = por %p84, %p85
      %p87 = scmp.ne.s32.totalorder %s79, %s82
      %p88 = scmp.eq.s32.totalorder %s22, 0
      %p89 = por %p87, %p88
      %p90 = scmp.ne.s32.totalorder %s79, %s82
      %p91 = scmp.eq.s32.totalorder %s27, 1
      %p92 = por %p90, %p91
      %p93 = scmp.ne.s32.totalorder %s82, %s83
      %p94 = scmp.eq.s32.totalorder %s27, 0
      %p95 = por %p93, %p94
      %p96 = scmp.ne.s32.totalorder %s82, %s83
      %p97 = scmp.eq.s32.totalorder %s28, 1
      %p98 = por %p96, %p97
      %p100 = scmp.ne.s32.totalorder %s83, %s99
      %p101 = scmp.eq.s32.totalorder %s28, 0
      %p102 = por %p100, %p101
      %s103 = ssub.s32 %s22, %s29
      %p104 = scmp.eq.s32.totalorder %s103, 0
      %s106 = sadd.s32 %s105, 1
      %s107 = scalar_select %p104, %s105, %s106
      %p110 = pneg %p104
      %p111 = scmp.eq.s32.totalorder %s22, 1
      %p112 = por %p110, %p111
      %p113 = scmp.ne.s32.totalorder %s105, %s108
      %p114 = scmp.eq.s32.totalorder %s22, 0
      %p115 = por %p113, %p114
      %p116 = scmp.ne.s32.totalorder %s105, %s108
      %p117 = scmp.eq.s32.totalorder %s27, 1
      %p118 = por %p116, %p117
      %p119 = scmp.ne.s32.totalorder %s108, %s109
      %p120 = scmp.eq.s32.totalorder %s27, 0
      %p121 = por %p119, %p120
      %p122 = scmp.ne.s32.totalorder %s108, %s109
      %p123 = scmp.eq.s32.totalorder %s28, 1
      %p124 = por %p122, %p123
      %p126 = scmp.ne.s32.totalorder %s109, %s125
      %p127 = scmp.eq.s32.totalorder %s28, 0
      %p128 = por %p126, %p127
      %s129 = ssub.s32 %s22, %s29
      %p130 = scmp.eq.s32.totalorder %s129, 0
      %s132 = sadd.s32 %s131, 1
      %s133 = scalar_select %p130, %s131, %s132
      %p136 = pneg %p130
      %p137 = scmp.eq.s32.totalorder %s22, 1
      %p138 = por %p136, %p137
      %p139 = scmp.ne.s32.totalorder %s131, %s134
      %p140 = scmp.eq.s32.totalorder %s22, 0
      %p141 = por %p139, %p140
      %p142 = scmp.ne.s32.totalorder %s131, %s134
      %p143 = scmp.eq.s32.totalorder %s27, 1
      %p144 = por %p142, %p143
      %p145 = scmp.ne.s32.totalorder %s134, %s135
      %p146 = scmp.eq.s32.totalorder %s27, 0
      %p147 = por %p145, %p146
      %p148 = scmp.ne.s32.totalorder %s134, %s135
      %p149 = scmp.eq.s32.totalorder %s28, 1
      %p150 = por %p148, %p149
      %p152 = scmp.ne.s32.totalorder %s135, %s151
      %p153 = scmp.eq.s32.totalorder %s28, 0
      %p154 = por %p152, %p153
      %s155 = ssub.s32 %s22, %s29
      %p156 = scmp.eq.s32.totalorder %s155, 0
      %s158 = sadd.s32 %s157, 1
      %s159 = scalar_select %p156, %s157, %s158
      %p162 = pneg %p156
      %p163 = scmp.eq.s32.totalorder %s22, 1
      %p164 = por %p162, %p163
      %p165 = scmp.ne.s32.totalorder %s157, %s160
      %p166 = scmp.eq.s32.totalorder %s22, 0
      %p167 = por %p165, %p166
      %p168 = scmp.ne.s32.totalorder %s157, %s160
      %p169 = scmp.eq.s32.totalorder %s27, 1
      %p170 = por %p168, %p169
      %p171 = scmp.ne.s32.totalorder %s160, %s161
      %p172 = scmp.eq.s32.totalorder %s27, 0
      %p173 = por %p171, %p172
      %p174 = scmp.ne.s32.totalorder %s160, %s161
      %p175 = scmp.eq.s32.totalorder %s28, 1
      %p176 = por %p174, %p175
      %p178 = scmp.ne.s32.totalorder %s161, %s177
      %p179 = scmp.eq.s32.totalorder %s28, 0
      %p180 = por %p178, %p179
      %s181 = ssub.s32 %s22, %s29
      %p182 = scmp.eq.s32.totalorder %s181, 0
      %s184 = sadd.s32 %s183, 1
      %s185 = scalar_select %p182, %s183, %s184
      %p188 = pneg %p182
      %p189 = scmp.eq.s32.totalorder %s22, 1
      %p190 = por %p188, %p189
      %p191 = scmp.ne.s32.totalorder %s183, %s186
      %p192 = scmp.eq.s32.totalorder %s22, 0
      %p193 = por %p191, %p192
      %p194 = scmp.ne.s32.totalorder %s183, %s186
      %p195 = scmp.eq.s32.totalorder %s27, 1
      %p196 = por %p194, %p195
      %p197 = scmp.ne.s32.totalorder %s186, %s187
      %p198 = scmp.eq.s32.totalorder %s27, 0
      %p199 = por %p197, %p198
      %p200 = scmp.ne.s32.totalorder %s186, %s187
      %p201 = scmp.eq.s32.totalorder %s28, 1
      %p202 = por %p200, %p201
      %p204 = scmp.ne.s32.totalorder %s187, %s203
      %p205 = scmp.eq.s32.totalorder %s28, 0
      %p206 = por %p204, %p205
      %s207 = ssub.s32 %s22, %s29
      %p208 = scmp.eq.s32.totalorder %s207, 0
      %s210 = sadd.s32 %s209, 1
      %s211 = scalar_select %p208, %s209, %s210
      %p214 = pneg %p208
      %p215 = scmp.eq.s32.totalorder %s22, 1
      %p216 = por %p214, %p215
      %p217 = scmp.ne.s32.totalorder %s209, %s212
      %p218 = scmp.eq.s32.totalorder %s22, 0
      %p219 = por %p217, %p218
      %p220 = scmp.ne.s32.totalorder %s209, %s212
      %p221 = scmp.eq.s32.totalorder %s27, 1
      %p222 = por %p220, %p221
      %p223 = scmp.ne.s32.totalorder %s212, %s213
      %p224 = scmp.eq.s32.totalorder %s27, 0
      %p225 = por %p223, %p224
      %p226 = scmp.ne.s32.totalorder %s212, %s213
      %p227 = scmp.eq.s32.totalorder %s28, 1
      %p228 = por %p226, %p227
      %p230 = scmp.ne.s32.totalorder %s213, %s229
      %p231 = scmp.eq.s32.totalorder %s28, 0
      %p232 = por %p230, %p231
      %s233 = ssub.s32 %s22, %s29
      %p234 = scmp.eq.s32.totalorder %s233, 0
      %s236 = sadd.s32 %s235, 1
      %s237 = scalar_select %p234, %s235, %s236
      %p240 = pneg %p234
      %p241 = scmp.eq.s32.totalorder %s22, 1
      %p242 = por %p240, %p241
      %p243 = scmp.ne.s32.totalorder %s235, %s238
      %p244 = scmp.eq.s32.totalorder %s22, 0
      %p245 = por %p243, %p244
      %p246 = scmp.ne.s32.totalorder %s235, %s238
      %p247 = scmp.eq.s32.totalorder %s27, 1
      %p248 = por %p246, %p247
      %p249 = scmp.ne.s32.totalorder %s238, %s239
      %p250 = scmp.eq.s32.totalorder %s27, 0
      %p251 = por %p249, %p250
      %p252 = scmp.ne.s32.totalorder %s238, %s239
      %p253 = scmp.eq.s32.totalorder %s28, 1
      %p254 = por %p252, %p253
      %p256 = scmp.ne.s32.totalorder %s239, %s255
      %p257 = scmp.eq.s32.totalorder %s28, 0
      %p258 = por %p256, %p257
      %s259 = ssub.s32 %s22, %s29
      %p260 = scmp.eq.s32.totalorder %s259, 0
      %s262 = sadd.s32 %s261, 1
      %s263 = scalar_select %p260, %s261, %s262
      %p266 = pneg %p260
      %p267 = scmp.eq.s32.totalorder %s22, 1
      %p268 = por %p266, %p267
      %p269 = scmp.ne.s32.totalorder %s261, %s264
      %p270 = scmp.eq.s32.totalorder %s22, 0
      %p271 = por %p269, %p270
      %p272 = scmp.ne.s32.totalorder %s261, %s264
      %p273 = scmp.eq.s32.totalorder %s27, 1
      %p274 = por %p272, %p273
      %p275 = scmp.ne.s32.totalorder %s264, %s265
      %p276 = scmp.eq.s32.totalorder %s27, 0
      %p277 = por %p275, %p276
      %p278 = scmp.ne.s32.totalorder %s264, %s265
      %p279 = scmp.eq.s32.totalorder %s28, 1
      %p280 = por %p278, %p279
      %p282 = scmp.ne.s32.totalorder %s265, %s281
      %p283 = scmp.eq.s32.totalorder %s28, 0
      %p284 = por %p282, %p283
      %s285 = ssub.s32 %s22, %s29
      %p286 = scmp.eq.s32.totalorder %s285, 0
      %s288 = sadd.s32 %s287, 1
      %s289 = scalar_select %p286, %s287, %s288
      %p292 = pneg %p286
      %p293 = scmp.eq.s32.totalorder %s22, 1
      %p294 = por %p292, %p293
      %p295 = scmp.ne.s32.totalorder %s287, %s290
      %p296 = scmp.eq.s32.totalorder %s22, 0
      %p297 = por %p295, %p296
      %p298 = scmp.ne.s32.totalorder %s287, %s290
      %p299 = scmp.eq.s32.totalorder %s27, 1
      %p300 = por %p298, %p299
      %p301 = scmp.ne.s32.totalorder %s290, %s291
      %p302 = scmp.eq.s32.totalorder %s27, 0
      %p303 = por %p301, %p302
      %p304 = scmp.ne.s32.totalorder %s290, %s291
      %p305 = scmp.eq.s32.totalorder %s28, 1
      %p306 = por %p304, %p305
      %p308 = scmp.ne.s32.totalorder %s291, %s307
      %p309 = scmp.eq.s32.totalorder %s28, 0
      %p310 = por %p308, %p309
      %s312 = sadd.s32 %s311, 1
      %p315 = scmp.eq.s32.totalorder %s22, 1
      %p316 = scmp.ne.s32.totalorder %s311, %s313
      %p317 = scmp.eq.s32.totalorder %s22, 0
      %p318 = por %p316, %p317
      %p319 = scmp.ne.s32.totalorder %s311, %s313
      %p320 = scmp.eq.s32.totalorder %s27, 1
      %p321 = por %p319, %p320
      %p322 = scmp.ne.s32.totalorder %s313, %s314
      %p323 = scmp.eq.s32.totalorder %s27, 0
      %p324 = por %p322, %p323
      %p325 = scmp.ne.s32.totalorder %s313, %s314
      %p326 = scmp.eq.s32.totalorder %s28, 1
      %p327 = por %p325, %p326
      %p329 = scmp.ne.s32.totalorder %s314, %s328
      %p330 = scmp.eq.s32.totalorder %s28, 0
      %p331 = por %p329, %p330
      %s333 = sadd.s32 %s332, 1
      %p336 = scmp.eq.s32.totalorder %s22, 1
      %p337 = scmp.ne.s32.totalorder %s332, %s334
      %p338 = scmp.eq.s32.totalorder %s22, 0
      %p339 = por %p337, %p338
      %p340 = scmp.ne.s32.totalorder %s332, %s334
      %p341 = scmp.eq.s32.totalorder %s27, 1
      %p342 = por %p340, %p341
      %p343 = scmp.ne.s32.totalorder %s334, %s335
      %p344 = scmp.eq.s32.totalorder %s27, 0
      %p345 = por %p343, %p344
      %p346 = scmp.ne.s32.totalorder %s334, %s335
      %p347 = scmp.eq.s32.totalorder %s28, 1
      %p348 = por %p346, %p347
      %p350 = scmp.ne.s32.totalorder %s335, %s349
      %p351 = scmp.eq.s32.totalorder %s28, 0
      %p352 = por %p350, %p351
      %s354 = sadd.s32 %s353, 1
      %p357 = scmp.eq.s32.totalorder %s22, 1
      %p358 = scmp.ne.s32.totalorder %s353, %s355
      %p359 = scmp.eq.s32.totalorder %s22, 0
      %p360 = por %p358, %p359
      %p361 = scmp.ne.s32.totalorder %s353, %s355
      %p362 = scmp.eq.s32.totalorder %s27, 1
      %p363 = por %p361, %p362
      %p364 = scmp.ne.s32.totalorder %s355, %s356
      %p365 = scmp.eq.s32.totalorder %s27, 0
      %p366 = por %p364, %p365
      %p367 = scmp.ne.s32.totalorder %s355, %s356
      %p368 = scmp.eq.s32.totalorder %s28, 1
      %p369 = por %p367, %p368
      %p371 = scmp.ne.s32.totalorder %s356, %s370
      %p372 = scmp.eq.s32.totalorder %s28, 0
      %p373 = por %p371, %p372
      %s375 = sadd.s32 %s374, 1
      %p378 = scmp.eq.s32.totalorder %s22, 1
      %p379 = scmp.ne.s32.totalorder %s374, %s376
      %p380 = scmp.eq.s32.totalorder %s22, 0
      %p381 = por %p379, %p380
      %p382 = scmp.ne.s32.totalorder %s374, %s376
      %p383 = scmp.eq.s32.totalorder %s27, 1
      %p384 = por %p382, %p383
      %p385 = scmp.ne.s32.totalorder %s376, %s377
      %p386 = scmp.eq.s32.totalorder %s27, 0
      %p387 = por %p385, %p386
      %p388 = scmp.ne.s32.totalorder %s376, %s377
      %p389 = scmp.eq.s32.totalorder %s28, 1
      %p390 = por %p388, %p389
      %p392 = scmp.ne.s32.totalorder %s377, %s391
      %p393 = scmp.eq.s32.totalorder %s28, 0
      %p394 = por %p392, %p393
      %s396 = sadd.s32 %s395, 1
      %p399 = scmp.eq.s32.totalorder %s22, 1
      %p400 = scmp.ne.s32.totalorder %s395, %s397
      %p401 = scmp.eq.s32.totalorder %s22, 0
      %p402 = por %p400, %p401
      %p403 = scmp.ne.s32.totalorder %s395, %s397
      %p404 = scmp.eq.s32.totalorder %s27, 1
      %p405 = por %p403, %p404
      %p406 = scmp.ne.s32.totalorder %s397, %s398
      %p407 = scmp.eq.s32.totalorder %s27, 0
      %p408 = por %p406, %p407
      %p409 = scmp.ne.s32.totalorder %s397, %s398
      %p410 = scmp.eq.s32.totalorder %s28, 1
      %p411 = por %p409, %p410
      %p413 = scmp.ne.s32.totalorder %s398, %s412
      %p414 = scmp.eq.s32.totalorder %s28, 0
      %p415 = por %p413, %p414
      %p416 = scmp.le.s32.totalorder 1, %s22
      %p417 = scmp.lt.s32.totalorder %s22, 3
      %p418 = pnand %p416, %p417
      %p419 = pneg %p418
      // Predicated region
      $region9: #{transformer_trader.1} parent=5 // pred_check
        _
      $region10: #{transformer_trader.1} parent=5 // pred_check_branch
        %421 = sbr.rel (%p418) target = $region12
      $region11: #{transformer_trader.1} parent=5 // pred_region
        %s422 = ssub.s32 %s22, 1
        // Predicated region
        $region13: #{transformer_trader.1} parent=11 // pred_check
          %p423 = pneg %p43
        $region14: #{transformer_trader.1} parent=11 // pred_check_branch
          %425 = sbr.rel (%p423) target = $region16
        $region15: #{transformer_trader.1} parent=11 // pred_region
          _
        $region16: #{transformer_trader.1} parent=11 // pred_fallthru
          _
        // Predicated region
        $region17: #{transformer_trader.1} parent=11 // pred_check
          %p426 = pneg %p324
        $region18: #{transformer_trader.1} parent=11 // pred_check_branch
          %428 = sbr.rel (%p426) target = $region20
        $region19: #{transformer_trader.1} parent=11 // pred_region
          _
        $region20: #{transformer_trader.1} parent=11 // pred_fallthru
          _
        // Predicated region
        $region21: #{transformer_trader.1} parent=11 // pred_check
          %p429 = pneg %p345
        $region22: #{transformer_trader.1} parent=11 // pred_check_branch
          %431 = sbr.rel (%p429) target = $region24
        $region23: #{transformer_trader.1} parent=11 // pred_region
          _
        $region24: #{transformer_trader.1} parent=11 // pred_fallthru
          _
        // Predicated region
        $region25: #{transformer_trader.1} parent=11 // pred_check
          %p432 = pneg %p366
        $region26: #{transformer_trader.1} parent=11 // pred_check_branch
          %434 = sbr.rel (%p432) target = $region28
        $region27: #{transformer_trader.1} parent=11 // pred_region
          _
        $region28: #{transformer_trader.1} parent=11 // pred_fallthru
          _
        // Predicated region
        $region29: #{transformer_trader.1} parent=11 // pred_check
          %p435 = pneg %p387
        $region30: #{transformer_trader.1} parent=11 // pred_check_branch
          %437 = sbr.rel (%p435) target = $region32
        $region31: #{transformer_trader.1} parent=11 // pred_region
          _
        $region32: #{transformer_trader.1} parent=11 // pred_fallthru
          _
      $region12: #{transformer_trader.1} parent=5 // pred_fallthru
        _
      %p438 = scmp.lt.s32.totalorder %s22, 2
      // Predicated region
      $region33: #{transformer_trader.1} parent=5 // pred_check
        %p439 = pneg %p438
      $region34: #{transformer_trader.1} parent=5 // pred_check_branch
        %441 = sbr.rel (%p439) target = $region36
      $region35: #{transformer_trader.1} parent=5 // pred_region
        // Predicated region
        $region37: #{transformer_trader.1} parent=35 // pred_check
          %p442 = pneg %p63
        $region38: #{transformer_trader.1} parent=35 // pred_check_branch
          %444 = sbr.rel (%p442) target = $region40
        $region39: #{transformer_trader.1} parent=35 // pred_region
          %p445 = scmp.lt.s32.totalorder %s22, 1
          %s446 = scalar_select %p445, %s22, 1
          %s447 = smul.addr %s446, 9
          %s448 = smul.addr %s447, 4
          %s449 = scalar_lea.vmem %s1, %s448
        $region40: #{transformer_trader.1} parent=35 // pred_fallthru
          _
        // Predicated region
        $region41: #{transformer_trader.1} parent=35 // pred_check
          %p450 = pneg %p89
        $region42: #{transformer_trader.1} parent=35 // pred_check_branch
          %452 = sbr.rel (%p450) target = $region44
        $region43: #{transformer_trader.1} parent=35 // pred_region
          %p453 = scmp.lt.s32.totalorder %s22, 1
          %s454 = scalar_select %p453, %s22, 1
          %s455 = smul.addr %s454, 3
          %s456 = scalar_lea.vmem %s2, %s455
        $region44: #{transformer_trader.1} parent=35 // pred_fallthru
          _
        // Predicated region
        $region45: #{transformer_trader.1} parent=35 // pred_check
          %p457 = pneg %p115
        $region46: #{transformer_trader.1} parent=35 // pred_check_branch
          %459 = sbr.rel (%p457) target = $region48
        $region47: #{transformer_trader.1} parent=35 // pred_region
          %p460 = scmp.lt.s32.totalorder %s22, 1
          %s461 = scalar_select %p460, %s22, 1
          %s462 = smul.addr %s461, 3
          %s463 = smul.addr %s462, 4
          %s464 = scalar_lea.vmem %s3, %s463
        $region48: #{transformer_trader.1} parent=35 // pred_fallthru
          _
        // Predicated region
        $region49: #{transformer_trader.1} parent=35 // pred_check
          %p465 = pneg %p141
        $region50: #{transformer_trader.1} parent=35 // pred_check_branch
          %467 = sbr.rel (%p465) target = $region52
        $region51: #{transformer_trader.1} parent=35 // pred_region
          %p468 = scmp.lt.s32.totalorder %s22, 1
          %s469 = scalar_select %p468, %s22, 1
          %s470 = scalar_lea.vmem %s4, %s469
        $region52: #{transformer_trader.1} parent=35 // pred_fallthru
          _
        // Predicated region
        $region53: #{transformer_trader.1} parent=35 // pred_check
          %p471 = pneg %p167
        $region54: #{transformer_trader.1} parent=35 // pred_check_branch
          %473 = sbr.rel (%p471) target = $region56
        $region55: #{transformer_trader.1} parent=35 // pred_region
          %p474 = scmp.lt.s32.totalorder %s22, 1
          %s475 = scalar_select %p474, %s22, 1
          %s476 = smul.addr %s475, 2
          %s477 = scalar_lea.vmem %s5, %s476
        $region56: #{transformer_trader.1} parent=35 // pred_fallthru
          _
        // Predicated region
        $region57: #{transformer_trader.1} parent=35 // pred_check
          %p478 = pneg %p193
        $region58: #{transformer_trader.1} parent=35 // pred_check_branch
          %480 = sbr.rel (%p478) target = $region60
        $region59: #{transformer_trader.1} parent=35 // pred_region
          %p481 = scmp.lt.s32.totalorder %s22, 1
          %s482 = scalar_select %p481, %s22, 1
          %s483 = smul.addr %s482, 2
          %s484 = scalar_lea.vmem %s6, %s483
        $region60: #{transformer_trader.1} parent=35 // pred_fallthru
          _
        // Predicated region
        $region61: #{transformer_trader.1} parent=35 // pred_check
          %p485 = pneg %p219
        $region62: #{transformer_trader.1} parent=35 // pred_check_branch
          %487 = sbr.rel (%p485) target = $region64
        $region63: #{transformer_trader.1} parent=35 // pred_region
          %p488 = scmp.lt.s32.totalorder %s22, 1
          %s489 = scalar_select %p488, %s22, 1
          %s490 = smul.addr %s489, 48
          %s491 = smul.addr %s490, 4
          %s492 = scalar_lea.vmem %s7, %s491
        $region64: #{transformer_trader.1} parent=35 // pred_fallthru
          _
        // Predicated region
        $region65: #{transformer_trader.1} parent=35 // pred_check
          %p493 = pneg %p245
        $region66: #{transformer_trader.1} parent=35 // pred_check_branch
          %495 = sbr.rel (%p493) target = $region68
        $region67: #{transformer_trader.1} parent=35 // pred_region
          %p496 = scmp.lt.s32.totalorder %s22, 1
          %s497 = scalar_select %p496, %s22, 1
          %s498 = smul.addr %s497, 16
          %s499 = scalar_lea.vmem %s8, %s498
        $region68: #{transformer_trader.1} parent=35 // pred_fallthru
          _
        // Predicated region
        $region69: #{transformer_trader.1} parent=35 // pred_check
          %p500 = pneg %p271
        $region70: #{transformer_trader.1} parent=35 // pred_check_branch
          %502 = sbr.rel (%p500) target = $region72
        $region71: #{transformer_trader.1} parent=35 // pred_region
          %p503 = scmp.lt.s32.totalorder %s22, 1
          %s504 = scalar_select %p503, %s22, 1
          %s505 = smul.addr %s504, 256
          %s506 = smul.addr %s505, 4
          %s507 = scalar_lea.vmem %s9, %s506
        $region72: #{transformer_trader.1} parent=35 // pred_fallthru
          _
        // Predicated region
        $region73: #{transformer_trader.1} parent=35 // pred_check
          %p508 = pneg %p297
        $region74: #{transformer_trader.1} parent=35 // pred_check_branch
          %510 = sbr.rel (%p508) target = $region76
        $region75: #{transformer_trader.1} parent=35 // pred_region
          %p511 = scmp.lt.s32.totalorder %s22, 1
          %s512 = scalar_select %p511, %s22, 1
          %s513 = scalar_lea.vmem %s10, %s512
        $region76: #{transformer_trader.1} parent=35 // pred_fallthru
          _
      $region36: #{transformer_trader.1} parent=5 // pred_fallthru
        _
      %p514 = scmp.le.s32.totalorder 1, %s22
      %p515 = scmp.lt.s32.totalorder %s22, 3
      %p516 = pnand %p514, %p515
      %p517 = pneg %p516
      // Predicated region
      $region77: #{transformer_trader.1} parent=5 // pred_check
        _
      $region78: #{transformer_trader.1} parent=5 // pred_check_branch
        %519 = sbr.rel (%p516) target = $region80
      $region79: #{transformer_trader.1} parent=5 // pred_region
        %s520 = ssub.s32 %s22, 1
        %p521 = pneg %p43
        %p522 = pneg %p40
        %p523 = scmp.lt.s32.totalorder %s27, 1
        %s524 = scalar_select %p523, %s27, 1
        %s525 = smul.addr %s524, 9
        %s526 = smul.addr %s525, 4
        %s527 = scalar_lea.vmem %s1, %s526
        %p528 = pneg %p69
        %p529 = pneg %p66
        %p530 = scmp.lt.s32.totalorder %s27, 1
        %s531 = scalar_select %p530, %s27, 1
        %s532 = smul.addr %s531, 3
        %s533 = scalar_lea.vmem %s2, %s532
        %p534 = pneg %p95
        %p535 = pneg %p92
        %p536 = scmp.lt.s32.totalorder %s27, 1
        %s537 = scalar_select %p536, %s27, 1
        %s538 = smul.addr %s537, 3
        %s539 = smul.addr %s538, 4
        %s540 = scalar_lea.vmem %s3, %s539
        %p541 = pneg %p121
        %p542 = pneg %p118
        %p543 = scmp.lt.s32.totalorder %s27, 1
        %s544 = scalar_select %p543, %s27, 1
        %s545 = scalar_lea.vmem %s4, %s544
        %p546 = pneg %p147
        %p547 = pneg %p144
        %p548 = scmp.lt.s32.totalorder %s27, 1
        %s549 = scalar_select %p548, %s27, 1
        %s550 = smul.addr %s549, 2
        %s551 = scalar_lea.vmem %s5, %s550
        %p552 = pneg %p173
        %p553 = pneg %p170
        %p554 = scmp.lt.s32.totalorder %s27, 1
        %s555 = scalar_select %p554, %s27, 1
        %s556 = smul.addr %s555, 2
        %s557 = scalar_lea.vmem %s6, %s556
        %p558 = pneg %p199
        %p559 = pneg %p196
        %p560 = scmp.lt.s32.totalorder %s27, 1
        %s561 = scalar_select %p560, %s27, 1
        %s562 = smul.addr %s561, 48
        %s563 = smul.addr %s562, 4
        %s564 = scalar_lea.vmem %s7, %s563
        %p565 = pneg %p225
        %p566 = pneg %p222
        %p567 = scmp.lt.s32.totalorder %s27, 1
        %s568 = scalar_select %p567, %s27, 1
        %s569 = smul.addr %s568, 16
        %s570 = scalar_lea.vmem %s8, %s569
        %p571 = pneg %p251
        %p572 = pneg %p248
        %p573 = scmp.lt.s32.totalorder %s27, 1
        %s574 = scalar_select %p573, %s27, 1
        %s575 = smul.addr %s574, 256
        %s576 = smul.addr %s575, 4
        %s577 = scalar_lea.vmem %s9, %s576
        %p578 = pneg %p277
        %p579 = pneg %p274
        %p580 = scmp.lt.s32.totalorder %s27, 1
        %s581 = scalar_select %p580, %s27, 1
        %s582 = scalar_lea.vmem %s10, %s581
        %p583 = pneg %p303
        %p584 = pneg %p300
        %p585 = pneg %p324
        %p586 = pneg %p321
        %p587 = pneg %p345
        %p588 = pneg %p342
        %p589 = pneg %p366
        %p590 = pneg %p363
        %p591 = pneg %p387
        %p592 = pneg %p384
        %p593 = pneg %p408
        %p594 = pneg %p405
        %p595 = scmp.lt.s32.totalorder %s27, 1
        %s596 = scalar_select %p595, %s27, 1
        %s597 = smul.addr %s596, 9
        %s598 = smul.addr %s597, 4
        %s599 = scalar_lea.vmem %s1, %s598
        %p600 = scmp.lt.s32.totalorder %s27, 1
        %s601 = scalar_select %p600, %s27, 1
        %s602 = smul.addr %s601, 3
        %s603 = scalar_lea.vmem %s2, %s602
        %p604 = scmp.lt.s32.totalorder %s27, 1
        %s605 = scalar_select %p604, %s27, 1
        %s606 = smul.addr %s605, 3
        %s607 = smul.addr %s606, 4
        %s608 = scalar_lea.vmem %s3, %s607
        %p609 = scmp.lt.s32.totalorder %s27, 1
        %s610 = scalar_select %p609, %s27, 1
        %s611 = scalar_lea.vmem %s4, %s610
        %p612 = scmp.lt.s32.totalorder %s27, 1
        %s613 = scalar_select %p612, %s27, 1
        %s614 = smul.addr %s613, 2
        %s615 = scalar_lea.vmem %s5, %s614
        %p616 = scmp.lt.s32.totalorder %s27, 1
        %s617 = scalar_select %p616, %s27, 1
        %s618 = smul.addr %s617, 2
        %s619 = scalar_lea.vmem %s6, %s618
        %p620 = scmp.lt.s32.totalorder %s27, 1
        %s621 = scalar_select %p620, %s27, 1
        %s622 = smul.addr %s621, 48
        %s623 = smul.addr %s622, 4
        %s624 = scalar_lea.vmem %s7, %s623
        %p625 = scmp.lt.s32.totalorder %s27, 1
        %s626 = scalar_select %p625, %s27, 1
        %s627 = smul.addr %s626, 16
        %s628 = scalar_lea.vmem %s8, %s627
        %p629 = scmp.lt.s32.totalorder %s27, 1
        %s630 = scalar_select %p629, %s27, 1
        %s631 = smul.addr %s630, 256
        %s632 = smul.addr %s631, 4
        %s633 = scalar_lea.vmem %s9, %s632
        %p634 = scmp.lt.s32.totalorder %s27, 1
        %s635 = scalar_select %p634, %s27, 1
        %s636 = scalar_lea.vmem %s10, %s635
        %p638 = scmp.eq.s32.totalorder %s27, 0
        // Predicated region
        $region81: #{transformer_trader.1} parent=79 // pred_check
          %p639 = pneg %p638
        $region82: #{transformer_trader.1} parent=79 // pred_check_branch
          %641 = sbr.rel (%p639) target = $region84
        $region83: #{transformer_trader.1} parent=79 // pred_region
          %v642 = vld [vmem:[%s0] sm:$0xff]
          %v643 = vld [vmem:[%s0 + $0x8] sm:$0xff]
          %vm644 = vcmask 162816
          %645 = vst.msk [vmem:[#allocation2] sm:$0xff] %vm644, %v642
          %646 = vst.msk [vmem:[#allocation2 + $0x8] sm:$0xff] %vm644, %v643
        $region84: #{transformer_trader.1} parent=79 // pred_fallthru
          _
        %v647 = vld [vmem:[%s11] sm:$0xf]
        %v648 = vld [vmem:[%s11 + $0x4] sm:$0xf]
        %v649 = vld [vmem:[%s11 + $0x8] sm:$0x3]
        %v650 = vld [vmem:[%s12] sm:$0x7]
        %v651 = vld [vmem:[#allocation2] sm:$0xff]
        %v652 = vld [vmem:[#allocation2 + $0x8] sm:$0xff]
        %v653 = vpack.c.bf16 %v652, %v651
        %v654 = vld [vmem:[%s599] sm:$0xff]
        %v655 = vld [vmem:[%s599 + $0x8] sm:$0xf]
        %v656 = vld [vmem:[%s599 + $0xc] sm:$0xff]
        %v657 = vld [vmem:[%s599 + $0x14] sm:$0xf]
        %v658 = vld [vmem:[%s599 + $0x18] sm:$0x33]
        %v659 = vld [vmem:[%s599 + $0x20] sm:$0x3]
        %v660 = vld [vmem:[%s603] sm:$0x7]
        %v662 = vlaneseq
        %v663 = vshrl.u32 %v662, 7
        %v664 = vsub.s32 0, %v663
        %v665 = vrot.slane %v660, %v664
        %v666 = vlaneseq
        %v667 = vshrl.u32 %v666, 7
        %v668 = vsub.s32 1, %v667
        %v669 = vrot.slane %v660, %v668
        %v670 = vlaneseq
        %v671 = vshrl.u32 %v670, 7
        %v672 = vsub.s32 2, %v671
        %v673 = vrot.slane %v660, %v672
        %v683 = vunpack.c.l.b16 %v654
        %v684 = vunpack.c.h.b16 %v654
        %v685 = vunpack.c.l.b16 %v655
        %v686 = vunpack.c.l.b16 %v656
        %v687 = vunpack.c.h.b16 %v656
        %v688 = vunpack.c.l.b16 %v657
        %v689 = vunpack.c.l.b16 %v658
        %v690 = vunpack.c.h.b16 %v658
        %v691 = vunpack.c.l.b16 %v659
        %v692 = vpack.c.b16 %v686, %v683
        %v693 = vpack.c.b16 %v687, %v684
        %v694 = vpack.c.b16 %v688, %v685
        %v695 = vpack.c.b16 %v689, %v689
        %v696 = vpack.c.b16 %v690, %v690
        %v697 = vpack.c.b16 %v691, %v691
        %vm701 = vcmask 162816
        %v703 = vsel %vm701, %v653, 0
        %vm705 = vcmask 1041408
        %v707 = vsel %vm705, %v695, 0
        %v710 = vsel %vm705, %v696, 0
        %v713 = vsel %vm705, %v697, 0
        %715 = vmatprep.subr.bf16.mxu0 %v693
        %716 = vmatpush1.bf16.msra.mxu0 %v692
        %717 = vmatprep.subr.bf16.mxu0 %v710
        %718 = vmatpush1.bf16.msra.mxu0 %v707
        %719 = vmatprep.subr.bf16.mxu0 0
        %720 = vmatpush1.bf16.msra.mxu0 0
        %721 = vmatprep.subr.bf16.mxu0 0
        %722 = vmatpush1.bf16.msra.mxu0 0
        %723 = vmatprep.subr.bf16.mxu0 0
        %724 = vmatpush1.bf16.msra.mxu0 0
        %725 = vmatprep.subr.bf16.mxu0 0
        %726 = vmatpush1.bf16.msra.mxu0 0
        %727 = vmatprep.subr.bf16.mxu0 0
        %728 = vmatpush1.bf16.msra.mxu0 0
        %729 = vmatprep.subr.bf16.mxu0 0
        %730 = vmatpush1.bf16.msra.mxu0 0
        %731 = vmatprep.subr.bf16.mxu0 0
        %732 = vmatpush1.bf16.msra.mxu0 0
        %733 = vmatprep.subr.bf16.mxu0 0
        %734 = vmatpush1.bf16.msra.mxu0 0
        %735 = vmatprep.subr.bf16.mxu0 0
        %736 = vmatpush1.bf16.msra.mxu0 0
        %737 = vmatprep.subr.bf16.mxu0 0
        %738 = vmatpush1.bf16.msra.mxu0 0
        %739 = vmatprep.subr.bf16.mxu0 0
        %740 = vmatpush1.bf16.msra.mxu0 0
        %741 = vmatprep.subr.bf16.mxu0 0
        %742 = vmatpush1.bf16.msra.mxu0 0
        %743 = vmatprep.subr.bf16.mxu0 0
        %744 = vmatpush1.bf16.msra.mxu0 0
        %745 = vmatprep.subr.bf16.mxu0 0
        %746 = vmatpush1.bf16.msra.mxu0 0
        %747 = vmatprep.mubr.bf16.mxu0 0
        %748 = vmatmul.mubr.bf16.gmra.mrb[0].mxu0 %v703
        %v749 = vpop.f32.mrb[0].mxu0
        %v750 = vadd.f32 %v665, %v749
        %v751 = vpop.f32.mrb[0].mxu0
        %v752 = vadd.f32 %v669, %v751
        %v753 = vpop.f32.mrb[0].mxu0
        %v754 = vadd.f32 %v665, %v753
        %v755 = vpop.f32.mrb[0].mxu0
        %v756 = vadd.f32 %v669, %v755
        %757 = vdwg.mxu0
        %758 = vmatprep.subr.bf16.mxu0 0
        %759 = vmatpush1.bf16.msra.mxu0 %v694
        %760 = vmatprep.subr.bf16.mxu0 0
        %761 = vmatpush1.bf16.msra.mxu0 %v713
        %762 = vmatprep.subr.bf16.mxu0 0
        %763 = vmatpush1.bf16.msra.mxu0 0
        %764 = vmatprep.subr.bf16.mxu0 0
        %765 = vmatpush1.bf16.msra.mxu0 0
        %766 = vmatprep.subr.bf16.mxu0 0
        %767 = vmatpush1.bf16.msra.mxu0 0
        %768 = vmatprep.subr.bf16.mxu0 0
        %769 = vmatpush1.bf16.msra.mxu0 0
        %770 = vmatprep.subr.bf16.mxu0 0
        %771 = vmatpush1.bf16.msra.mxu0 0
        %772 = vmatprep.subr.bf16.mxu0 0
        %773 = vmatpush1.bf16.msra.mxu0 0
        %774 = vmatprep.subr.bf16.mxu0 0
        %775 = vmatpush1.bf16.msra.mxu0 0
        %776 = vmatprep.subr.bf16.mxu0 0
        %777 = vmatpush1.bf16.msra.mxu0 0
        %778 = vmatprep.subr.bf16.mxu0 0
        %779 = vmatpush1.bf16.msra.mxu0 0
        %780 = vmatprep.subr.bf16.mxu0 0
        %781 = vmatpush1.bf16.msra.mxu0 0
        %782 = vmatprep.subr.bf16.mxu0 0
        %783 = vmatpush1.bf16.msra.mxu0 0
        %784 = vmatprep.subr.bf16.mxu0 0
        %785 = vmatpush1.bf16.msra.mxu0 0
        %786 = vmatprep.subr.bf16.mxu0 0
        %787 = vmatpush1.bf16.msra.mxu0 0
        %788 = vmatprep.subr.bf16.mxu0 0
        %789 = vmatpush1.bf16.msra.mxu0 0
        %790 = vmatprep.mubr.bf16.mxu0 0
        %791 = vmatmul.mubr.bf16.gmra.mrb[0].mxu0 %v703
        %v792 = vpop.f32.mrb[0].mxu0
        %v793 = vadd.f32 %v673, %v792
        %v794 = vpop.f32.mrb[0].mxu0
        %v795 = vpop.f32.mrb[0].mxu0
        %v796 = vadd.f32 %v673, %v795
        %v797 = vpop.f32.mrb[0].mxu0
        %798 = vdwg.mxu0
        %p799 = scmp.lt.s32.totalorder %s27, 1
        // Predicated region
        $region85: #{transformer_trader.1} parent=79 // pred_check
          %p800 = pneg %p799
        $region86: #{transformer_trader.1} parent=79 // pred_check_branch
          %802 = sbr.rel (%p800) target = $region88
        $region87: #{transformer_trader.1} parent=79 // pred_region
          %v805 = vcombine.high %v750, %v750
          %v807 = vunpack.c.l.s4 1966171168
          %v808 = vunpack.c.0.s8 %v807
          %v809 = vlaneseq
          %v810 = vshrl.u32 %v809, 7
          %v811 = vsub.s32 %v808, %v810
          %v812 = vrot.slane %v750, %v811
          %v814 = vunpack.c.l.s4 1966171168
          %v815 = vunpack.c.0.s8 %v814
          %v816 = vlaneseq
          %v817 = vshrl.u32 %v816, 7
          %v818 = vsub.s32 %v815, %v817
          %v819 = vrot.slane %v805, %v818
          %v820 = vcombine.high %v812, %v812
          %v821 = vcombine.high %v819, %v819
          %v823 = vunpack.c.l.s4 1966171168
          %v824 = vunpack.c.0.s8 %v823
          %v825 = vlaneseq
          %v826 = vshrl.u32 %v825, 7
          %v827 = vsub.s32 %v824, %v826
          %v828 = vrot.slane %v812, %v827
          %v830 = vunpack.c.l.s4 1966171168
          %v831 = vunpack.c.0.s8 %v830
          %v832 = vlaneseq
          %v833 = vshrl.u32 %v832, 7
          %v834 = vsub.s32 %v831, %v833
          %v835 = vrot.slane %v819, %v834
          %v837 = vunpack.c.l.s4 1966171168
          %v838 = vunpack.c.0.s8 %v837
          %v839 = vlaneseq
          %v840 = vshrl.u32 %v839, 7
          %v841 = vsub.s32 %v838, %v840
          %v842 = vrot.slane %v820, %v841
          %v844 = vunpack.c.l.s4 1966171168
          %v845 = vunpack.c.0.s8 %v844
          %v846 = vlaneseq
          %v847 = vshrl.u32 %v846, 7
          %v848 = vsub.s32 %v845, %v847
          %v849 = vrot.slane %v821, %v848
          %v850 = vcombine.high %v828, %v828
          %v851 = vcombine.high %v835, %v835
          %v852 = vcombine.high %v842, %v842
          %v853 = vcombine.high %v849, %v849
          %v854 = vcombine.high %v754, %v754
          %v856 = vunpack.c.l.s4 1966171168
          %v857 = vunpack.c.0.s8 %v856
          %v858 = vlaneseq
          %v859 = vshrl.u32 %v858, 7
          %v860 = vsub.s32 %v857, %v859
          %v861 = vrot.slane %v754, %v860
          %v863 = vunpack.c.l.s4 1966171168
          %v864 = vunpack.c.0.s8 %v863
          %v865 = vlaneseq
          %v866 = vshrl.u32 %v865, 7
          %v867 = vsub.s32 %v864, %v866
          %v868 = vrot.slane %v854, %v867
          %v869 = vcombine.high %v861, %v861
          %v870 = vcombine.high %v868, %v868
          %v872 = vunpack.c.l.s4 1966171168
          %v873 = vunpack.c.0.s8 %v872
          %v874 = vlaneseq
          %v875 = vshrl.u32 %v874, 7
          %v876 = vsub.s32 %v873, %v875
          %v877 = vrot.slane %v861, %v876
          %v879 = vunpack.c.l.s4 1966171168
          %v880 = vunpack.c.0.s8 %v879
          %v881 = vlaneseq
          %v882 = vshrl.u32 %v881, 7
          %v883 = vsub.s32 %v880, %v882
          %v884 = vrot.slane %v868, %v883
          %v886 = vunpack.c.l.s4 1966171168
          %v887 = vunpack.c.0.s8 %v886
          %v888 = vlaneseq
          %v889 = vshrl.u32 %v888, 7
          %v890 = vsub.s32 %v887, %v889
          %v891 = vrot.slane %v869, %v890
          %v893 = vunpack.c.l.s4 1966171168
          %v894 = vunpack.c.0.s8 %v893
          %v895 = vlaneseq
          %v896 = vshrl.u32 %v895, 7
          %v897 = vsub.s32 %v894, %v896
          %v898 = vrot.slane %v870, %v897
          %v899 = vcombine.high %v877, %v877
          %v900 = vcombine.high %v884, %v884
          %v901 = vcombine.high %v891, %v891
          %v902 = vcombine.high %v898, %v898
          %v903 = vlaneseq
          %v904 = vshrl.u32 %v903, 7
          %v905 = vsub.s32 0, %v904
          %v906 = vrot.slane %v828, %v905
          %v907 = vlaneseq
          %v908 = vshrl.u32 %v907, 7
          %v909 = vsub.s32 0, %v908
          %v910 = vrot.slane %v842, %v909
          %v911 = vlaneseq
          %v912 = vshrl.u32 %v911, 7
          %v913 = vsub.s32 0, %v912
          %v914 = vrot.slane %v850, %v913
          %v915 = vlaneseq
          %v916 = vshrl.u32 %v915, 7
          %v917 = vsub.s32 0, %v916
          %v918 = vrot.slane %v852, %v917
          %v919 = vlaneseq
          %v920 = vshrl.u32 %v919, 7
          %v921 = vsub.s32 0, %v920
          %v922 = vrot.slane %v835, %v921
          %v923 = vlaneseq
          %v924 = vshrl.u32 %v923, 7
          %v925 = vsub.s32 0, %v924
          %v926 = vrot.slane %v849, %v925
          %v927 = vlaneseq
          %v928 = vshrl.u32 %v927, 7
          %v929 = vsub.s32 0, %v928
          %v930 = vrot.slane %v851, %v929
          %v931 = vlaneseq
          %v932 = vshrl.u32 %v931, 7
          %v933 = vsub.s32 0, %v932
          %v934 = vrot.slane %v853, %v933
          %v935 = vlaneseq
          %v936 = vshrl.u32 %v935, 7
          %v937 = vsub.s32 0, %v936
          %v938 = vrot.slane %v877, %v937
          %v939 = vlaneseq
          %v940 = vshrl.u32 %v939, 7
          %v941 = vsub.s32 0, %v940
          %v942 = vrot.slane %v891, %v941
          %v943 = vlaneseq
          %v944 = vshrl.u32 %v943, 7
          %v945 = vsub.s32 0, %v944
          %v946 = vrot.slane %v899, %v945
          %v947 = vlaneseq
          %v948 = vshrl.u32 %v947, 7
          %v949 = vsub.s32 0, %v948
          %v950 = vrot.slane %v901, %v949
          %v951 = vlaneseq
          %v952 = vshrl.u32 %v951, 7
          %v953 = vsub.s32 0, %v952
          %v954 = vrot.slane %v884, %v953
          %v955 = vlaneseq
          %v956 = vshrl.u32 %v955, 7
          %v957 = vsub.s32 0, %v956
          %v958 = vrot.slane %v898, %v957
          %v959 = vlaneseq
          %v960 = vshrl.u32 %v959, 7
          %v961 = vsub.s32 0, %v960
          %v962 = vrot.slane %v900, %v961
          %v963 = vlaneseq
          %v964 = vshrl.u32 %v963, 7
          %v965 = vsub.s32 0, %v964
          %v966 = vrot.slane %v902, %v965
          %v983 = vmul.f32 %v906, %v752
          %v984 = vmul.f32 %v910, %v752
          %v985 = vmul.f32 %v914, %v752
          %v986 = vmul.f32 %v918, %v752
          %v987 = vmul.f32 %v922, %v752
          %v988 = vmul.f32 %v926, %v752
          %v989 = vmul.f32 %v930, %v752
          %v990 = vmul.f32 %v934, %v752
          %v991 = vmul.f32 %v938, %v756
          %v992 = vmul.f32 %v942, %v756
          %v993 = vmul.f32 %v946, %v756
          %v994 = vmul.f32 %v950, %v756
          %v995 = vmul.f32 %v954, %v756
          %v996 = vmul.f32 %v958, %v756
          %v997 = vmul.f32 %v962, %v756
          %v998 = vmul.f32 %v966, %v756
          %v999 = vpack.c.bf16 %v984, %v983
          %v1000 = vpack.c.bf16 %v986, %v985
          %v1001 = vpack.c.bf16 %v988, %v987
          %v1002 = vpack.c.bf16 %v990, %v989
          %v1003 = vpack.c.bf16 %v992, %v991
          %v1004 = vpack.c.bf16 %v994, %v993
          %v1005 = vpack.c.bf16 %v996, %v995
          %v1006 = vpack.c.bf16 %v998, %v997
          %v1010 = vunpack.c.l.b16 %v647
          %v1011 = vunpack.c.l.b16 %v648
          %v1012 = vunpack.c.l.b16 %v649
          %v1013 = vpack.c.b16 %v1011, %v1010
          %v1014 = vpack.c.b16 %v1012, %v1012
          %v1017 = vsel %vm701, %v999, 0
          %v1020 = vsel %vm701, %v1000, 0
          %v1023 = vsel %vm701, %v1001, 0
          %v1026 = vsel %vm701, %v1002, 0
          %v1029 = vsel %vm701, %v1003, 0
          %v1032 = vsel %vm701, %v1004, 0
          %v1035 = vsel %vm701, %v1005, 0
          %v1038 = vsel %vm701, %v1006, 0
          %v1041 = vsel %vm705, %v1014, 0
          %1043 = vmatprep.subr.bf16.mxu0 0
          %1044 = vmatpush1.bf16.msra.mxu0 %v1013
          %1045 = vmatprep.subr.bf16.mxu0 0
          %1046 = vmatpush1.bf16.msra.mxu0 %v1041
          %1047 = vmatprep.subr.bf16.mxu0 0
          %1048 = vmatpush1.bf16.msra.mxu0 0
          %1049 = vmatprep.subr.bf16.mxu0 0
          %1050 = vmatpush1.bf16.msra.mxu0 0
          %1051 = vmatprep.subr.bf16.mxu0 0
          %1052 = vmatpush1.bf16.msra.mxu0 0
          %1053 = vmatprep.subr.bf16.mxu0 0
          %1054 = vmatpush1.bf16.msra.mxu0 0
          %1055 = vmatprep.subr.bf16.mxu0 0
          %1056 = vmatpush1.bf16.msra.mxu0 0
          %1057 = vmatprep.subr.bf16.mxu0 0
          %1058 = vmatpush1.bf16.msra.mxu0 0
          %1059 = vmatprep.subr.bf16.mxu0 0
          %1060 = vmatpush1.bf16.msra.mxu0 0
          %1061 = vmatprep.subr.bf16.mxu0 0
          %1062 = vmatpush1.bf16.msra.mxu0 0
          %1063 = vmatprep.subr.bf16.mxu0 0
          %1064 = vmatpush1.bf16.msra.mxu0 0
          %1065 = vmatprep.subr.bf16.mxu0 0
          %1066 = vmatpush1.bf16.msra.mxu0 0
          %1067 = vmatprep.subr.bf16.mxu0 0
          %1068 = vmatpush1.bf16.msra.mxu0 0
          %1069 = vmatprep.subr.bf16.mxu0 0
          %1070 = vmatpush1.bf16.msra.mxu0 0
          %1071 = vmatprep.subr.bf16.mxu0 0
          %1072 = vmatpush1.bf16.msra.mxu0 0
          %1073 = vmatprep.subr.bf16.mxu0 0
          %1074 = vmatpush1.bf16.msra.mxu0 0
          %1075 = vmatprep.mubr.bf16.mxu0 0
          %1076 = vmatmul.mubr.bf16.gmra.mrb[0].mxu0 %v1017
          %v1077 = vpop.f32.mrb[0].mxu0
          %v1078 = vadd.f32 0.0, %v1077
          %v1079 = vpop.f32.mrb[0].mxu0
          %v1080 = vpop.f32.mrb[0].mxu0
          %v1081 = vadd.f32 0.0, %v1080
          %v1082 = vpop.f32.mrb[0].mxu0
          %1083 = vmatprep.mubr.bf16.mxu0 0
          %1084 = vmatmul.mubr.bf16.gmra.mrb[0].mxu0 %v1020
          %v1085 = vpop.f32.mrb[0].mxu0
          %v1086 = vadd.f32 0.0, %v1085
          %v1087 = vpop.f32.mrb[0].mxu0
          %v1088 = vpop.f32.mrb[0].mxu0
          %v1089 = vadd.f32 0.0, %v1088
          %v1090 = vpop.f32.mrb[0].mxu0
          %1091 = vmatprep.mubr.bf16.mxu0 0
          %1092 = vmatmul.mubr.bf16.gmra.mrb[0].mxu0 %v1023
          %v1093 = vpop.f32.mrb[0].mxu0
          %v1094 = vadd.f32 0.0, %v1093
          %v1095 = vpop.f32.mrb[0].mxu0
          %v1096 = vpop.f32.mrb[0].mxu0
          %v1097 = vadd.f32 0.0, %v1096
          %v1098 = vpop.f32.mrb[0].mxu0
          %1099 = vmatprep.mubr.bf16.mxu0 0
          %1100 = vmatmul.mubr.bf16.gmra.mrb[0].mxu0 %v1026
          %v1101 = vpop.f32.mrb[0].mxu0
          %v1102 = vadd.f32 0.0, %v1101
          %v1103 = vpop.f32.mrb[0].mxu0
          %v1104 = vpop.f32.mrb[0].mxu0
          %v1105 = vadd.f32 0.0, %v1104
          %v1106 = vpop.f32.mrb[0].mxu0
          %1107 = vmatprep.mubr.bf16.mxu0 0
          %1108 = vmatmul.mubr.bf16.gmra.mrb[0].mxu0 %v1029
          %v1109 = vpop.f32.mrb[0].mxu0
          %v1110 = vadd.f32 0.0, %v1109
          %v1111 = vpop.f32.mrb[0].mxu0
          %v1112 = vpop.f32.mrb[0].mxu0
          %v1113 = vadd.f32 0.0, %v1112
          %v1114 = vpop.f32.mrb[0].mxu0
          %1115 = vmatprep.mubr.bf16.mxu0 0
          %1116 = vmatmul.mubr.bf16.gmra.mrb[0].mxu0 %v1032
          %v1117 = vpop.f32.mrb[0].mxu0
          %v1118 = vadd.f32 0.0, %v1117
          %v1119 = vpop.f32.mrb[0].mxu0
          %v1120 = vpop.f32.mrb[0].mxu0
          %v1121 = vadd.f32 0.0, %v1120
          %v1122 = vpop.f32.mrb[0].mxu0
          %1123 = vmatprep.mubr.bf16.mxu0 0
          %1124 = vmatmul.mubr.bf16.gmra.mrb[0].mxu0 %v1035
          %v1125 = vpop.f32.mrb[0].mxu0
          %v1126 = vadd.f32 0.0, %v1125
          %v1127 = vpop.f32.mrb[0].mxu0
          %v1128 = vpop.f32.mrb[0].mxu0
          %v1129 = vadd.f32 0.0, %v1128
          %v1130 = vpop.f32.mrb[0].mxu0
          %1131 = vmatprep.mubr.bf16.mxu0 0
          %1132 = vmatmul.mubr.bf16.gmra.mrb[0].mxu0 %v1038
          %v1133 = vpop.f32.mrb[0].mxu0
          %v1134 = vadd.f32 0.0, %v1133
          %v1135 = vpop.f32.mrb[0].mxu0
          %v1136 = vpop.f32.mrb[0].mxu0
          %v1137 = vadd.f32 0.0, %v1136
          %v1138 = vpop.f32.mrb[0].mxu0
          %1139 = vdwg.mxu0
          %v1140 = vmul.f32 %v1078, 0.5
          %v1141 = vmul.f32 %v1081, 0.5
          %v1142 = vmul.f32 %v1086, 0.5
          %v1143 = vmul.f32 %v1089, 0.5
          %v1144 = vmul.f32 %v1094, 0.5
          %v1145 = vmul.f32 %v1097, 0.5
          %v1146 = vmul.f32 %v1102, 0.5
          %v1147 = vmul.f32 %v1105, 0.5
          %v1148 = vmul.f32 %v1110, 0.5
          %v1149 = vmul.f32 %v1113, 0.5
          %v1150 = vmul.f32 %v1118, 0.5
          %v1151 = vmul.f32 %v1121, 0.5
          %v1152 = vmul.f32 %v1126, 0.5
          %v1153 = vmul.f32 %v1129, 0.5
          %v1154 = vmul.f32 %v1134, 0.5
          %v1155 = vmul.f32 %v1137, 0.5
          %vm1156 = vcmask 39936
          %v1157 = vsel %vm1156, %v1140, -inf
          %v1158 = vrot.slane %v1157, 4
          %v1159 = vmax.f32 %v1157, %v1158
          %v1160 = vrot.slane %v1159, 2
          %v1161 = vmax.f32 %v1159, %v1160
          %v1162 = vrot.slane %v1161, 1
          %v1163 = vmax.f32 %v1161, %v1162
          %v1164 = vsel %vm1156, %v1141, -inf
          %v1165 = vrot.slane %v1164, 4
          %v1166 = vmax.f32 %v1164, %v1165
          %v1167 = vrot.slane %v1166, 2
          %v1168 = vmax.f32 %v1166, %v1167
          %v1169 = vrot.slane %v1168, 1
          %v1170 = vmax.f32 %v1168, %v1169
          %v1171 = vsel %vm1156, %v1142, -inf
          %v1172 = vrot.slane %v1171, 4
          %v1173 = vmax.f32 %v1171, %v1172
          %v1174 = vrot.slane %v1173, 2
          %v1175 = vmax.f32 %v1173, %v1174
          %v1176 = vrot.slane %v1175, 1
          %v1177 = vmax.f32 %v1175, %v1176
          %v1178 = vsel %vm1156, %v1143, -inf
          %v1179 = vrot.slane %v1178, 4
          %v1180 = vmax.f32 %v1178, %v1179
          %v1181 = vrot.slane %v1180, 2
          %v1182 = vmax.f32 %v1180, %v1181
          %v1183 = vrot.slane %v1182, 1
          %v1184 = vmax.f32 %v1182, %v1183
          %v1185 = vsel %vm1156, %v1144, -inf
          %v1186 = vrot.slane %v1185, 4
          %v1187 = vmax.f32 %v1185, %v1186
          %v1188 = vrot.slane %v1187, 2
          %v1189 = vmax.f32 %v1187, %v1188
          %v1190 = vrot.slane %v1189, 1
          %v1191 = vmax.f32 %v1189, %v1190
          %v1192 = vsel %vm1156, %v1145, -inf
          %v1193 = vrot.slane %v1192, 4
          %v1194 = vmax.f32 %v1192, %v1193
          %v1195 = vrot.slane %v1194, 2
          %v1196 = vmax.f32 %v1194, %v1195
          %v1197 = vrot.slane %v1196, 1
          %v1198 = vmax.f32 %v1196, %v1197
          %v1199 = vsel %vm1156, %v1146, -inf
          %v1200 = vrot.slane %v1199, 4
          %v1201 = vmax.f32 %v1199, %v1200
          %v1202 = vrot.slane %v1201, 2
          %v1203 = vmax.f32 %v1201, %v1202
          %v1204 = vrot.slane %v1203, 1
          %v1205 = vmax.f32 %v1203, %v1204
          %v1206 = vsel %vm1156, %v1147, -inf
          %v1207 = vrot.slane %v1206, 4
          %v1208 = vmax.f32 %v1206, %v1207
          %v1209 = vrot.slane %v1208, 2
          %v1210 = vmax.f32 %v1208, %v1209
          %v1211 = vrot.slane %v1210, 1
          %v1212 = vmax.f32 %v1210, %v1211
          %v1213 = vsel %vm1156, %v1148, -inf
          %v1214 = vrot.slane %v1213, 4
          %v1215 = vmax.f32 %v1213, %v1214
          %v1216 = vrot.slane %v1215, 2
          %v1217 = vmax.f32 %v1215, %v1216
          %v1218 = vrot.slane %v1217, 1
          %v1219 = vmax.f32 %v1217, %v1218
          %v1220 = vsel %vm1156, %v1149, -inf
          %v1221 = vrot.slane %v1220, 4
          %v1222 = vmax.f32 %v1220, %v1221
          %v1223 = vrot.slane %v1222, 2
          %v1224 = vmax.f32 %v1222, %v1223
          %v1225 = vrot.slane %v1224, 1
          %v1226 = vmax.f32 %v1224, %v1225
          %v1227 = vsel %vm1156, %v1150, -inf
          %v1228 = vrot.slane %v1227, 4
          %v1229 = vmax.f32 %v1227, %v1228
          %v1230 = vrot.slane %v1229, 2
          %v1231 = vmax.f32 %v1229, %v1230
          %v1232 = vrot.slane %v1231, 1
          %v1233 = vmax.f32 %v1231, %v1232
          %v1234 = vsel %vm1156, %v1151, -inf
          %v1235 = vrot.slane %v1234, 4
          %v1236 = vmax.f32 %v1234, %v1235
          %v1237 = vrot.slane %v1236, 2
          %v1238 = vmax.f32 %v1236, %v1237
          %v1239 = vrot.slane %v1238, 1
          %v1240 = vmax.f32 %v1238, %v1239
          %v1241 = vsel %vm1156, %v1152, -inf
          %v1242 = vrot.slane %v1241, 4
          %v1243 = vmax.f32 %v1241, %v1242
          %v1244 = vrot.slane %v1243, 2
          %v1245 = vmax.f32 %v1243, %v1244
          %v1246 = vrot.slane %v1245, 1
          %v1247 = vmax.f32 %v1245, %v1246
          %v1248 = vsel %vm1156, %v1153, -inf
          %v1249 = vrot.slane %v1248, 4
          %v1250 = vmax.f32 %v1248, %v1249
          %v1251 = vrot.slane %v1250, 2
          %v1252 = vmax.f32 %v1250, %v1251
          %v1253 = vrot.slane %v1252, 1
          %v1254 = vmax.f32 %v1252, %v1253
          %v1255 = vsel %vm1156, %v1154, -inf
          %v1256 = vrot.slane %v1255, 4
          %v1257 = vmax.f32 %v1255, %v1256
          %v1258 = vrot.slane %v1257, 2
          %v1259 = vmax.f32 %v1257, %v1258
          %v1260 = vrot.slane %v1259, 1
          %v1261 = vmax.f32 %v1259, %v1260
          %v1262 = vsel %vm1156, %v1155, -inf
          %v1263 = vrot.slane %v1262, 4
          %v1264 = vmax.f32 %v1262, %v1263
          %v1265 = vrot.slane %v1264, 2
          %v1266 = vmax.f32 %v1264, %v1265
          %v1267 = vrot.slane %v1266, 1
          %v1268 = vmax.f32 %v1266, %v1267
          %v1269 = vsub.f32 %v1140, %v1163
          %v1270 = vsub.f32 %v1141, %v1170
          %v1271 = vsub.f32 %v1142, %v1177
          %v1272 = vsub.f32 %v1143, %v1184
          %v1273 = vsub.f32 %v1144, %v1191
          %v1274 = vsub.f32 %v1145, %v1198
          %v1275 = vsub.f32 %v1146, %v1205
          %v1276 = vsub.f32 %v1147, %v1212
          %v1277 = vsub.f32 %v1148, %v1219
          %v1278 = vsub.f32 %v1149, %v1226
          %v1279 = vsub.f32 %v1150, %v1233
          %v1280 = vsub.f32 %v1151, %v1240
          %v1281 = vsub.f32 %v1152, %v1247
          %v1282 = vsub.f32 %v1153, %v1254
          %v1283 = vsub.f32 %v1154, %v1261
          %v1284 = vsub.f32 %v1155, %v1268
          %v1285 = vmul.f32 %v1269, 1.442695
          %v1286 = vpow.pop %v1285
          %v1287 = vmul.f32 %v1270, 1.442695
          %v1288 = vpow.pop %v1287
          %v1289 = vmul.f32 %v1271, 1.442695
          %v1290 = vpow.pop %v1289
          %v1291 = vmul.f32 %v1272, 1.442695
          %v1292 = vpow.pop %v1291
          %v1293 = vmul.f32 %v1273, 1.442695
          %v1294 = vpow.pop %v1293
          %v1295 = vmul.f32 %v1274, 1.442695
          %v1296 = vpow.pop %v1295
          %v1297 = vmul.f32 %v1275, 1.442695
          %v1298 = vpow.pop %v1297
          %v1299 = vmul.f32 %v1276, 1.442695
          %v1300 = vpow.pop %v1299
          %v1301 = vmul.f32 %v1277, 1.442695
          %v1302 = vpow.pop %v1301
          %v1303 = vmul.f32 %v1278, 1.442695
          %v1304 = vpow.pop %v1303
          %v1305 = vmul.f32 %v1279, 1.442695
          %v1306 = vpow.pop %v1305
          %v1307 = vmul.f32 %v1280, 1.442695
          %v1308 = vpow.pop %v1307
          %v1309 = vmul.f32 %v1281, 1.442695
          %v1310 = vpow.pop %v1309
          %v1311 = vmul.f32 %v1282, 1.442695
          %v1312 = vpow.pop %v1311
          %v1313 = vmul.f32 %v1283, 1.442695
          %v1314 = vpow.pop %v1313
          %v1315 = vmul.f32 %v1284, 1.442695
          %v1316 = vpow.pop %v1315
          %v1317 = vsel %vm1156, %v1286, 0.0
          %v1318 = vrot.slane %v1317, 4
          %v1319 = vadd.f32 %v1317, %v1318
          %v1320 = vrot.slane %v1319, 2
          %v1321 = vadd.f32 %v1319, %v1320
          %v1322 = vrot.slane %v1321, 1
          %v1323 = vadd.f32 %v1321, %v1322
          %v1324 = vsel %vm1156, %v1288, 0.0
          %v1325 = vrot.slane %v1324, 4
          %v1326 = vadd.f32 %v1324, %v1325
          %v1327 = vrot.slane %v1326, 2
          %v1328 = vadd.f32 %v1326, %v1327
          %v1329 = vrot.slane %v1328, 1
          %v1330 = vadd.f32 %v1328, %v1329
          %v1331 = vsel %vm1156, %v1290, 0.0
          %v1332 = vrot.slane %v1331, 4
          %v1333 = vadd.f32 %v1331, %v1332
          %v1334 = vrot.slane %v1333, 2
          %v1335 = vadd.f32 %v1333, %v1334
          %v1336 = vrot.slane %v1335, 1
          %v1337 = vadd.f32 %v1335, %v1336
          %v1338 = vsel %vm1156, %v1292, 0.0
          %v1339 = vrot.slane %v1338, 4
          %v1340 = vadd.f32 %v1338, %v1339
          %v1341 = vrot.slane %v1340, 2
          %v1342 = vadd.f32 %v1340, %v1341
          %v1343 = vrot.slane %v1342, 1
          %v1344 = vadd.f32 %v1342, %v1343
          %v1345 = vsel %vm1156, %v1294, 0.0
          %v1346 = vrot.slane %v1345, 4
          %v1347 = vadd.f32 %v1345, %v1346
          %v1348 = vrot.slane %v1347, 2
          %v1349 = vadd.f32 %v1347, %v1348
          %v1350 = vrot.slane %v1349, 1
          %v1351 = vadd.f32 %v1349, %v1350
          %v1352 = vsel %vm1156, %v1296, 0.0
          %v1353 = vrot.slane %v1352, 4
          %v1354 = vadd.f32 %v1352, %v1353
          %v1355 = vrot.slane %v1354, 2
          %v1356 = vadd.f32 %v1354, %v1355
          %v1357 = vrot.slane %v1356, 1
          %v1358 = vadd.f32 %v1356, %v1357
          %v1359 = vsel %vm1156, %v1298, 0.0
          %v1360 = vrot.slane %v1359, 4
          %v1361 = vadd.f32 %v1359, %v1360
          %v1362 = vrot.slane %v1361, 2
          %v1363 = vadd.f32 %v1361, %v1362
          %v1364 = vrot.slane %v1363, 1
          %v1365 = vadd.f32 %v1363, %v1364
          %v1366 = vsel %vm1156, %v1300, 0.0
          %v1367 = vrot.slane %v1366, 4
          %v1368 = vadd.f32 %v1366, %v1367
          %v1369 = vrot.slane %v1368, 2
          %v1370 = vadd.f32 %v1368, %v1369
          %v1371 = vrot.slane %v1370, 1
          %v1372 = vadd.f32 %v1370, %v1371
          %v1373 = vsel %vm1156, %v1302, 0.0
          %v1374 = vrot.slane %v1373, 4
          %v1375 = vadd.f32 %v1373, %v1374
          %v1376 = vrot.slane %v1375, 2
          %v1377 = vadd.f32 %v1375, %v1376
          %v1378 = vrot.slane %v1377, 1
          %v1379 = vadd.f32 %v1377, %v1378
          %v1380 = vsel %vm1156, %v1304, 0.0
          %v1381 = vrot.slane %v1380, 4
          %v1382 = vadd.f32 %v1380, %v1381
          %v1383 = vrot.slane %v1382, 2
          %v1384 = vadd.f32 %v1382, %v1383
          %v1385 = vrot.slane %v1384, 1
          %v1386 = vadd.f32 %v1384, %v1385
          %v1387 = vsel %vm1156, %v1306, 0.0
          %v1388 = vrot.slane %v1387, 4
          %v1389 = vadd.f32 %v1387, %v1388
          %v1390 = vrot.slane %v1389, 2
          %v1391 = vadd.f32 %v1389, %v1390
          %v1392 = vrot.slane %v1391, 1
          %v1393 = vadd.f32 %v1391, %v1392
          %v1394 = vsel %vm1156, %v1308, 0.0
          %v1395 = vrot.slane %v1394, 4
          %v1396 = vadd.f32 %v1394, %v1395
          %v1397 = vrot.slane %v1396, 2
          %v1398 = vadd.f32 %v1396, %v1397
          %v1399 = vrot.slane %v1398, 1
          %v1400 = vadd.f32 %v1398, %v1399
          %v1401 = vsel %vm1156, %v1310, 0.0
          %v1402 = vrot.slane %v1401, 4
          %v1403 = vadd.f32 %v1401, %v1402
          %v1404 = vrot.slane %v1403, 2
          %v1405 = vadd.f32 %v1403, %v1404
          %v1406 = vrot.slane %v1405, 1
          %v1407 = vadd.f32 %v1405, %v1406
          %v1408 = vsel %vm1156, %v1312, 0.0
          %v1409 = vrot.slane %v1408, 4
          %v1410 = vadd.f32 %v1408, %v1409
          %v1411 = vrot.slane %v1410, 2
          %v1412 = vadd.f32 %v1410, %v1411
          %v1413 = vrot.slane %v1412, 1
          %v1414 = vadd.f32 %v1412, %v1413
          %v1415 = vsel %vm1156, %v1314, 0.0
          %v1416 = vrot.slane %v1415, 4
          %v1417 = vadd.f32 %v1415, %v1416
          %v1418 = vrot.slane %v1417, 2
          %v1419 = vadd.f32 %v1417, %v1418
          %v1420 = vrot.slane %v1419, 1
          %v1421 = vadd.f32 %v1419, %v1420
          %v1422 = vsel %vm1156, %v1316, 0.0
          %v1423 = vrot.slane %v1422, 4
          %v1424 = vadd.f32 %v1422, %v1423
          %v1425 = vrot.slane %v1424, 2
          %v1426 = vadd.f32 %v1424, %v1425
          %v1427 = vrot.slane %v1426, 1
          %v1428 = vadd.f32 %v1426, %v1427
          %v1429 = vrcp.pop %v1323
          %v1430 = vrcp.pop %v1330
          %v1431 = vrcp.pop %v1337
          %v1432 = vrcp.pop %v1344
          %v1433 = vrcp.pop %v1351
          %v1434 = vrcp.pop %v1358
          %v1435 = vrcp.pop %v1365
          %v1436 = vrcp.pop %v1372
          %v1437 = vrcp.pop %v1379
          %v1438 = vrcp.pop %v1386
          %v1439 = vrcp.pop %v1393
          %v1440 = vrcp.pop %v1400
          %v1441 = vrcp.pop %v1407
          %v1442 = vrcp.pop %v1414
          %v1443 = vrcp.pop %v1421
          %v1444 = vrcp.pop %v1428
          %v1445 = vmul.f32 %v1286, %v1429
          %v1446 = vmul.f32 %v1288, %v1430
          %v1447 = vmul.f32 %v1290, %v1431
          %v1448 = vmul.f32 %v1292, %v1432
          %v1449 = vmul.f32 %v1294, %v1433
          %v1450 = vmul.f32 %v1296, %v1434
          %v1451 = vmul.f32 %v1298, %v1435
          %v1452 = vmul.f32 %v1300, %v1436
          %v1453 = vmul.f32 %v1302, %v1437
          %v1454 = vmul.f32 %v1304, %v1438
          %v1455 = vmul.f32 %v1306, %v1439
          %v1456 = vmul.f32 %v1308, %v1440
          %v1457 = vmul.f32 %v1310, %v1441
          %v1458 = vmul.f32 %v1312, %v1442
          %v1459 = vmul.f32 %v1314, %v1443
          %v1460 = vmul.f32 %v1316, %v1444
          %v1461 = vpack.c.bf16 %v1446, %v1445
          %v1462 = vpack.c.bf16 %v1448, %v1447
          %v1463 = vpack.c.bf16 %v1450, %v1449
          %v1464 = vpack.c.bf16 %v1452, %v1451
          %v1465 = vpack.c.bf16 %v1454, %v1453
          %v1466 = vpack.c.bf16 %v1456, %v1455
          %v1467 = vpack.c.bf16 %v1458, %v1457
          %v1468 = vpack.c.bf16 %v1460, %v1459
          %v1470 = vsel %vm1156, %v1461, 0
          %v1473 = vsel %vm1156, %v1462, 0
          %v1476 = vsel %vm1156, %v1463, 0
          %v1479 = vsel %vm1156, %v1464, 0
          %v1482 = vsel %vm1156, %v1465, 0
          %v1485 = vsel %vm1156, %v1466, 0
          %v1488 = vsel %vm1156, %v1467, 0
          %v1491 = vsel %vm1156, %v1468, 0
          %vm1493 = vcmask 1042432
          %v1494 = vsel %vm705, 4294967295, 65535
          %v1495 = vsel %vm1493, %v1494, 0
          %v1497 = vand.u32 %v650, %v1495
          %1499 = vmatprep.subr.bf16.mxu0 0
          %1500 = vmatpush1.bf16.msra.mxu0 %v1497
          %1501 = vmatprep.subr.bf16.mxu0 0
          %1502 = vmatpush1.bf16.msra.mxu0 0
          %1503 = vmatprep.subr.bf16.mxu0 0
          %1504 = vmatpush1.bf16.msra.mxu0 0
          %1505 = vmatprep.subr.bf16.mxu0 0
          %1506 = vmatpush1.bf16.msra.mxu0 0
          %1507 = vmatprep.subr.bf16.mxu0 0
          %1508 = vmatpush1.bf16.msra.mxu0 0
          %1509 = vmatprep.subr.bf16.mxu0 0
          %1510 = vmatpush1.bf16.msra.mxu0 0
          %1511 = vmatprep.subr.bf16.mxu0 0
          %1512 = vmatpush1.bf16.msra.mxu0 0
          %1513 = vmatprep.subr.bf16.mxu0 0
          %1514 = vmatpush1.bf16.msra.mxu0 0
          %1515 = vmatprep.subr.bf16.mxu0 0
          %1516 = vmatpush1.bf16.msra.mxu0 0
          %1517 = vmatprep.subr.bf16.mxu0 0
          %1518 = vmatpush1.bf16.msra.mxu0 0
          %1519 = vmatprep.subr.bf16.mxu0 0
          %1520 = vmatpush1.bf16.msra.mxu0 0
          %1521 = vmatprep.subr.bf16.mxu0 0
          %1522 = vmatpush1.bf16.msra.mxu0 0
          %1523 = vmatprep.subr.bf16.mxu0 0
          %1524 = vmatpush1.bf16.msra.mxu0 0
          %1525 = vmatprep.subr.bf16.mxu0 0
          %1526 = vmatpush1.bf16.msra.mxu0 0
          %1527 = vmatprep.subr.bf16.mxu0 0
          %1528 = vmatpush1.bf16.msra.mxu0 0
          %1529 = vmatprep.subr.bf16.mxu0 0
          %1530 = vmatpush1.bf16.msra.mxu0 0
          %1531 = vmatprep.mubr.bf16.mxu0 0
          %1532 = vmatmul.mubr.bf16.gmra.mrb[0].mxu0 %v1470
          %v1533 = vpop.f32.mrb[0].mxu0
          %v1534 = vadd.f32 0.0, %v1533
          %v1535 = vpop.f32.mrb[0].mxu0
          %v1536 = vpop.f32.mrb[0].mxu0
          %v1537 = vadd.f32 0.0, %v1536
          %v1538 = vpop.f32.mrb[0].mxu0
          %1539 = vmatprep.mubr.bf16.mxu0 0
          %1540 = vmatmul.mubr.bf16.gmra.mrb[0].mxu0 %v1473
          %v1541 = vpop.f32.mrb[0].mxu0
          %v1542 = vadd.f32 0.0, %v1541
          %v1543 = vpop.f32.mrb[0].mxu0
          %v1544 = vpop.f32.mrb[0].mxu0
          %v1545 = vadd.f32 0.0, %v1544
          %v1546 = vpop.f32.mrb[0].mxu0
          %1547 = vmatprep.mubr.bf16.mxu0 0
          %1548 = vmatmul.mubr.bf16.gmra.mrb[0].mxu0 %v1476
          %v1549 = vpop.f32.mrb[0].mxu0
          %v1550 = vadd.f32 0.0, %v1549
          %v1551 = vpop.f32.mrb[0].mxu0
          %v1552 = vpop.f32.mrb[0].mxu0
          %v1553 = vadd.f32 0.0, %v1552
          %v1554 = vpop.f32.mrb[0].mxu0
          %1555 = vmatprep.mubr.bf16.mxu0 0
          %1556 = vmatmul.mubr.bf16.gmra.mrb[0].mxu0 %v1479
          %v1557 = vpop.f32.mrb[0].mxu0
          %v1558 = vadd.f32 0.0, %v1557
          %v1559 = vpop.f32.mrb[0].mxu0
          %v1560 = vpop.f32.mrb[0].mxu0
          %v1561 = vadd.f32 0.0, %v1560
          %v1562 = vpop.f32.mrb[0].mxu0
          %1563 = vmatprep.mubr.bf16.mxu0 0
          %1564 = vmatmul.mubr.bf16.gmra.mrb[0].mxu0 %v1482
          %v1565 = vpop.f32.mrb[0].mxu0
          %v1566 = vadd.f32 0.0, %v1565
          %v1567 = vpop.f32.mrb[0].mxu0
          %v1568 = vpop.f32.mrb[0].mxu0
          %v1569 = vadd.f32 0.0, %v1568
          %v1570 = vpop.f32.mrb[0].mxu0
          %1571 = vmatprep.mubr.bf16.mxu0 0
          %1572 = vmatmul.mubr.bf16.gmra.mrb[0].mxu0 %v1485
          %v1573 = vpop.f32.mrb[0].mxu0
          %v1574 = vadd.f32 0.0, %v1573
          %v1575 = vpop.f32.mrb[0].mxu0
          %v1576 = vpop.f32.mrb[0].mxu0
          %v1577 = vadd.f32 0.0, %v1576
          %v1578 = vpop.f32.mrb[0].mxu0
          %1579 = vmatprep.mubr.bf16.mxu0 0
          %1580 = vmatmul.mubr.bf16.gmra.mrb[0].mxu0 %v1488
          %v1581 = vpop.f32.mrb[0].mxu0
          %v1582 = vadd.f32 0.0, %v1581
          %v1583 = vpop.f32.mrb[0].mxu0
          %v1584 = vpop.f32.mrb[0].mxu0
          %v1585 = vadd.f32 0.0, %v1584
          %v1586 = vpop.f32.mrb[0].mxu0
          %1587 = vmatprep.mubr.bf16.mxu0 0
          %1588 = vmatmul.mubr.bf16.gmra.mrb[0].mxu0 %v1491
          %v1589 = vpop.f32.mrb[0].mxu0
          %v1590 = vadd.f32 0.0, %v1589
          %v1591 = vpop.f32.mrb[0].mxu0
          %v1592 = vpop.f32.mrb[0].mxu0
          %v1593 = vadd.f32 0.0, %v1592
          %v1594 = vpop.f32.mrb[0].mxu0
          %1595 = vdwg.mxu0
          %v1596 = vmul.f32 %v1534, %v793
          %v1597 = vmul.f32 %v1537, %v793
          %v1598 = vmul.f32 %v1542, %v793
          %v1599 = vmul.f32 %v1545, %v793
          %v1600 = vmul.f32 %v1550, %v793
          %v1601 = vmul.f32 %v1553, %v793
          %v1602 = vmul.f32 %v1558, %v793
          %v1603 = vmul.f32 %v1561, %v793
          %v1604 = vmul.f32 %v1566, %v796
          %v1605 = vmul.f32 %v1569, %v796
          %v1606 = vmul.f32 %v1574, %v796
          %v1607 = vmul.f32 %v1577, %v796
          %v1608 = vmul.f32 %v1582, %v796
          %v1609 = vmul.f32 %v1585, %v796
          %v1610 = vmul.f32 %v1590, %v796
          %v1611 = vmul.f32 %v1593, %v796
          %v1612 = vsel %vm701, %v1596, 0.0
          %v1613 = vrot.slane %v1612, 4
          %v1614 = vadd.f32 %v1612, %v1613
          %v1615 = vrot.slane %v1614, 2
          %v1616 = vadd.f32 %v1614, %v1615
          %v1617 = vrot.slane %v1616, 1
          %v1618 = vadd.f32 %v1616, %v1617
          %v1619 = vsel %vm701, %v1597, 0.0
          %v1620 = vrot.slane %v1619, 4
          %v1621 = vadd.f32 %v1619, %v1620
          %v1622 = vrot.slane %v1621, 2
          %v1623 = vadd.f32 %v1621, %v1622
          %v1624 = vrot.slane %v1623, 1
          %v1625 = vadd.f32 %v1623, %v1624
          %v1626 = vsel %vm701, %v1598, 0.0
          %v1627 = vrot.slane %v1626, 4
          %v1628 = vadd.f32 %v1626, %v1627
          %v1629 = vrot.slane %v1628, 2
          %v1630 = vadd.f32 %v1628, %v1629
          %v1631 = vrot.slane %v1630, 1
          %v1632 = vadd.f32 %v1630, %v1631
          %v1633 = vsel %vm701, %v1599, 0.0
          %v1634 = vrot.slane %v1633, 4
          %v1635 = vadd.f32 %v1633, %v1634
          %v1636 = vrot.slane %v1635, 2
          %v1637 = vadd.f32 %v1635, %v1636
          %v1638 = vrot.slane %v1637, 1
          %v1639 = vadd.f32 %v1637, %v1638
          %v1640 = vsel %vm701, %v1600, 0.0
          %v1641 = vrot.slane %v1640, 4
          %v1642 = vadd.f32 %v1640, %v1641
          %v1643 = vrot.slane %v1642, 2
          %v1644 = vadd.f32 %v1642, %v1643
          %v1645 = vrot.slane %v1644, 1
          %v1646 = vadd.f32 %v1644, %v1645
          %v1647 = vsel %vm701, %v1601, 0.0
          %v1648 = vrot.slane %v1647, 4
          %v1649 = vadd.f32 %v1647, %v1648
          %v1650 = vrot.slane %v1649, 2
          %v1651 = vadd.f32 %v1649, %v1650
          %v1652 = vrot.slane %v1651, 1
          %v1653 = vadd.f32 %v1651, %v1652
          %v1654 = vsel %vm701, %v1602, 0.0
          %v1655 = vrot.slane %v1654, 4
          %v1656 = vadd.f32 %v1654, %v1655
          %v1657 = vrot.slane %v1656, 2
          %v1658 = vadd.f32 %v1656, %v1657
          %v1659 = vrot.slane %v1658, 1
          %v1660 = vadd.f32 %v1658, %v1659
          %v1661 = vsel %vm701, %v1603, 0.0
          %v1662 = vrot.slane %v1661, 4
          %v1663 = vadd.f32 %v1661, %v1662
          %v1664 = vrot.slane %v1663, 2
          %v1665 = vadd.f32 %v1663, %v1664
          %v1666 = vrot.slane %v1665, 1
          %v1667 = vadd.f32 %v1665, %v1666
          %v1668 = vsel %vm701, %v1604, 0.0
          %v1669 = vrot.slane %v1668, 4
          %v1670 = vadd.f32 %v1668, %v1669
          %v1671 = vrot.slane %v1670, 2
          %v1672 = vadd.f32 %v1670, %v1671
          %v1673 = vrot.slane %v1672, 1
          %v1674 = vadd.f32 %v1672, %v1673
          %v1675 = vsel %vm701, %v1605, 0.0
          %v1676 = vrot.slane %v1675, 4
          %v1677 = vadd.f32 %v1675, %v1676
          %v1678 = vrot.slane %v1677, 2
          %v1679 = vadd.f32 %v1677, %v1678
          %v1680 = vrot.slane %v1679, 1
          %v1681 = vadd.f32 %v1679, %v1680
          %v1682 = vsel %vm701, %v1606, 0.0
          %v1683 = vrot.slane %v1682, 4
          %v1684 = vadd.f32 %v1682, %v1683
          %v1685 = vrot.slane %v1684, 2
          %v1686 = vadd.f32 %v1684, %v1685
          %v1687 = vrot.slane %v1686, 1
          %v1688 = vadd.f32 %v1686, %v1687
          %v1689 = vsel %vm701, %v1607, 0.0
          %v1690 = vrot.slane %v1689, 4
          %v1691 = vadd.f32 %v1689, %v1690
          %v1692 = vrot.slane %v1691, 2
          %v1693 = vadd.f32 %v1691, %v1692
          %v1694 = vrot.slane %v1693, 1
          %v1695 = vadd.f32 %v1693, %v1694
          %v1696 = vsel %vm701, %v1608, 0.0
          %v1697 = vrot.slane %v1696, 4
          %v1698 = vadd.f32 %v1696, %v1697
          %v1699 = vrot.slane %v1698, 2
          %v1700 = vadd.f32 %v1698, %v1699
          %v1701 = vrot.slane %v1700, 1
          %v1702 = vadd.f32 %v1700, %v1701
          %v1703 = vsel %vm701, %v1609, 0.0
          %v1704 = vrot.slane %v1703, 4
          %v1705 = vadd.f32 %v1703, %v1704
          %v1706 = vrot.slane %v1705, 2
          %v1707 = vadd.f32 %v1705, %v1706
          %v1708 = vrot.slane %v1707, 1
          %v1709 = vadd.f32 %v1707, %v1708
          %v1710 = vsel %vm701, %v1610, 0.0
          %v1711 = vrot.slane %v1710, 4
          %v1712 = vadd.f32 %v1710, %v1711
          %v1713 = vrot.slane %v1712, 2
          %v1714 = vadd.f32 %v1712, %v1713
          %v1715 = vrot.slane %v1714, 1
          %v1716 = vadd.f32 %v1714, %v1715
          %v1717 = vsel %vm701, %v1611, 0.0
          %v1718 = vrot.slane %v1717, 4
          %v1719 = vadd.f32 %v1717, %v1718
          %v1720 = vrot.slane %v1719, 2
          %v1721 = vadd.f32 %v1719, %v1720
          %v1722 = vrot.slane %v1721, 1
          %v1723 = vadd.f32 %v1721, %v1722
          %v1724 = vpack.c.bf16 %v1618, %v1618
          %v1725 = vpack.c.bf16 %v1625, %v1625
          %v1726 = vpack.c.bf16 %v1632, %v1632
          %v1727 = vpack.c.bf16 %v1639, %v1639
          %v1728 = vpack.c.bf16 %v1646, %v1646
          %v1729 = vpack.c.bf16 %v1653, %v1653
          %v1730 = vpack.c.bf16 %v1660, %v1660
          %v1731 = vpack.c.bf16 %v1667, %v1667
          %v1732 = vpack.c.bf16 %v1674, %v1674
          %v1733 = vpack.c.bf16 %v1681, %v1681
          %v1734 = vpack.c.bf16 %v1688, %v1688
          %v1735 = vpack.c.bf16 %v1695, %v1695
          %v1736 = vpack.c.bf16 %v1702, %v1702
          %v1737 = vpack.c.bf16 %v1709, %v1709
          %v1738 = vpack.c.bf16 %v1716, %v1716
          %v1739 = vpack.c.bf16 %v1723, %v1723
          %v1740 = vld [vmem:[%s608] sm:$0xf]
          %v1741 = vld [vmem:[%s608 + $0x4] sm:$0xf]
          %v1742 = vld [vmem:[%s608 + $0x8] sm:$0x3]
          %v1743 = vld [vmem:[%s611] sm:$0x1]
          %v1745 = vlaneseq
          %v1746 = vshrl.u32 %v1745, 7
          %v1747 = vsub.s32 0, %v1746
          %v1748 = vrot.slane %v1743, %v1747
          %v1766 = vunpack.c.l.b16 %v1724
          %v1767 = vunpack.c.l.b16 %v1725
          %v1768 = vunpack.c.l.b16 %v1726
          %v1769 = vunpack.c.l.b16 %v1727
          %v1770 = vunpack.c.l.b16 %v1728
          %v1771 = vunpack.c.l.b16 %v1729
          %v1772 = vunpack.c.l.b16 %v1730
          %v1773 = vunpack.c.l.b16 %v1731
          %v1774 = vunpack.c.l.b16 %v1732
          %v1775 = vunpack.c.l.b16 %v1733
          %v1776 = vunpack.c.l.b16 %v1734
          %v1777 = vunpack.c.l.b16 %v1735
          %v1778 = vunpack.c.l.b16 %v1736
          %v1779 = vunpack.c.l.b16 %v1737
          %v1780 = vunpack.c.l.b16 %v1738
          %v1781 = vunpack.c.l.b16 %v1739
          %vm1782 = vcmask 1041409
          %v1783 = vsel %vm1782, %v1767, %v1766
          %vm1784 = vcmask 1042434
          %v1785 = vsel %vm1784, %v1768, %v1783
          %vm1786 = vcmask 1043459
          %v1787 = vsel %vm1786, %v1769, %v1785
          %vm1788 = vcmask 1044484
          %v1789 = vsel %vm1788, %v1770, %v1787
          %vm1790 = vcmask 1045509
          %v1791 = vsel %vm1790, %v1771, %v1789
          %vm1792 = vcmask 1046534
          %v1793 = vsel %vm1792, %v1772, %v1791
          %vm1794 = vcmask 1047559
          %v1795 = vsel %vm1794, %v1773, %v1793
          %v1796 = vsel %vm1782, %v1775, %v1774
          %v1797 = vsel %vm1784, %v1776, %v1796
          %v1798 = vsel %vm1786, %v1777, %v1797
          %v1799 = vsel %vm1788, %v1778, %v1798
          %v1800 = vsel %vm1790, %v1779, %v1799
          %v1801 = vsel %vm1792, %v1780, %v1800
          %v1802 = vsel %vm1794, %v1781, %v1801
          %v1803 = vpack.c.b16 %v1802, %v1795
          %v1807 = vunpack.c.l.b16 %v1740
          %v1808 = vunpack.c.l.b16 %v1741
          %v1809 = vunpack.c.l.b16 %v1742
          %v1810 = vpack.c.b16 %v1808, %v1807
          %v1811 = vpack.c.b16 %v1809, %v1809
          %v1814 = vsel %vm701, %v1803, 0
          %v1817 = vsel %vm705, %v1811, 0
          %1819 = vmatprep.subr.bf16.mxu0 0
          %1820 = vmatpush1.bf16.msra.mxu0 %v1810
          %1821 = vmatprep.subr.bf16.mxu0 0
          %1822 = vmatpush1.bf16.msra.mxu0 %v1817
          %1823 = vmatprep.subr.bf16.mxu0 0
          %1824 = vmatpush1.bf16.msra.mxu0 0
          %1825 = vmatprep.subr.bf16.mxu0 0
          %1826 = vmatpush1.bf16.msra.mxu0 0
          %1827 = vmatprep.subr.bf16.mxu0 0
          %1828 = vmatpush1.bf16.msra.mxu0 0
          %1829 = vmatprep.subr.bf16.mxu0 0
          %1830 = vmatpush1.bf16.msra.mxu0 0
          %1831 = vmatprep.subr.bf16.mxu0 0
          %1832 = vmatpush1.bf16.msra.mxu0 0
          %1833 = vmatprep.subr.bf16.mxu0 0
          %1834 = vmatpush1.bf16.msra.mxu0 0
          %1835 = vmatprep.subr.bf16.mxu0 0
          %1836 = vmatpush1.bf16.msra.mxu0 0
          %1837 = vmatprep.subr.bf16.mxu0 0
          %1838 = vmatpush1.bf16.msra.mxu0 0
          %1839 = vmatprep.subr.bf16.mxu0 0
          %1840 = vmatpush1.bf16.msra.mxu0 0
          %1841 = vmatprep.subr.bf16.mxu0 0
          %1842 = vmatpush1.bf16.msra.mxu0 0
          %1843 = vmatprep.subr.bf16.mxu0 0
          %1844 = vmatpush1.bf16.msra.mxu0 0
          %1845 = vmatprep.subr.bf16.mxu0 0
          %1846 = vmatpush1.bf16.msra.mxu0 0
          %1847 = vmatprep.subr.bf16.mxu0 0
          %1848 = vmatpush1.bf16.msra.mxu0 0
          %1849 = vmatprep.subr.bf16.mxu0 0
          %1850 = vmatpush1.bf16.msra.mxu0 0
          %1851 = vmatprep.mubr.bf16.mxu0 0
          %1852 = vmatmul.mubr.bf16.gmra.mrb[0].mxu0 %v1814
          %v1853 = vpop.f32.mrb[0].mxu0
          %v1854 = vadd.f32 %v1748, %v1853
          %v1855 = vpop.f32.mrb[0].mxu0
          %v1856 = vpop.f32.mrb[0].mxu0
          %v1857 = vadd.f32 %v1748, %v1856
          %v1858 = vpop.f32.mrb[0].mxu0
          %1859 = vdwg.mxu0
          %v1860 = vadd.f32 %v651, %v1854
          %v1861 = vadd.f32 %v652, %v1857
          %v1862 = vld [vmem:[%s615] sm:$0x1]
          %v1863 = vld [vmem:[%s619] sm:$0x1]
          %v1864 = vsel %vm701, %v1860, 0.0
          %1865 = vadd.xlane.f32.xlu0 %v1864
          %v1866 = vpop.xlane.xlu0 %1865
          %v1867 = vsel %vm701, %v1861, 0.0
          %1868 = vadd.xlane.f32.xlu0 %v1867
          %v1869 = vpop.xlane.xlu0 %1868
          %v1870 = vrcp.pop 20.0
          %v1871 = vmul.f32 %v1866, %v1870
          %v1872 = vmul.f32 %v1869, %v1870
          %v1873 = vsub.f32 %v1860, %v1871
          %v1874 = vsub.f32 %v1861, %v1872
          %v1875 = vmul.f32 %v1873, %v1873
          %v1876 = vmul.f32 %v1874, %v1874
          %v1877 = vsel %vm701, %v1875, 0.0
          %1878 = vadd.xlane.f32.xlu0 %v1877
          %v1879 = vpop.xlane.xlu0 %1878
          %v1880 = vsel %vm701, %v1876, 0.0
          %1881 = vadd.xlane.f32.xlu0 %v1880
          %v1882 = vpop.xlane.xlu0 %1881
          %v1883 = vmul.f32 %v1879, %v1870
          %v1884 = vmul.f32 %v1882, %v1870
          %v1885 = vadd.f32 %v1883, 1e-05
          %v1886 = vadd.f32 %v1884, 1e-05
          %v1887 = vrsqrt.pop %v1885
          %v1888 = vrsqrt.pop %v1886
          %v1889 = vmul.f32 %v1873, %v1887
          %v1890 = vmul.f32 %v1874, %v1888
          %v1891 = vlaneseq
          %v1892 = vshrl.u32 %v1891, 7
          %v1893 = vsub.s32 0, %v1892
          %v1894 = vrot.slane %v1862, %v1893
          %v1895 = vmul.f32 %v1889, %v1894
          %v1896 = vmul.f32 %v1890, %v1894
          %v1897 = vlaneseq
          %v1898 = vshrl.u32 %v1897, 7
          %v1899 = vsub.s32 0, %v1898
          %v1900 = vrot.slane %v1863, %v1899
          %v1901 = vadd.f32 %v1895, %v1900
          %v1902 = vadd.f32 %v1896, %v1900
          %v1903 = vpack.c.bf16 %v1902, %v1901
          %v1904 = vld [vmem:[%s624] sm:$0xff]
          %v1905 = vld [vmem:[%s624 + $0x8] sm:$0xff]
          %v1906 = vld [vmem:[%s624 + $0x10] sm:$0xff]
          %v1907 = vld [vmem:[%s624 + $0x18] sm:$0xff]
          %v1908 = vld [vmem:[%s624 + $0x20] sm:$0xff]
          %v1909 = vld [vmem:[%s624 + $0x28] sm:$0xff]
          %v1910 = vld [vmem:[%s624 + $0x30] sm:$0xff]
          %v1911 = vld [vmem:[%s624 + $0x38] sm:$0xff]
          %v1912 = vld [vmem:[%s624 + $0x40] sm:$0xff]
          %v1913 = vld [vmem:[%s624 + $0x48] sm:$0xff]
          %v1914 = vld [vmem:[%s624 + $0x50] sm:$0xff]
          %v1915 = vld [vmem:[%s624 + $0x58] sm:$0xff]
          %v1916 = vld [vmem:[%s624 + $0x60] sm:$0xff]
          %v1917 = vld [vmem:[%s624 + $0x68] sm:$0xff]
          %v1918 = vld [vmem:[%s624 + $0x70] sm:$0xff]
          %v1919 = vld [vmem:[%s624 + $0x78] sm:$0xff]
          %v1920 = vld [vmem:[%s624 + $0x80] sm:$0x33]
          %v1921 = vld [vmem:[%s624 + $0x88] sm:$0x33]
          %v1922 = vld [vmem:[%s624 + $0x90] sm:$0x33]
          %v1923 = vld [vmem:[%s624 + $0x98] sm:$0x33]
          %v1924 = vld [vmem:[%s624 + $0xa0] sm:$0x33]
          %v1925 = vld [vmem:[%s624 + $0xa8] sm:$0x33]
          %v1926 = vld [vmem:[%s624 + $0xb0] sm:$0x33]
          %v1927 = vld [vmem:[%s624 + $0xb8] sm:$0x33]
          %v1928 = vld [vmem:[%s628] sm:$0xff]
          %v1929 = vld [vmem:[%s628 + $0x8] sm:$0xff]
          %v1932 = vlaneseq
          %v1933 = vshrl.u32 %v1932, 7
          %v1934 = vsub.s32 0, %v1933
          %v1935 = vrot.slane %v1928, %v1934
          %v1936 = vlaneseq
          %v1937 = vshrl.u32 %v1936, 7
          %v1938 = vsub.s32 1, %v1937
          %v1939 = vrot.slane %v1928, %v1938
          %v1940 = vlaneseq
          %v1941 = vshrl.u32 %v1940, 7
          %v1942 = vsub.s32 2, %v1941
          %v1943 = vrot.slane %v1928, %v1942
          %v1944 = vlaneseq
          %v1945 = vshrl.u32 %v1944, 7
          %v1946 = vsub.s32 3, %v1945
          %v1947 = vrot.slane %v1928, %v1946
          %v1948 = vlaneseq
          %v1949 = vshrl.u32 %v1948, 7
          %v1950 = vsub.s32 4, %v1949
          %v1951 = vrot.slane %v1928, %v1950
          %v1952 = vlaneseq
          %v1953 = vshrl.u32 %v1952, 7
          %v1954 = vsub.s32 5, %v1953
          %v1955 = vrot.slane %v1928, %v1954
          %v1956 = vlaneseq
          %v1957 = vshrl.u32 %v1956, 7
          %v1958 = vsub.s32 6, %v1957
          %v1959 = vrot.slane %v1928, %v1958
          %v1960 = vlaneseq
          %v1961 = vshrl.u32 %v1960, 7
          %v1962 = vsub.s32 7, %v1961
          %v1963 = vrot.slane %v1928, %v1962
          %v1964 = vlaneseq
          %v1965 = vshrl.u32 %v1964, 7
          %v1966 = vsub.s32 0, %v1965
          %v1967 = vrot.slane %v1929, %v1966
          %v1968 = vlaneseq
          %v1969 = vshrl.u32 %v1968, 7
          %v1970 = vsub.s32 1, %v1969
          %v1971 = vrot.slane %v1929, %v1970
          %v1972 = vlaneseq
          %v1973 = vshrl.u32 %v1972, 7
          %v1974 = vsub.s32 2, %v1973
          %v1975 = vrot.slane %v1929, %v1974
          %v1976 = vlaneseq
          %v1977 = vshrl.u32 %v1976, 7
          %v1978 = vsub.s32 3, %v1977
          %v1979 = vrot.slane %v1929, %v1978
          %v1980 = vlaneseq
          %v1981 = vshrl.u32 %v1980, 7
          %v1982 = vsub.s32 4, %v1981
          %v1983 = vrot.slane %v1929, %v1982
          %v1984 = vlaneseq
          %v1985 = vshrl.u32 %v1984, 7
          %v1986 = vsub.s32 5, %v1985
          %v1987 = vrot.slane %v1929, %v1986
          %v1988 = vlaneseq
          %v1989 = vshrl.u32 %v1988, 7
          %v1990 = vsub.s32 6, %v1989
          %v1991 = vrot.slane %v1929, %v1990
          %v1992 = vlaneseq
          %v1993 = vshrl.u32 %v1992, 7
          %v1994 = vsub.s32 7, %v1993
          %v1995 = vrot.slane %v1929, %v1994
          %v2036 = vunpack.c.l.b16 %v1904
          %v2037 = vunpack.c.h.b16 %v1904
          %v2038 = vunpack.c.l.b16 %v1905
          %v2039 = vunpack.c.h.b16 %v1905
          %v2040 = vunpack.c.l.b16 %v1906
          %v2041 = vunpack.c.h.b16 %v1906
          %v2042 = vunpack.c.l.b16 %v1907
          %v2043 = vunpack.c.h.b16 %v1907
          %v2044 = vunpack.c.l.b16 %v1908
          %v2045 = vunpack.c.h.b16 %v1908
          %v2046 = vunpack.c.l.b16 %v1909
          %v2047 = vunpack.c.h.b16 %v1909
          %v2048 = vunpack.c.l.b16 %v1910
          %v2049 = vunpack.c.h.b16 %v1910
          %v2050 = vunpack.c.l.b16 %v1911
          %v2051 = vunpack.c.h.b16 %v1911
          %v2052 = vunpack.c.l.b16 %v1912
          %v2053 = vunpack.c.h.b16 %v1912
          %v2054 = vunpack.c.l.b16 %v1913
          %v2055 = vunpack.c.h.b16 %v1913
          %v2056 = vunpack.c.l.b16 %v1914
          %v2057 = vunpack.c.h.b16 %v1914
          %v2058 = vunpack.c.l.b16 %v1915
          %v2059 = vunpack.c.h.b16 %v1915
          %v2060 = vunpack.c.l.b16 %v1916
          %v2061 = vunpack.c.h.b16 %v1916
          %v2062 = vunpack.c.l.b16 %v1917
          %v2063 = vunpack.c.h.b16 %v1917
          %v2064 = vunpack.c.l.b16 %v1918
          %v2065 = vunpack.c.h.b16 %v1918
          %v2066 = vunpack.c.l.b16 %v1919
          %v2067 = vunpack.c.h.b16 %v1919
          %v2068 = vunpack.c.l.b16 %v1920
          %v2069 = vunpack.c.h.b16 %v1920
          %v2070 = vunpack.c.l.b16 %v1921
          %v2071 = vunpack.c.h.b16 %v1921
          %v2072 = vunpack.c.l.b16 %v1922
          %v2073 = vunpack.c.h.b16 %v1922
          %v2074 = vunpack.c.l.b16 %v1923
          %v2075 = vunpack.c.h.b16 %v1923
          %v2076 = vunpack.c.l.b16 %v1924
          %v2077 = vunpack.c.h.b16 %v1924
          %v2078 = vunpack.c.l.b16 %v1925
          %v2079 = vunpack.c.h.b16 %v1925
          %v2080 = vunpack.c.l.b16 %v1926
          %v2081 = vunpack.c.h.b16 %v1926
          %v2082 = vunpack.c.l.b16 %v1927
          %v2083 = vunpack.c.h.b16 %v1927
          %v2084 = vpack.c.b16 %v2052, %v2036
          %v2085 = vpack.c.b16 %v2053, %v2037
          %v2086 = vpack.c.b16 %v2054, %v2038
          %v2087 = vpack.c.b16 %v2055, %v2039
          %v2088 = vpack.c.b16 %v2056, %v2040
          %v2089 = vpack.c.b16 %v2057, %v2041
          %v2090 = vpack.c.b16 %v2058, %v2042
          %v2091 = vpack.c.b16 %v2059, %v2043
          %v2092 = vpack.c.b16 %v2060, %v2044
          %v2093 = vpack.c.b16 %v2061, %v2045
          %v2094 = vpack.c.b16 %v2062, %v2046
          %v2095 = vpack.c.b16 %v2063, %v2047
          %v2096 = vpack.c.b16 %v2064, %v2048
          %v2097 = vpack.c.b16 %v2065, %v2049
          %v2098 = vpack.c.b16 %v2066, %v2050
          %v2099 = vpack.c.b16 %v2067, %v2051
          %v2100 = vpack.c.b16 %v2068, %v2068
          %v2101 = vpack.c.b16 %v2069, %v2069
          %v2102 = vpack.c.b16 %v2070, %v2070
          %v2103 = vpack.c.b16 %v2071, %v2071
          %v2104 = vpack.c.b16 %v2072, %v2072
          %v2105 = vpack.c.b16 %v2073, %v2073
          %v2106 = vpack.c.b16 %v2074, %v2074
          %v2107 = vpack.c.b16 %v2075, %v2075
          %v2108 = vpack.c.b16 %v2076, %v2076
          %v2109 = vpack.c.b16 %v2077, %v2077
          %v2110 = vpack.c.b16 %v2078, %v2078
          %v2111 = vpack.c.b16 %v2079, %v2079
          %v2112 = vpack.c.b16 %v2080, %v2080
          %v2113 = vpack.c.b16 %v2081, %v2081
          %v2114 = vpack.c.b16 %v2082, %v2082
          %v2115 = vpack.c.b16 %v2083, %v2083
          %v2133 = vsel %vm701, %v1903, 0
          %v2136 = vsel %vm705, %v2100, 0
          %v2139 = vsel %vm705, %v2101, 0
          %v2142 = vsel %vm705, %v2102, 0
          %v2145 = vsel %vm705, %v2103, 0
          %v2148 = vsel %vm705, %v2104, 0
          %v2151 = vsel %vm705, %v2105, 0
          %v2154 = vsel %vm705, %v2106, 0
          %v2157 = vsel %vm705, %v2107, 0
          %v2160 = vsel %vm705, %v2108, 0
          %v2163 = vsel %vm705, %v2109, 0
          %v2166 = vsel %vm705, %v2110, 0
          %v2169 = vsel %vm705, %v2111, 0
          %v2172 = vsel %vm705, %v2112, 0
          %v2175 = vsel %vm705, %v2113, 0
          %v2178 = vsel %vm705, %v2114, 0
          %v2181 = vsel %vm705, %v2115, 0
          %2183 = vmatprep.subr.bf16.mxu0 %v2085
          %2184 = vmatpush1.bf16.msra.mxu0 %v2084
          %2185 = vmatprep.subr.bf16.mxu0 %v2139
          %2186 = vmatpush1.bf16.msra.mxu0 %v2136
          %2187 = vmatprep.subr.bf16.mxu0 0
          %2188 = vmatpush1.bf16.msra.mxu0 0
          %2189 = vmatprep.subr.bf16.mxu0 0
          %2190 = vmatpush1.bf16.msra.mxu0 0
          %2191 = vmatprep.subr.bf16.mxu0 0
          %2192 = vmatpush1.bf16.msra.mxu0 0
          %2193 = vmatprep.subr.bf16.mxu0 0
          %2194 = vmatpush1.bf16.msra.mxu0 0
          %2195 = vmatprep.subr.bf16.mxu0 0
          %2196 = vmatpush1.bf16.msra.mxu0 0
          %2197 = vmatprep.subr.bf16.mxu0 0
          %2198 = vmatpush1.bf16.msra.mxu0 0
          %2199 = vmatprep.subr.bf16.mxu0 0
          %2200 = vmatpush1.bf16.msra.mxu0 0
          %2201 = vmatprep.subr.bf16.mxu0 0
          %2202 = vmatpush1.bf16.msra.mxu0 0
          %2203 = vmatprep.subr.bf16.mxu0 0
          %2204 = vmatpush1.bf16.msra.mxu0 0
          %2205 = vmatprep.subr.bf16.mxu0 0
          %2206 = vmatpush1.bf16.msra.mxu0 0
          %2207 = vmatprep.subr.bf16.mxu0 0
          %2208 = vmatpush1.bf16.msra.mxu0 0
          %2209 = vmatprep.subr.bf16.mxu0 0
          %2210 = vmatpush1.bf16.msra.mxu0 0
          %2211 = vmatprep.subr.bf16.mxu0 0
          %2212 = vmatpush1.bf16.msra.mxu0 0
          %2213 = vmatprep.subr.bf16.mxu0 0
          %2214 = vmatpush1.bf16.msra.mxu0 0
          %2215 = vmatprep.mubr.bf16.mxu0 0
          %2216 = vmatmul.mubr.bf16.gmra.mrb[0].mxu0 %v2133
          %v2217 = vpop.f32.mrb[0].mxu0
          %v2218 = vadd.f32 %v1935, %v2217
          %v2219 = vpop.f32.mrb[0].mxu0
          %v2220 = vadd.f32 %v1939, %v2219
          %v2221 = vpop.f32.mrb[0].mxu0
          %v2222 = vadd.f32 %v1935, %v2221
          %v2223 = vpop.f32.mrb[0].mxu0
          %v2224 = vadd.f32 %v1939, %v2223
          %2225 = vdwg.mxu0
          %2226 = vmatprep.subr.bf16.mxu0 %v2087
          %2227 = vmatpush1.bf16.msra.mxu0 %v2086
          %2228 = vmatprep.subr.bf16.mxu0 %v2145
          %2229 = vmatpush1.bf16.msra.mxu0 %v2142
          %2230 = vmatprep.subr.bf16.mxu0 0
          %2231 = vmatpush1.bf16.msra.mxu0 0
          %2232 = vmatprep.subr.bf16.mxu0 0
          %2233 = vmatpush1.bf16.msra.mxu0 0
          %2234 = vmatprep.subr.bf16.mxu0 0
          %2235 = vmatpush1.bf16.msra.mxu0 0
          %2236 = vmatprep.subr.bf16.mxu0 0
          %2237 = vmatpush1.bf16.msra.mxu0 0
          %2238 = vmatprep.subr.bf16.mxu0 0
          %2239 = vmatpush1.bf16.msra.mxu0 0
          %2240 = vmatprep.subr.bf16.mxu0 0
          %2241 = vmatpush1.bf16.msra.mxu0 0
          %2242 = vmatprep.subr.bf16.mxu0 0
          %2243 = vmatpush1.bf16.msra.mxu0 0
          %2244 = vmatprep.subr.bf16.mxu0 0
          %2245 = vmatpush1.bf16.msra.mxu0 0
          %2246 = vmatprep.subr.bf16.mxu0 0
          %2247 = vmatpush1.bf16.msra.mxu0 0
          %2248 = vmatprep.subr.bf16.mxu0 0
          %2249 = vmatpush1.bf16.msra.mxu0 0
          %2250 = vmatprep.subr.bf16.mxu0 0
          %2251 = vmatpush1.bf16.msra.mxu0 0
          %2252 = vmatprep.subr.bf16.mxu0 0
          %2253 = vmatpush1.bf16.msra.mxu0 0
          %2254 = vmatprep.subr.bf16.mxu0 0
          %2255 = vmatpush1.bf16.msra.mxu0 0
          %2256 = vmatprep.subr.bf16.mxu0 0
          %2257 = vmatpush1.bf16.msra.mxu0 0
          %2258 = vmatprep.mubr.bf16.mxu0 0
          %2259 = vmatmul.mubr.bf16.gmra.mrb[0].mxu0 %v2133
          %v2260 = vpop.f32.mrb[0].mxu0
          %v2261 = vadd.f32 %v1943, %v2260
          %v2262 = vpop.f32.mrb[0].mxu0
          %v2263 = vadd.f32 %v1947, %v2262
          %v2264 = vpop.f32.mrb[0].mxu0
          %v2265 = vadd.f32 %v1943, %v2264
          %v2266 = vpop.f32.mrb[0].mxu0
          %v2267 = vadd.f32 %v1947, %v2266
          %2268 = vdwg.mxu0
          %2269 = vmatprep.subr.bf16.mxu0 %v2089
          %2270 = vmatpush1.bf16.msra.mxu0 %v2088
          %2271 = vmatprep.subr.bf16.mxu0 %v2151
          %2272 = vmatpush1.bf16.msra.mxu0 %v2148
          %2273 = vmatprep.subr.bf16.mxu0 0
          %2274 = vmatpush1.bf16.msra.mxu0 0
          %2275 = vmatprep.subr.bf16.mxu0 0
          %2276 = vmatpush1.bf16.msra.mxu0 0
          %2277 = vmatprep.subr.bf16.mxu0 0
          %2278 = vmatpush1.bf16.msra.mxu0 0
          %2279 = vmatprep.subr.bf16.mxu0 0
          %2280 = vmatpush1.bf16.msra.mxu0 0
          %2281 = vmatprep.subr.bf16.mxu0 0
          %2282 = vmatpush1.bf16.msra.mxu0 0
          %2283 = vmatprep.subr.bf16.mxu0 0
          %2284 = vmatpush1.bf16.msra.mxu0 0
          %2285 = vmatprep.subr.bf16.mxu0 0
          %2286 = vmatpush1.bf16.msra.mxu0 0
          %2287 = vmatprep.subr.bf16.mxu0 0
          %2288 = vmatpush1.bf16.msra.mxu0 0
          %2289 = vmatprep.subr.bf16.mxu0 0
          %2290 = vmatpush1.bf16.msra.mxu0 0
          %2291 = vmatprep.subr.bf16.mxu0 0
          %2292 = vmatpush1.bf16.msra.mxu0 0
          %2293 = vmatprep.subr.bf16.mxu0 0
          %2294 = vmatpush1.bf16.msra.mxu0 0
          %2295 = vmatprep.subr.bf16.mxu0 0
          %2296 = vmatpush1.bf16.msra.mxu0 0
          %2297 = vmatprep.subr.bf16.mxu0 0
          %2298 = vmatpush1.bf16.msra.mxu0 0
          %2299 = vmatprep.subr.bf16.mxu0 0
          %2300 = vmatpush1.bf16.msra.mxu0 0
          %2301 = vmatprep.mubr.bf16.mxu0 0
          %2302 = vmatmul.mubr.bf16.gmra.mrb[0].mxu0 %v2133
          %v2303 = vpop.f32.mrb[0].mxu0
          %v2304 = vadd.f32 %v1951, %v2303
          %v2305 = vpop.f32.mrb[0].mxu0
          %v2306 = vadd.f32 %v1955, %v2305
          %v2307 = vpop.f32.mrb[0].mxu0
          %v2308 = vadd.f32 %v1951, %v2307
          %v2309 = vpop.f32.mrb[0].mxu0
          %v2310 = vadd.f32 %v1955, %v2309
          %2311 = vdwg.mxu0
          %2312 = vmatprep.subr.bf16.mxu0 %v2091
          %2313 = vmatpush1.bf16.msra.mxu0 %v2090
          %2314 = vmatprep.subr.bf16.mxu0 %v2157
          %2315 = vmatpush1.bf16.msra.mxu0 %v2154
          %2316 = vmatprep.subr.bf16.mxu0 0
          %2317 = vmatpush1.bf16.msra.mxu0 0
          %2318 = vmatprep.subr.bf16.mxu0 0
          %2319 = vmatpush1.bf16.msra.mxu0 0
          %2320 = vmatprep.subr.bf16.mxu0 0
          %2321 = vmatpush1.bf16.msra.mxu0 0
          %2322 = vmatprep.subr.bf16.mxu0 0
          %2323 = vmatpush1.bf16.msra.mxu0 0
          %2324 = vmatprep.subr.bf16.mxu0 0
          %2325 = vmatpush1.bf16.msra.mxu0 0
          %2326 = vmatprep.subr.bf16.mxu0 0
          %2327 = vmatpush1.bf16.msra.mxu0 0
          %2328 = vmatprep.subr.bf16.mxu0 0
          %2329 = vmatpush1.bf16.msra.mxu0 0
          %2330 = vmatprep.subr.bf16.mxu0 0
          %2331 = vmatpush1.bf16.msra.mxu0 0
          %2332 = vmatprep.subr.bf16.mxu0 0
          %2333 = vmatpush1.bf16.msra.mxu0 0
          %2334 = vmatprep.subr.bf16.mxu0 0
          %2335 = vmatpush1.bf16.msra.mxu0 0
          %2336 = vmatprep.subr.bf16.mxu0 0
          %2337 = vmatpush1.bf16.msra.mxu0 0
          %2338 = vmatprep.subr.bf16.mxu0 0
          %2339 = vmatpush1.bf16.msra.mxu0 0
          %2340 = vmatprep.subr.bf16.mxu0 0
          %2341 = vmatpush1.bf16.msra.mxu0 0
          %2342 = vmatprep.subr.bf16.mxu0 0
          %2343 = vmatpush1.bf16.msra.mxu0 0
          %2344 = vmatprep.mubr.bf16.mxu0 0
          %2345 = vmatmul.mubr.bf16.gmra.mrb[0].mxu0 %v2133
          %v2346 = vpop.f32.mrb[0].mxu0
          %v2347 = vadd.f32 %v1959, %v2346
          %v2348 = vpop.f32.mrb[0].mxu0
          %v2349 = vadd.f32 %v1963, %v2348
          %v2350 = vpop.f32.mrb[0].mxu0
          %v2351 = vadd.f32 %v1959, %v2350
          %v2352 = vpop.f32.mrb[0].mxu0
          %v2353 = vadd.f32 %v1963, %v2352
          %2354 = vdwg.mxu0
          %2355 = vmatprep.subr.bf16.mxu0 %v2093
          %2356 = vmatpush1.bf16.msra.mxu0 %v2092
          %2357 = vmatprep.subr.bf16.mxu0 %v2163
          %2358 = vmatpush1.bf16.msra.mxu0 %v2160
          %2359 = vmatprep.subr.bf16.mxu0 0
          %2360 = vmatpush1.bf16.msra.mxu0 0
          %2361 = vmatprep.subr.bf16.mxu0 0
          %2362 = vmatpush1.bf16.msra.mxu0 0
          %2363 = vmatprep.subr.bf16.mxu0 0
          %2364 = vmatpush1.bf16.msra.mxu0 0
          %2365 = vmatprep.subr.bf16.mxu0 0
          %2366 = vmatpush1.bf16.msra.mxu0 0
          %2367 = vmatprep.subr.bf16.mxu0 0
          %2368 = vmatpush1.bf16.msra.mxu0 0
          %2369 = vmatprep.subr.bf16.mxu0 0
          %2370 = vmatpush1.bf16.msra.mxu0 0
          %2371 = vmatprep.subr.bf16.mxu0 0
          %2372 = vmatpush1.bf16.msra.mxu0 0
          %2373 = vmatprep.subr.bf16.mxu0 0
          %2374 = vmatpush1.bf16.msra.mxu0 0
          %2375 = vmatprep.subr.bf16.mxu0 0
          %2376 = vmatpush1.bf16.msra.mxu0 0
          %2377 = vmatprep.subr.bf16.mxu0 0
          %2378 = vmatpush1.bf16.msra.mxu0 0
          %2379 = vmatprep.subr.bf16.mxu0 0
          %2380 = vmatpush1.bf16.msra.mxu0 0
          %2381 = vmatprep.subr.bf16.mxu0 0
          %2382 = vmatpush1.bf16.msra.mxu0 0
          %2383 = vmatprep.subr.bf16.mxu0 0
          %2384 = vmatpush1.bf16.msra.mxu0 0
          %2385 = vmatprep.subr.bf16.mxu0 0
          %2386 = vmatpush1.bf16.msra.mxu0 0
          %2387 = vmatprep.mubr.bf16.mxu0 0
          %2388 = vmatmul.mubr.bf16.gmra.mrb[0].mxu0 %v2133
          %v2389 = vpop.f32.mrb[0].mxu0
          %v2390 = vadd.f32 %v1967, %v2389
          %v2391 = vpop.f32.mrb[0].mxu0
          %v2392 = vadd.f32 %v1971, %v2391
          %v2393 = vpop.f32.mrb[0].mxu0
          %v2394 = vadd.f32 %v1967, %v2393
          %v2395 = vpop.f32.mrb[0].mxu0
          %v2396 = vadd.f32 %v1971, %v2395
          %2397 = vdwg.mxu0
          %2398 = vmatprep.subr.bf16.mxu0 %v2095
          %2399 = vmatpush1.bf16.msra.mxu0 %v2094
          %2400 = vmatprep.subr.bf16.mxu0 %v2169
          %2401 = vmatpush1.bf16.msra.mxu0 %v2166
          %2402 = vmatprep.subr.bf16.mxu0 0
          %2403 = vmatpush1.bf16.msra.mxu0 0
          %2404 = vmatprep.subr.bf16.mxu0 0
          %2405 = vmatpush1.bf16.msra.mxu0 0
          %2406 = vmatprep.subr.bf16.mxu0 0
          %2407 = vmatpush1.bf16.msra.mxu0 0
          %2408 = vmatprep.subr.bf16.mxu0 0
          %2409 = vmatpush1.bf16.msra.mxu0 0
          %2410 = vmatprep.subr.bf16.mxu0 0
          %2411 = vmatpush1.bf16.msra.mxu0 0
          %2412 = vmatprep.subr.bf16.mxu0 0
          %2413 = vmatpush1.bf16.msra.mxu0 0
          %2414 = vmatprep.subr.bf16.mxu0 0
          %2415 = vmatpush1.bf16.msra.mxu0 0
          %2416 = vmatprep.subr.bf16.mxu0 0
          %2417 = vmatpush1.bf16.msra.mxu0 0
          %2418 = vmatprep.subr.bf16.mxu0 0
          %2419 = vmatpush1.bf16.msra.mxu0 0
          %2420 = vmatprep.subr.bf16.mxu0 0
          %2421 = vmatpush1.bf16.msra.mxu0 0
          %2422 = vmatprep.subr.bf16.mxu0 0
          %2423 = vmatpush1.bf16.msra.mxu0 0
          %2424 = vmatprep.subr.bf16.mxu0 0
          %2425 = vmatpush1.bf16.msra.mxu0 0
          %2426 = vmatprep.subr.bf16.mxu0 0
          %2427 = vmatpush1.bf16.msra.mxu0 0
          %2428 = vmatprep.subr.bf16.mxu0 0
          %2429 = vmatpush1.bf16.msra.mxu0 0
          %2430 = vmatprep.mubr.bf16.mxu0 0
          %2431 = vmatmul.mubr.bf16.gmra.mrb[0].mxu0 %v2133
          %v2432 = vpop.f32.mrb[0].mxu0
          %v2433 = vadd.f32 %v1975, %v2432
          %v2434 = vpop.f32.mrb[0].mxu0
          %v2435 = vadd.f32 %v1979, %v2434
          %v2436 = vpop.f32.mrb[0].mxu0
          %v2437 = vadd.f32 %v1975, %v2436
          %v2438 = vpop.f32.mrb[0].mxu0
          %v2439 = vadd.f32 %v1979, %v2438
          %2440 = vdwg.mxu0
          %2441 = vmatprep.subr.bf16.mxu0 %v2097
          %2442 = vmatpush1.bf16.msra.mxu0 %v2096
          %2443 = vmatprep.subr.bf16.mxu0 %v2175
          %2444 = vmatpush1.bf16.msra.mxu0 %v2172
          %2445 = vmatprep.subr.bf16.mxu0 0
          %2446 = vmatpush1.bf16.msra.mxu0 0
          %2447 = vmatprep.subr.bf16.mxu0 0
          %2448 = vmatpush1.bf16.msra.mxu0 0
          %2449 = vmatprep.subr.bf16.mxu0 0
          %2450 = vmatpush1.bf16.msra.mxu0 0
          %2451 = vmatprep.subr.bf16.mxu0 0
          %2452 = vmatpush1.bf16.msra.mxu0 0
          %2453 = vmatprep.subr.bf16.mxu0 0
          %2454 = vmatpush1.bf16.msra.mxu0 0
          %2455 = vmatprep.subr.bf16.mxu0 0
          %2456 = vmatpush1.bf16.msra.mxu0 0
          %2457 = vmatprep.subr.bf16.mxu0 0
          %2458 = vmatpush1.bf16.msra.mxu0 0
          %2459 = vmatprep.subr.bf16.mxu0 0
          %2460 = vmatpush1.bf16.msra.mxu0 0
          %2461 = vmatprep.subr.bf16.mxu0 0
          %2462 = vmatpush1.bf16.msra.mxu0 0
          %2463 = vmatprep.subr.bf16.mxu0 0
          %2464 = vmatpush1.bf16.msra.mxu0 0
          %2465 = vmatprep.subr.bf16.mxu0 0
          %2466 = vmatpush1.bf16.msra.mxu0 0
          %2467 = vmatprep.subr.bf16.mxu0 0
          %2468 = vmatpush1.bf16.msra.mxu0 0
          %2469 = vmatprep.subr.bf16.mxu0 0
          %2470 = vmatpush1.bf16.msra.mxu0 0
          %2471 = vmatprep.subr.bf16.mxu0 0
          %2472 = vmatpush1.bf16.msra.mxu0 0
          %2473 = vmatprep.mubr.bf16.mxu0 0
          %2474 = vmatmul.mubr.bf16.gmra.mrb[0].mxu0 %v2133
          %v2475 = vpop.f32.mrb[0].mxu0
          %v2476 = vadd.f32 %v1983, %v2475
          %v2477 = vpop.f32.mrb[0].mxu0
          %v2478 = vadd.f32 %v1987, %v2477
          %v2479 = vpop.f32.mrb[0].mxu0
          %v2480 = vadd.f32 %v1983, %v2479
          %v2481 = vpop.f32.mrb[0].mxu0
          %v2482 = vadd.f32 %v1987, %v2481
          %2483 = vdwg.mxu0
          %2484 = vmatprep.subr.bf16.mxu0 %v2099
          %2485 = vmatpush1.bf16.msra.mxu0 %v2098
          %2486 = vmatprep.subr.bf16.mxu0 %v2181
          %2487 = vmatpush1.bf16.msra.mxu0 %v2178
          %2488 = vmatprep.subr.bf16.mxu0 0
          %2489 = vmatpush1.bf16.msra.mxu0 0
          %2490 = vmatprep.subr.bf16.mxu0 0
          %2491 = vmatpush1.bf16.msra.mxu0 0
          %2492 = vmatprep.subr.bf16.mxu0 0
          %2493 = vmatpush1.bf16.msra.mxu0 0
          %2494 = vmatprep.subr.bf16.mxu0 0
          %2495 = vmatpush1.bf16.msra.mxu0 0
          %2496 = vmatprep.subr.bf16.mxu0 0
          %2497 = vmatpush1.bf16.msra.mxu0 0
          %2498 = vmatprep.subr.bf16.mxu0 0
          %2499 = vmatpush1.bf16.msra.mxu0 0
          %2500 = vmatprep.subr.bf16.mxu0 0
          %2501 = vmatpush1.bf16.msra.mxu0 0
          %2502 = vmatprep.subr.bf16.mxu0 0
          %2503 = vmatpush1.bf16.msra.mxu0 0
          %2504 = vmatprep.subr.bf16.mxu0 0
          %2505 = vmatpush1.bf16.msra.mxu0 0
          %2506 = vmatprep.subr.bf16.mxu0 0
          %2507 = vmatpush1.bf16.msra.mxu0 0
          %2508 = vmatprep.subr.bf16.mxu0 0
          %2509 = vmatpush1.bf16.msra.mxu0 0
          %2510 = vmatprep.subr.bf16.mxu0 0
          %2511 = vmatpush1.bf16.msra.mxu0 0
          %2512 = vmatprep.subr.bf16.mxu0 0
          %2513 = vmatpush1.bf16.msra.mxu0 0
          %2514 = vmatprep.subr.bf16.mxu0 0
          %2515 = vmatpush1.bf16.msra.mxu0 0
          %2516 = vmatprep.mubr.bf16.mxu0 0
          %2517 = vmatmul.mubr.bf16.gmra.mrb[0].mxu0 %v2133
          %v2518 = vpop.f32.mrb[0].mxu0
          %v2519 = vadd.f32 %v1991, %v2518
          %v2520 = vpop.f32.mrb[0].mxu0
          %v2521 = vadd.f32 %v1995, %v2520
          %v2522 = vpop.f32.mrb[0].mxu0
          %v2523 = vadd.f32 %v1991, %v2522
          %v2524 = vpop.f32.mrb[0].mxu0
          %v2525 = vadd.f32 %v1995, %v2524
          %2526 = vdwg.mxu0
          %v2527 = vmax.f32 %v2218, 0.0
          %v2528 = vmax.f32 %v2220, 0.0
          %v2529 = vmax.f32 %v2261, 0.0
          %v2530 = vmax.f32 %v2263, 0.0
          %v2531 = vmax.f32 %v2304, 0.0
          %v2532 = vmax.f32 %v2306, 0.0
          %v2533 = vmax.f32 %v2347, 0.0
          %v2534 = vmax.f32 %v2349, 0.0
          %v2535 = vmax.f32 %v2390, 0.0
          %v2536 = vmax.f32 %v2392, 0.0
          %v2537 = vmax.f32 %v2433, 0.0
          %v2538 = vmax.f32 %v2435, 0.0
          %v2539 = vmax.f32 %v2476, 0.0
          %v2540 = vmax.f32 %v2478, 0.0
          %v2541 = vmax.f32 %v2519, 0.0
          %v2542 = vmax.f32 %v2521, 0.0
          %v2543 = vmax.f32 %v2222, 0.0
          %v2544 = vmax.f32 %v2224, 0.0
          %v2545 = vmax.f32 %v2265, 0.0
          %v2546 = vmax.f32 %v2267, 0.0
          %v2547 = vmax.f32 %v2308, 0.0
          %v2548 = vmax.f32 %v2310, 0.0
          %v2549 = vmax.f32 %v2351, 0.0
          %v2550 = vmax.f32 %v2353, 0.0
          %v2551 = vmax.f32 %v2394, 0.0
          %v2552 = vmax.f32 %v2396, 0.0
          %v2553 = vmax.f32 %v2437, 0.0
          %v2554 = vmax.f32 %v2439, 0.0
          %v2555 = vmax.f32 %v2480, 0.0
          %v2556 = vmax.f32 %v2482, 0.0
          %v2557 = vmax.f32 %v2523, 0.0
          %v2558 = vmax.f32 %v2525, 0.0
          %v2559 = vpack.c.bf16 %v2543, %v2527
          %v2560 = vpack.c.bf16 %v2544, %v2528
          %v2561 = vpack.c.bf16 %v2545, %v2529
          %v2562 = vpack.c.bf16 %v2546, %v2530
          %v2563 = vpack.c.bf16 %v2547, %v2531
          %v2564 = vpack.c.bf16 %v2548, %v2532
          %v2565 = vpack.c.bf16 %v2549, %v2533
          %v2566 = vpack.c.bf16 %v2550, %v2534
          %v2567 = vpack.c.bf16 %v2551, %v2535
          %v2568 = vpack.c.bf16 %v2552, %v2536
          %v2569 = vpack.c.bf16 %v2553, %v2537
          %v2570 = vpack.c.bf16 %v2554, %v2538
          %v2571 = vpack.c.bf16 %v2555, %v2539
          %v2572 = vpack.c.bf16 %v2556, %v2540
          %v2573 = vpack.c.bf16 %v2557, %v2541
          %v2574 = vpack.c.bf16 %v2558, %v2542
          %v2575 = vld [vmem:[%s633] sm:$0xf]
          %v2576 = vld [vmem:[%s633 + $0x4] sm:$0xf]
          %v2577 = vld [vmem:[%s633 + $0x8] sm:$0xf]
          %v2578 = vld [vmem:[%s633 + $0xc] sm:$0xf]
          %v2579 = vld [vmem:[%s633 + $0x10] sm:$0xf]
          %v2580 = vld [vmem:[%s633 + $0x14] sm:$0xf]
          %v2581 = vld [vmem:[%s633 + $0x18] sm:$0xf]
          %v2582 = vld [vmem:[%s633 + $0x1c] sm:$0xf]
          %v2583 = vld [vmem:[%s633 + $0x20] sm:$0xf]
          %v2584 = vld [vmem:[%s633 + $0x24] sm:$0xf]
          %v2585 = vld [vmem:[%s633 + $0x28] sm:$0xf]
          %v2586 = vld [vmem:[%s633 + $0x2c] sm:$0xf]
          %v2587 = vld [vmem:[%s633 + $0x30] sm:$0xf]
          %v2588 = vld [vmem:[%s633 + $0x34] sm:$0xf]
          %v2589 = vld [vmem:[%s633 + $0x38] sm:$0xf]
          %v2590 = vld [vmem:[%s633 + $0x3c] sm:$0xf]
          %v2591 = vld [vmem:[%s633 + $0x40] sm:$0xf]
          %v2592 = vld [vmem:[%s633 + $0x44] sm:$0xf]
          %v2593 = vld [vmem:[%s633 + $0x48] sm:$0xf]
          %v2594 = vld [vmem:[%s633 + $0x4c] sm:$0xf]
          %v2595 = vld [vmem:[%s633 + $0x50] sm:$0xf]
          %v2596 = vld [vmem:[%s633 + $0x54] sm:$0xf]
          %v2597 = vld [vmem:[%s633 + $0x58] sm:$0xf]
          %v2598 = vld [vmem:[%s633 + $0x5c] sm:$0xf]
          %v2599 = vld [vmem:[%s633 + $0x60] sm:$0xf]
          %v2600 = vld [vmem:[%s633 + $0x64] sm:$0xf]
          %v2601 = vld [vmem:[%s633 + $0x68] sm:$0xf]
          %v2602 = vld [vmem:[%s633 + $0x6c] sm:$0xf]
          %v2603 = vld [vmem:[%s633 + $0x70] sm:$0xf]
          %v2604 = vld [vmem:[%s633 + $0x74] sm:$0xf]
          %v2605 = vld [vmem:[%s633 + $0x78] sm:$0xf]
          %v2606 = vld [vmem:[%s633 + $0x7c] sm:$0xf]
          %v2607 = vld [vmem:[%s633 + $0x80] sm:$0xf]
          %v2608 = vld [vmem:[%s633 + $0x84] sm:$0xf]
          %v2609 = vld [vmem:[%s633 + $0x88] sm:$0xf]
          %v2610 = vld [vmem:[%s633 + $0x8c] sm:$0xf]
          %v2611 = vld [vmem:[%s633 + $0x90] sm:$0xf]
          %v2612 = vld [vmem:[%s633 + $0x94] sm:$0xf]
          %v2613 = vld [vmem:[%s633 + $0x98] sm:$0xf]
          %v2614 = vld [vmem:[%s633 + $0x9c] sm:$0xf]
          %v2615 = vld [vmem:[%s633 + $0xa0] sm:$0xf]
          %v2616 = vld [vmem:[%s633 + $0xa4] sm:$0xf]
          %v2617 = vld [vmem:[%s633 + $0xa8] sm:$0xf]
          %v2618 = vld [vmem:[%s633 + $0xac] sm:$0xf]
          %v2619 = vld [vmem:[%s633 + $0xb0] sm:$0xf]
          %v2620 = vld [vmem:[%s633 + $0xb4] sm:$0xf]
          %v2621 = vld [vmem:[%s633 + $0xb8] sm:$0xf]
          %v2622 = vld [vmem:[%s633 + $0xbc] sm:$0xf]
          %v2623 = vld [vmem:[%s633 + $0xc0] sm:$0xf]
          %v2624 = vld [vmem:[%s633 + $0xc4] sm:$0xf]
          %v2625 = vld [vmem:[%s633 + $0xc8] sm:$0xf]
          %v2626 = vld [vmem:[%s633 + $0xcc] sm:$0xf]
          %v2627 = vld [vmem:[%s633 + $0xd0] sm:$0xf]
          %v2628 = vld [vmem:[%s633 + $0xd4] sm:$0xf]
          %v2629 = vld [vmem:[%s633 + $0xd8] sm:$0xf]
          %v2630 = vld [vmem:[%s633 + $0xdc] sm:$0xf]
          %v2631 = vld [vmem:[%s633 + $0xe0] sm:$0xf]
          %v2632 = vld [vmem:[%s633 + $0xe4] sm:$0xf]
          %v2633 = vld [vmem:[%s633 + $0xe8] sm:$0xf]
          %v2634 = vld [vmem:[%s633 + $0xec] sm:$0xf]
          %v2635 = vld [vmem:[%s633 + $0xf0] sm:$0xf]
          %v2636 = vld [vmem:[%s633 + $0xf4] sm:$0xf]
          %v2637 = vld [vmem:[%s633 + $0xf8] sm:$0xf]
          %v2638 = vld [vmem:[%s633 + $0xfc] sm:$0xf]
          %v2639 = vld [vmem:[%s633 + $0x100] sm:$0xf]
          %v2640 = vld [vmem:[%s633 + $0x104] sm:$0xf]
          %v2641 = vld [vmem:[%s633 + $0x108] sm:$0xf]
          %v2642 = vld [vmem:[%s633 + $0x10c] sm:$0xf]
          %v2643 = vld [vmem:[%s633 + $0x110] sm:$0xf]
          %v2644 = vld [vmem:[%s633 + $0x114] sm:$0xf]
          %v2645 = vld [vmem:[%s633 + $0x118] sm:$0xf]
          %v2646 = vld [vmem:[%s633 + $0x11c] sm:$0xf]
          %v2647 = vld [vmem:[%s633 + $0x120] sm:$0xf]
          %v2648 = vld [vmem:[%s633 + $0x124] sm:$0xf]
          %v2649 = vld [vmem:[%s633 + $0x128] sm:$0xf]
          %v2650 = vld [vmem:[%s633 + $0x12c] sm:$0xf]
          %v2651 = vld [vmem:[%s633 + $0x130] sm:$0xf]
          %v2652 = vld [vmem:[%s633 + $0x134] sm:$0xf]
          %v2653 = vld [vmem:[%s633 + $0x138] sm:$0xf]
          %v2654 = vld [vmem:[%s633 + $0x13c] sm:$0xf]
          %v2655 = vld [vmem:[%s633 + $0x140] sm:$0xf]
          %v2656 = vld [vmem:[%s633 + $0x144] sm:$0xf]
          %v2657 = vld [vmem:[%s633 + $0x148] sm:$0xf]
          %v2658 = vld [vmem:[%s633 + $0x14c] sm:$0xf]
          %v2659 = vld [vmem:[%s633 + $0x150] sm:$0xf]
          %v2660 = vld [vmem:[%s633 + $0x154] sm:$0xf]
          %v2661 = vld [vmem:[%s633 + $0x158] sm:$0xf]
          %v2662 = vld [vmem:[%s633 + $0x15c] sm:$0xf]
          %v2663 = vld [vmem:[%s633 + $0x160] sm:$0xf]
          %v2664 = vld [vmem:[%s633 + $0x164] sm:$0xf]
          %v2665 = vld [vmem:[%s633 + $0x168] sm:$0xf]
          %v2666 = vld [vmem:[%s633 + $0x16c] sm:$0xf]
          %v2667 = vld [vmem:[%s633 + $0x170] sm:$0xf]
          %v2668 = vld [vmem:[%s633 + $0x174] sm:$0xf]
          %v2669 = vld [vmem:[%s633 + $0x178] sm:$0xf]
          %v2670 = vld [vmem:[%s633 + $0x17c] sm:$0xf]
          %v2671 = vld [vmem:[%s633 + $0x180] sm:$0xf]
          %v2672 = vld [vmem:[%s633 + $0x184] sm:$0xf]
          %v2673 = vld [vmem:[%s633 + $0x188] sm:$0xf]
          %v2674 = vld [vmem:[%s633 + $0x18c] sm:$0xf]
          %v2675 = vld [vmem:[%s633 + $0x190] sm:$0xf]
          %v2676 = vld [vmem:[%s633 + $0x194] sm:$0xf]
          %v2677 = vld [vmem:[%s633 + $0x198] sm:$0xf]
          %v2678 = vld [vmem:[%s633 + $0x19c] sm:$0xf]
          %v2679 = vld [vmem:[%s633 + $0x1a0] sm:$0xf]
          %v2680 = vld [vmem:[%s633 + $0x1a4] sm:$0xf]
          %v2681 = vld [vmem:[%s633 + $0x1a8] sm:$0xf]
          %v2682 = vld [vmem:[%s633 + $0x1ac] sm:$0xf]
          %v2683 = vld [vmem:[%s633 + $0x1b0] sm:$0xf]
          %v2684 = vld [vmem:[%s633 + $0x1b4] sm:$0xf]
          %v2685 = vld [vmem:[%s633 + $0x1b8] sm:$0xf]
          %v2686 = vld [vmem:[%s633 + $0x1bc] sm:$0xf]
          %v2687 = vld [vmem:[%s633 + $0x1c0] sm:$0xf]
          %v2688 = vld [vmem:[%s633 + $0x1c4] sm:$0xf]
          %v2689 = vld [vmem:[%s633 + $0x1c8] sm:$0xf]
          %v2690 = vld [vmem:[%s633 + $0x1cc] sm:$0xf]
          %v2691 = vld [vmem:[%s633 + $0x1d0] sm:$0xf]
          %v2692 = vld [vmem:[%s633 + $0x1d4] sm:$0xf]
          %v2693 = vld [vmem:[%s633 + $0x1d8] sm:$0xf]
          %v2694 = vld [vmem:[%s633 + $0x1dc] sm:$0xf]
          %v2695 = vld [vmem:[%s633 + $0x1e0] sm:$0xf]
          %v2696 = vld [vmem:[%s633 + $0x1e4] sm:$0xf]
          %v2697 = vld [vmem:[%s633 + $0x1e8] sm:$0xf]
          %v2698 = vld [vmem:[%s633 + $0x1ec] sm:$0xf]
          %v2699 = vld [vmem:[%s633 + $0x1f0] sm:$0xf]
          %v2700 = vld [vmem:[%s633 + $0x1f4] sm:$0xf]
          %v2701 = vld [vmem:[%s633 + $0x1f8] sm:$0xf]
          %v2702 = vld [vmem:[%s633 + $0x1fc] sm:$0xf]
          %v2703 = vld [vmem:[%s633 + $0x200] sm:$0xf]
          %v2704 = vld [vmem:[%s633 + $0x204] sm:$0xf]
          %v2705 = vld [vmem:[%s633 + $0x208] sm:$0xf]
          %v2706 = vld [vmem:[%s633 + $0x20c] sm:$0xf]
          %v2707 = vld [vmem:[%s633 + $0x210] sm:$0xf]
          %v2708 = vld [vmem:[%s633 + $0x214] sm:$0xf]
          %v2709 = vld [vmem:[%s633 + $0x218] sm:$0xf]
          %v2710 = vld [vmem:[%s633 + $0x21c] sm:$0xf]
          %v2711 = vld [vmem:[%s633 + $0x220] sm:$0xf]
          %v2712 = vld [vmem:[%s633 + $0x224] sm:$0xf]
          %v2713 = vld [vmem:[%s633 + $0x228] sm:$0xf]
          %v2714 = vld [vmem:[%s633 + $0x22c] sm:$0xf]
          %v2715 = vld [vmem:[%s633 + $0x230] sm:$0xf]
          %v2716 = vld [vmem:[%s633 + $0x234] sm:$0xf]
          %v2717 = vld [vmem:[%s633 + $0x238] sm:$0xf]
          %v2718 = vld [vmem:[%s633 + $0x23c] sm:$0xf]
          %v2719 = vld [vmem:[%s633 + $0x240] sm:$0xf]
          %v2720 = vld [vmem:[%s633 + $0x244] sm:$0xf]
          %v2721 = vld [vmem:[%s633 + $0x248] sm:$0xf]
          %v2722 = vld [vmem:[%s633 + $0x24c] sm:$0xf]
          %v2723 = vld [vmem:[%s633 + $0x250] sm:$0xf]
          %v2724 = vld [vmem:[%s633 + $0x254] sm:$0xf]
          %v2725 = vld [vmem:[%s633 + $0x258] sm:$0xf]
          %v2726 = vld [vmem:[%s633 + $0x25c] sm:$0xf]
          %v2727 = vld [vmem:[%s633 + $0x260] sm:$0xf]
          %v2728 = vld [vmem:[%s633 + $0x264] sm:$0xf]
          %v2729 = vld [vmem:[%s633 + $0x268] sm:$0xf]
          %v2730 = vld [vmem:[%s633 + $0x26c] sm:$0xf]
          %v2731 = vld [vmem:[%s633 + $0x270] sm:$0xf]
          %v2732 = vld [vmem:[%s633 + $0x274] sm:$0xf]
          %v2733 = vld [vmem:[%s633 + $0x278] sm:$0xf]
          %v2734 = vld [vmem:[%s633 + $0x27c] sm:$0xf]
          %v2735 = vld [vmem:[%s633 + $0x280] sm:$0xf]
          %v2736 = vld [vmem:[%s633 + $0x284] sm:$0xf]
          %v2737 = vld [vmem:[%s633 + $0x288] sm:$0xf]
          %v2738 = vld [vmem:[%s633 + $0x28c] sm:$0xf]
          %v2739 = vld [vmem:[%s633 + $0x290] sm:$0xf]
          %v2740 = vld [vmem:[%s633 + $0x294] sm:$0xf]
          %v2741 = vld [vmem:[%s633 + $0x298] sm:$0xf]
          %v2742 = vld [vmem:[%s633 + $0x29c] sm:$0xf]
          %v2743 = vld [vmem:[%s633 + $0x2a0] sm:$0xf]
          %v2744 = vld [vmem:[%s633 + $0x2a4] sm:$0xf]
          %v2745 = vld [vmem:[%s633 + $0x2a8] sm:$0xf]
          %v2746 = vld [vmem:[%s633 + $0x2ac] sm:$0xf]
          %v2747 = vld [vmem:[%s633 + $0x2b0] sm:$0xf]
          %v2748 = vld [vmem:[%s633 + $0x2b4] sm:$0xf]
          %v2749 = vld [vmem:[%s633 + $0x2b8] sm:$0xf]
          %v2750 = vld [vmem:[%s633 + $0x2bc] sm:$0xf]
          %v2751 = vld [vmem:[%s633 + $0x2c0] sm:$0xf]
          %v2752 = vld [vmem:[%s633 + $0x2c4] sm:$0xf]
          %v2753 = vld [vmem:[%s633 + $0x2c8] sm:$0xf]
          %v2754 = vld [vmem:[%s633 + $0x2cc] sm:$0xf]
          %v2755 = vld [vmem:[%s633 + $0x2d0] sm:$0xf]
          %v2756 = vld [vmem:[%s633 + $0x2d4] sm:$0xf]
          %v2757 = vld [vmem:[%s633 + $0x2d8] sm:$0xf]
          %v2758 = vld [vmem:[%s633 + $0x2dc] sm:$0xf]
          %v2759 = vld [vmem:[%s633 + $0x2e0] sm:$0xf]
          %v2760 = vld [vmem:[%s633 + $0x2e4] sm:$0xf]
          %v2761 = vld [vmem:[%s633 + $0x2e8] sm:$0xf]
          %v2762 = vld [vmem:[%s633 + $0x2ec] sm:$0xf]
          %v2763 = vld [vmem:[%s633 + $0x2f0] sm:$0xf]
          %v2764 = vld [vmem:[%s633 + $0x2f4] sm:$0xf]
          %v2765 = vld [vmem:[%s633 + $0x2f8] sm:$0xf]
          %v2766 = vld [vmem:[%s633 + $0x2fc] sm:$0xf]
          %v2767 = vld [vmem:[%s633 + $0x300] sm:$0xf]
          %v2768 = vld [vmem:[%s633 + $0x304] sm:$0xf]
          %v2769 = vld [vmem:[%s633 + $0x308] sm:$0xf]
          %v2770 = vld [vmem:[%s633 + $0x30c] sm:$0xf]
          %v2771 = vld [vmem:[%s633 + $0x310] sm:$0xf]
          %v2772 = vld [vmem:[%s633 + $0x314] sm:$0xf]
          %v2773 = vld [vmem:[%s633 + $0x318] sm:$0xf]
          %v2774 = vld [vmem:[%s633 + $0x31c] sm:$0xf]
          %v2775 = vld [vmem:[%s633 + $0x320] sm:$0xf]
          %v2776 = vld [vmem:[%s633 + $0x324] sm:$0xf]
          %v2777 = vld [vmem:[%s633 + $0x328] sm:$0xf]
          %v2778 = vld [vmem:[%s633 + $0x32c] sm:$0xf]
          %v2779 = vld [vmem:[%s633 + $0x330] sm:$0xf]
          %v2780 = vld [vmem:[%s633 + $0x334] sm:$0xf]
          %v2781 = vld [vmem:[%s633 + $0x338] sm:$0xf]
          %v2782 = vld [vmem:[%s633 + $0x33c] sm:$0xf]
          %v2783 = vld [vmem:[%s633 + $0x340] sm:$0xf]
          %v2784 = vld [vmem:[%s633 + $0x344] sm:$0xf]
          %v2785 = vld [vmem:[%s633 + $0x348] sm:$0xf]
          %v2786 = vld [vmem:[%s633 + $0x34c] sm:$0xf]
          %v2787 = vld [vmem:[%s633 + $0x350] sm:$0xf]
          %v2788 = vld [vmem:[%s633 + $0x354] sm:$0xf]
          %v2789 = vld [vmem:[%s633 + $0x358] sm:$0xf]
          %v2790 = vld [vmem:[%s633 + $0x35c] sm:$0xf]
          %v2791 = vld [vmem:[%s633 + $0x360] sm:$0xf]
          %v2792 = vld [vmem:[%s633 + $0x364] sm:$0xf]
          %v2793 = vld [vmem:[%s633 + $0x368] sm:$0xf]
          %v2794 = vld [vmem:[%s633 + $0x36c] sm:$0xf]
          %v2795 = vld [vmem:[%s633 + $0x370] sm:$0xf]
          %v2796 = vld [vmem:[%s633 + $0x374] sm:$0xf]
          %v2797 = vld [vmem:[%s633 + $0x378] sm:$0xf]
          %v2798 = vld [vmem:[%s633 + $0x37c] sm:$0xf]
          %v2799 = vld [vmem:[%s633 + $0x380] sm:$0xf]
          %v2800 = vld [vmem:[%s633 + $0x384] sm:$0xf]
          %v2801 = vld [vmem:[%s633 + $0x388] sm:$0xf]
          %v2802 = vld [vmem:[%s633 + $0x38c] sm:$0xf]
          %v2803 = vld [vmem:[%s633 + $0x390] sm:$0xf]
          %v2804 = vld [vmem:[%s633 + $0x394] sm:$0xf]
          %v2805 = vld [vmem:[%s633 + $0x398] sm:$0xf]
          %v2806 = vld [vmem:[%s633 + $0x39c] sm:$0xf]
          %v2807 = vld [vmem:[%s633 + $0x3a0] sm:$0xf]
          %v2808 = vld [vmem:[%s633 + $0x3a4] sm:$0xf]
          %v2809 = vld [vmem:[%s633 + $0x3a8] sm:$0xf]
          %v2810 = vld [vmem:[%s633 + $0x3ac] sm:$0xf]
          %v2811 = vld [vmem:[%s633 + $0x3b0] sm:$0xf]
          %v2812 = vld [vmem:[%s633 + $0x3b4] sm:$0xf]
          %v2813 = vld [vmem:[%s633 + $0x3b8] sm:$0xf]
          %v2814 = vld [vmem:[%s633 + $0x3bc] sm:$0xf]
          %v2815 = vld [vmem:[%s633 + $0x3c0] sm:$0xf]
          %v2816 = vld [vmem:[%s633 + $0x3c4] sm:$0xf]
          %v2817 = vld [vmem:[%s633 + $0x3c8] sm:$0xf]
          %v2818 = vld [vmem:[%s633 + $0x3cc] sm:$0xf]
          %v2819 = vld [vmem:[%s633 + $0x3d0] sm:$0xf]
          %v2820 = vld [vmem:[%s633 + $0x3d4] sm:$0xf]
          %v2821 = vld [vmem:[%s633 + $0x3d8] sm:$0xf]
          %v2822 = vld [vmem:[%s633 + $0x3dc] sm:$0xf]
          %v2823 = vld [vmem:[%s633 + $0x3e0] sm:$0xf]
          %v2824 = vld [vmem:[%s633 + $0x3e4] sm:$0xf]
          %v2825 = vld [vmem:[%s633 + $0x3e8] sm:$0xf]
          %v2826 = vld [vmem:[%s633 + $0x3ec] sm:$0xf]
          %v2827 = vld [vmem:[%s633 + $0x3f0] sm:$0xf]
          %v2828 = vld [vmem:[%s633 + $0x3f4] sm:$0xf]
          %v2829 = vld [vmem:[%s633 + $0x3f8] sm:$0xf]
          %v2830 = vld [vmem:[%s633 + $0x3fc] sm:$0xf]
          %v2831 = vld [vmem:[%s636] sm:$0x1]
          %v2833 = vlaneseq
          %v2834 = vshrl.u32 %v2833, 7
          %v2835 = vsub.s32 0, %v2834
          %v2836 = vrot.slane %v2831, %v2835
          %v3094 = vunpack.c.l.b16 %v2575
          %v3095 = vunpack.c.l.b16 %v2576
          %v3096 = vunpack.c.l.b16 %v2577
          %v3097 = vunpack.c.l.b16 %v2578
          %v3098 = vunpack.c.l.b16 %v2579
          %v3099 = vunpack.c.l.b16 %v2580
          %v3100 = vunpack.c.l.b16 %v2581
          %v3101 = vunpack.c.l.b16 %v2582
          %v3102 = vunpack.c.l.b16 %v2583
          %v3103 = vunpack.c.l.b16 %v2584
          %v3104 = vunpack.c.l.b16 %v2585
          %v3105 = vunpack.c.l.b16 %v2586
          %v3106 = vunpack.c.l.b16 %v2587
          %v3107 = vunpack.c.l.b16 %v2588
          %v3108 = vunpack.c.l.b16 %v2589
          %v3109 = vunpack.c.l.b16 %v2590
          %v3110 = vunpack.c.l.b16 %v2591
          %v3111 = vunpack.c.l.b16 %v2592
          %v3112 = vunpack.c.l.b16 %v2593
          %v3113 = vunpack.c.l.b16 %v2594
          %v3114 = vunpack.c.l.b16 %v2595
          %v3115 = vunpack.c.l.b16 %v2596
          %v3116 = vunpack.c.l.b16 %v2597
          %v3117 = vunpack.c.l.b16 %v2598
          %v3118 = vunpack.c.l.b16 %v2599
          %v3119 = vunpack.c.l.b16 %v2600
          %v3120 = vunpack.c.l.b16 %v2601
          %v3121 = vunpack.c.l.b16 %v2602
          %v3122 = vunpack.c.l.b16 %v2603
          %v3123 = vunpack.c.l.b16 %v2604
          %v3124 = vunpack.c.l.b16 %v2605
          %v3125 = vunpack.c.l.b16 %v2606
          %v3126 = vunpack.c.l.b16 %v2607
          %v3127 = vunpack.c.l.b16 %v2608
          %v3128 = vunpack.c.l.b16 %v2609
          %v3129 = vunpack.c.l.b16 %v2610
          %v3130 = vunpack.c.l.b16 %v2611
          %v3131 = vunpack.c.l.b16 %v2612
          %v3132 = vunpack.c.l.b16 %v2613
          %v3133 = vunpack.c.l.b16 %v2614
          %v3134 = vunpack.c.l.b16 %v2615
          %v3135 = vunpack.c.l.b16 %v2616
          %v3136 = vunpack.c.l.b16 %v2617
          %v3137 = vunpack.c.l.b16 %v2618
          %v3138 = vunpack.c.l.b16 %v2619
          %v3139 = vunpack.c.l.b16 %v2620
          %v3140 = vunpack.c.l.b16 %v2621
          %v3141 = vunpack.c.l.b16 %v2622
          %v3142 = vunpack.c.l.b16 %v2623
          %v3143 = vunpack.c.l.b16 %v2624
          %v3144 = vunpack.c.l.b16 %v2625
          %v3145 = vunpack.c.l.b16 %v2626
          %v3146 = vunpack.c.l.b16 %v2627
          %v3147 = vunpack.c.l.b16 %v2628
          %v3148 = vunpack.c.l.b16 %v2629
          %v3149 = vunpack.c.l.b16 %v2630
          %v3150 = vunpack.c.l.b16 %v2631
          %v3151 = vunpack.c.l.b16 %v2632
          %v3152 = vunpack.c.l.b16 %v2633
          %v3153 = vunpack.c.l.b16 %v2634
          %v3154 = vunpack.c.l.b16 %v2635
          %v3155 = vunpack.c.l.b16 %v2636
          %v3156 = vunpack.c.l.b16 %v2637
          %v3157 = vunpack.c.l.b16 %v2638
          %v3158 = vunpack.c.l.b16 %v2639
          %v3159 = vunpack.c.l.b16 %v2640
          %v3160 = vunpack.c.l.b16 %v2641
          %v3161 = vunpack.c.l.b16 %v2642
          %v3162 = vunpack.c.l.b16 %v2643
          %v3163 = vunpack.c.l.b16 %v2644
          %v3164 = vunpack.c.l.b16 %v2645
          %v3165 = vunpack.c.l.b16 %v2646
          %v3166 = vunpack.c.l.b16 %v2647
          %v3167 = vunpack.c.l.b16 %v2648
          %v3168 = vunpack.c.l.b16 %v2649
          %v3169 = vunpack.c.l.b16 %v2650
          %v3170 = vunpack.c.l.b16 %v2651
          %v3171 = vunpack.c.l.b16 %v2652
          %v3172 = vunpack.c.l.b16 %v2653
          %v3173 = vunpack.c.l.b16 %v2654
          %v3174 = vunpack.c.l.b16 %v2655
          %v3175 = vunpack.c.l.b16 %v2656
          %v3176 = vunpack.c.l.b16 %v2657
          %v3177 = vunpack.c.l.b16 %v2658
          %v3178 = vunpack.c.l.b16 %v2659
          %v3179 = vunpack.c.l.b16 %v2660
          %v3180 = vunpack.c.l.b16 %v2661
          %v3181 = vunpack.c.l.b16 %v2662
          %v3182 = vunpack.c.l.b16 %v2663
          %v3183 = vunpack.c.l.b16 %v2664
          %v3184 = vunpack.c.l.b16 %v2665
          %v3185 = vunpack.c.l.b16 %v2666
          %v3186 = vunpack.c.l.b16 %v2667
          %v3187 = vunpack.c.l.b16 %v2668
          %v3188 = vunpack.c.l.b16 %v2669
          %v3189 = vunpack.c.l.b16 %v2670
          %v3190 = vunpack.c.l.b16 %v2671
          %v3191 = vunpack.c.l.b16 %v2672
          %v3192 = vunpack.c.l.b16 %v2673
          %v3193 = vunpack.c.l.b16 %v2674
          %v3194 = vunpack.c.l.b16 %v2675
          %v3195 = vunpack.c.l.b16 %v2676
          %v3196 = vunpack.c.l.b16 %v2677
          %v3197 = vunpack.c.l.b16 %v2678
          %v3198 = vunpack.c.l.b16 %v2679
          %v3199 = vunpack.c.l.b16 %v2680
          %v3200 = vunpack.c.l.b16 %v2681
          %v3201 = vunpack.c.l.b16 %v2682
          %v3202 = vunpack.c.l.b16 %v2683
          %v3203 = vunpack.c.l.b16 %v2684
          %v3204 = vunpack.c.l.b16 %v2685
          %v3205 = vunpack.c.l.b16 %v2686
          %v3206 = vunpack.c.l.b16 %v2687
          %v3207 = vunpack.c.l.b16 %v2688
          %v3208 = vunpack.c.l.b16 %v2689
          %v3209 = vunpack.c.l.b16 %v2690
          %v3210 = vunpack.c.l.b16 %v2691
          %v3211 = vunpack.c.l.b16 %v2692
          %v3212 = vunpack.c.l.b16 %v2693
          %v3213 = vunpack.c.l.b16 %v2694
          %v3214 = vunpack.c.l.b16 %v2695
          %v3215 = vunpack.c.l.b16 %v2696
          %v3216 = vunpack.c.l.b16 %v2697
          %v3217 = vunpack.c.l.b16 %v2698
          %v3218 = vunpack.c.l.b16 %v2699
          %v3219 = vunpack.c.l.b16 %v2700
          %v3220 = vunpack.c.l.b16 %v2701
          %v3221 = vunpack.c.l.b16 %v2702
          %v3222 = vunpack.c.l.b16 %v2703
          %v3223 = vunpack.c.l.b16 %v2704
          %v3224 = vunpack.c.l.b16 %v2705
          %v3225 = vunpack.c.l.b16 %v2706
          %v3226 = vunpack.c.l.b16 %v2707
          %v3227 = vunpack.c.l.b16 %v2708
          %v3228 = vunpack.c.l.b16 %v2709
          %v3229 = vunpack.c.l.b16 %v2710
          %v3230 = vunpack.c.l.b16 %v2711
          %v3231 = vunpack.c.l.b16 %v2712
          %v3232 = vunpack.c.l.b16 %v2713
          %v3233 = vunpack.c.l.b16 %v2714
          %v3234 = vunpack.c.l.b16 %v2715
          %v3235 = vunpack.c.l.b16 %v2716
          %v3236 = vunpack.c.l.b16 %v2717
          %v3237 = vunpack.c.l.b16 %v2718
          %v3238 = vunpack.c.l.b16 %v2719
          %v3239 = vunpack.c.l.b16 %v2720
          %v3240 = vunpack.c.l.b16 %v2721
          %v3241 = vunpack.c.l.b16 %v2722
          %v3242 = vunpack.c.l.b16 %v2723
          %v3243 = vunpack.c.l.b16 %v2724
          %v3244 = vunpack.c.l.b16 %v2725
          %v3245 = vunpack.c.l.b16 %v2726
          %v3246 = vunpack.c.l.b16 %v2727
          %v3247 = vunpack.c.l.b16 %v2728
          %v3248 = vunpack.c.l.b16 %v2729
          %v3249 = vunpack.c.l.b16 %v2730
          %v3250 = vunpack.c.l.b16 %v2731
          %v3251 = vunpack.c.l.b16 %v2732
          %v3252 = vunpack.c.l.b16 %v2733
          %v3253 = vunpack.c.l.b16 %v2734
          %v3254 = vunpack.c.l.b16 %v2735
          %v3255 = vunpack.c.l.b16 %v2736
          %v3256 = vunpack.c.l.b16 %v2737
          %v3257 = vunpack.c.l.b16 %v2738
          %v3258 = vunpack.c.l.b16 %v2739
          %v3259 = vunpack.c.l.b16 %v2740
          %v3260 = vunpack.c.l.b16 %v2741
          %v3261 = vunpack.c.l.b16 %v2742
          %v3262 = vunpack.c.l.b16 %v2743
          %v3263 = vunpack.c.l.b16 %v2744
          %v3264 = vunpack.c.l.b16 %v2745
          %v3265 = vunpack.c.l.b16 %v2746
          %v3266 = vunpack.c.l.b16 %v2747
          %v3267 = vunpack.c.l.b16 %v2748
          %v3268 = vunpack.c.l.b16 %v2749
          %v3269 = vunpack.c.l.b16 %v2750
          %v3270 = vunpack.c.l.b16 %v2751
          %v3271 = vunpack.c.l.b16 %v2752
          %v3272 = vunpack.c.l.b16 %v2753
          %v3273 = vunpack.c.l.b16 %v2754
          %v3274 = vunpack.c.l.b16 %v2755
          %v3275 = vunpack.c.l.b16 %v2756
          %v3276 = vunpack.c.l.b16 %v2757
          %v3277 = vunpack.c.l.b16 %v2758
          %v3278 = vunpack.c.l.b16 %v2759
          %v3279 = vunpack.c.l.b16 %v2760
          %v3280 = vunpack.c.l.b16 %v2761
          %v3281 = vunpack.c.l.b16 %v2762
          %v3282 = vunpack.c.l.b16 %v2763
          %v3283 = vunpack.c.l.b16 %v2764
          %v3284 = vunpack.c.l.b16 %v2765
          %v3285 = vunpack.c.l.b16 %v2766
          %v3286 = vunpack.c.l.b16 %v2767
          %v3287 = vunpack.c.l.b16 %v2768
          %v3288 = vunpack.c.l.b16 %v2769
          %v3289 = vunpack.c.l.b16 %v2770
          %v3290 = vunpack.c.l.b16 %v2771
          %v3291 = vunpack.c.l.b16 %v2772
          %v3292 = vunpack.c.l.b16 %v2773
          %v3293 = vunpack.c.l.b16 %v2774
          %v3294 = vunpack.c.l.b16 %v2775
          %v3295 = vunpack.c.l.b16 %v2776
          %v3296 = vunpack.c.l.b16 %v2777
          %v3297 = vunpack.c.l.b16 %v2778
          %v3298 = vunpack.c.l.b16 %v2779
          %v3299 = vunpack.c.l.b16 %v2780
          %v3300 = vunpack.c.l.b16 %v2781
          %v3301 = vunpack.c.l.b16 %v2782
          %v3302 = vunpack.c.l.b16 %v2783
          %v3303 = vunpack.c.l.b16 %v2784
          %v3304 = vunpack.c.l.b16 %v2785
          %v3305 = vunpack.c.l.b16 %v2786
          %v3306 = vunpack.c.l.b16 %v2787
          %v3307 = vunpack.c.l.b16 %v2788
          %v3308 = vunpack.c.l.b16 %v2789
          %v3309 = vunpack.c.l.b16 %v2790
          %v3310 = vunpack.c.l.b16 %v2791
          %v3311 = vunpack.c.l.b16 %v2792
          %v3312 = vunpack.c.l.b16 %v2793
          %v3313 = vunpack.c.l.b16 %v2794
          %v3314 = vunpack.c.l.b16 %v2795
          %v3315 = vunpack.c.l.b16 %v2796
          %v3316 = vunpack.c.l.b16 %v2797
          %v3317 = vunpack.c.l.b16 %v2798
          %v3318 = vunpack.c.l.b16 %v2799
          %v3319 = vunpack.c.l.b16 %v2800
          %v3320 = vunpack.c.l.b16 %v2801
          %v3321 = vunpack.c.l.b16 %v2802
          %v3322 = vunpack.c.l.b16 %v2803
          %v3323 = vunpack.c.l.b16 %v2804
          %v3324 = vunpack.c.l.b16 %v2805
          %v3325 = vunpack.c.l.b16 %v2806
          %v3326 = vunpack.c.l.b16 %v2807
          %v3327 = vunpack.c.l.b16 %v2808
          %v3328 = vunpack.c.l.b16 %v2809
          %v3329 = vunpack.c.l.b16 %v2810
          %v3330 = vunpack.c.l.b16 %v2811
          %v3331 = vunpack.c.l.b16 %v2812
          %v3332 = vunpack.c.l.b16 %v2813
          %v3333 = vunpack.c.l.b16 %v2814
          %v3334 = vunpack.c.l.b16 %v2815
          %v3335 = vunpack.c.l.b16 %v2816
          %v3336 = vunpack.c.l.b16 %v2817
          %v3337 = vunpack.c.l.b16 %v2818
          %v3338 = vunpack.c.l.b16 %v2819
          %v3339 = vunpack.c.l.b16 %v2820
          %v3340 = vunpack.c.l.b16 %v2821
          %v3341 = vunpack.c.l.b16 %v2822
          %v3342 = vunpack.c.l.b16 %v2823
          %v3343 = vunpack.c.l.b16 %v2824
          %v3344 = vunpack.c.l.b16 %v2825
          %v3345 = vunpack.c.l.b16 %v2826
          %v3346 = vunpack.c.l.b16 %v2827
          %v3347 = vunpack.c.l.b16 %v2828
          %v3348 = vunpack.c.l.b16 %v2829
          %v3349 = vunpack.c.l.b16 %v2830
          %v3350 = vpack.c.b16 %v3095, %v3094
          %v3351 = vpack.c.b16 %v3097, %v3096
          %v3352 = vpack.c.b16 %v3099, %v3098
          %v3353 = vpack.c.b16 %v3101, %v3100
          %v3354 = vpack.c.b16 %v3103, %v3102
          %v3355 = vpack.c.b16 %v3105, %v3104
          %v3356 = vpack.c.b16 %v3107, %v3106
          %v3357 = vpack.c.b16 %v3109, %v3108
          %v3358 = vpack.c.b16 %v3111, %v3110
          %v3359 = vpack.c.b16 %v3113, %v3112
          %v3360 = vpack.c.b16 %v3115, %v3114
          %v3361 = vpack.c.b16 %v3117, %v3116
          %v3362 = vpack.c.b16 %v3119, %v3118
          %v3363 = vpack.c.b16 %v3121, %v3120
          %v3364 = vpack.c.b16 %v3123, %v3122
          %v3365 = vpack.c.b16 %v3125, %v3124
          %v3366 = vpack.c.b16 %v3127, %v3126
          %v3367 = vpack.c.b16 %v3129, %v3128
          %v3368 = vpack.c.b16 %v3131, %v3130
          %v3369 = vpack.c.b16 %v3133, %v3132
          %v3370 = vpack.c.b16 %v3135, %v3134
          %v3371 = vpack.c.b16 %v3137, %v3136
          %v3372 = vpack.c.b16 %v3139, %v3138
          %v3373 = vpack.c.b16 %v3141, %v3140
          %v3374 = vpack.c.b16 %v3143, %v3142
          %v3375 = vpack.c.b16 %v3145, %v3144
          %v3376 = vpack.c.b16 %v3147, %v3146
          %v3377 = vpack.c.b16 %v3149, %v3148
          %v3378 = vpack.c.b16 %v3151, %v3150
          %v3379 = vpack.c.b16 %v3153, %v3152
          %v3380 = vpack.c.b16 %v3155, %v3154
          %v3381 = vpack.c.b16 %v3157, %v3156
          %v3382 = vpack.c.b16 %v3159, %v3158
          %v3383 = vpack.c.b16 %v3161, %v3160
          %v3384 = vpack.c.b16 %v3163, %v3162
          %v3385 = vpack.c.b16 %v3165, %v3164
          %v3386 = vpack.c.b16 %v3167, %v3166
          %v3387 = vpack.c.b16 %v3169, %v3168
          %v3388 = vpack.c.b16 %v3171, %v3170
          %v3389 = vpack.c.b16 %v3173, %v3172
          %v3390 = vpack.c.b16 %v3175, %v3174
          %v3391 = vpack.c.b16 %v3177, %v3176
          %v3392 = vpack.c.b16 %v3179, %v3178
          %v3393 = vpack.c.b16 %v3181, %v3180
          %v3394 = vpack.c.b16 %v3183, %v3182
          %v3395 = vpack.c.b16 %v3185, %v3184
          %v3396 = vpack.c.b16 %v3187, %v3186
          %v3397 = vpack.c.b16 %v3189, %v3188
          %v3398 = vpack.c.b16 %v3191, %v3190
          %v3399 = vpack.c.b16 %v3193, %v3192
          %v3400 = vpack.c.b16 %v3195, %v3194
          %v3401 = vpack.c.b16 %v3197, %v3196
          %v3402 = vpack.c.b16 %v3199, %v3198
          %v3403 = vpack.c.b16 %v3201, %v3200
          %v3404 = vpack.c.b16 %v3203, %v3202
          %v3405 = vpack.c.b16 %v3205, %v3204
          %v3406 = vpack.c.b16 %v3207, %v3206
          %v3407 = vpack.c.b16 %v3209, %v3208
          %v3408 = vpack.c.b16 %v3211, %v3210
          %v3409 = vpack.c.b16 %v3213, %v3212
          %v3410 = vpack.c.b16 %v3215, %v3214
          %v3411 = vpack.c.b16 %v3217, %v3216
          %v3412 = vpack.c.b16 %v3219, %v3218
          %v3413 = vpack.c.b16 %v3221, %v3220
          %v3414 = vpack.c.b16 %v3223, %v3222
          %v3415 = vpack.c.b16 %v3225, %v3224
          %v3416 = vpack.c.b16 %v3227, %v3226
          %v3417 = vpack.c.b16 %v3229, %v3228
          %v3418 = vpack.c.b16 %v3231, %v3230
          %v3419 = vpack.c.b16 %v3233, %v3232
          %v3420 = vpack.c.b16 %v3235, %v3234
          %v3421 = vpack.c.b16 %v3237, %v3236
          %v3422 = vpack.c.b16 %v3239, %v3238
          %v3423 = vpack.c.b16 %v3241, %v3240
          %v3424 = vpack.c.b16 %v3243, %v3242
          %v3425 = vpack.c.b16 %v3245, %v3244
          %v3426 = vpack.c.b16 %v3247, %v3246
          %v3427 = vpack.c.b16 %v3249, %v3248
          %v3428 = vpack.c.b16 %v3251, %v3250
          %v3429 = vpack.c.b16 %v3253, %v3252
          %v3430 = vpack.c.b16 %v3255, %v3254
          %v3431 = vpack.c.b16 %v3257, %v3256
          %v3432 = vpack.c.b16 %v3259, %v3258
          %v3433 = vpack.c.b16 %v3261, %v3260
          %v3434 = vpack.c.b16 %v3263, %v3262
          %v3435 = vpack.c.b16 %v3265, %v3264
          %v3436 = vpack.c.b16 %v3267, %v3266
          %v3437 = vpack.c.b16 %v3269, %v3268
          %v3438 = vpack.c.b16 %v3271, %v3270
          %v3439 = vpack.c.b16 %v3273, %v3272
          %v3440 = vpack.c.b16 %v3275, %v3274
          %v3441 = vpack.c.b16 %v3277, %v3276
          %v3442 = vpack.c.b16 %v3279, %v3278
          %v3443 = vpack.c.b16 %v3281, %v3280
          %v3444 = vpack.c.b16 %v3283, %v3282
          %v3445 = vpack.c.b16 %v3285, %v3284
          %v3446 = vpack.c.b16 %v3287, %v3286
          %v3447 = vpack.c.b16 %v3289, %v3288
          %v3448 = vpack.c.b16 %v3291, %v3290
          %v3449 = vpack.c.b16 %v3293, %v3292
          %v3450 = vpack.c.b16 %v3295, %v3294
          %v3451 = vpack.c.b16 %v3297, %v3296
          %v3452 = vpack.c.b16 %v3299, %v3298
          %v3453 = vpack.c.b16 %v3301, %v3300
          %v3454 = vpack.c.b16 %v3303, %v3302
          %v3455 = vpack.c.b16 %v3305, %v3304
          %v3456 = vpack.c.b16 %v3307, %v3306
          %v3457 = vpack.c.b16 %v3309, %v3308
          %v3458 = vpack.c.b16 %v3311, %v3310
          %v3459 = vpack.c.b16 %v3313, %v3312
          %v3460 = vpack.c.b16 %v3315, %v3314
          %v3461 = vpack.c.b16 %v3317, %v3316
          %v3462 = vpack.c.b16 %v3319, %v3318
          %v3463 = vpack.c.b16 %v3321, %v3320
          %v3464 = vpack.c.b16 %v3323, %v3322
          %v3465 = vpack.c.b16 %v3325, %v3324
          %v3466 = vpack.c.b16 %v3327, %v3326
          %v3467 = vpack.c.b16 %v3329, %v3328
          %v3468 = vpack.c.b16 %v3331, %v3330
          %v3469 = vpack.c.b16 %v3333, %v3332
          %v3470 = vpack.c.b16 %v3335, %v3334
          %v3471 = vpack.c.b16 %v3337, %v3336
          %v3472 = vpack.c.b16 %v3339, %v3338
          %v3473 = vpack.c.b16 %v3341, %v3340
          %v3474 = vpack.c.b16 %v3343, %v3342
          %v3475 = vpack.c.b16 %v3345, %v3344
          %v3476 = vpack.c.b16 %v3347, %v3346
          %v3477 = vpack.c.b16 %v3349, %v3348
          %3606 = vmatprep.subr.bf16.mxu0 0
          %3607 = vmatpush1.bf16.msra.mxu0 %v3350
          %3608 = vmatprep.subr.bf16.mxu0 0
          %3609 = vmatpush1.bf16.msra.mxu0 %v3351
          %3610 = vmatprep.subr.bf16.mxu0 0
          %3611 = vmatpush1.bf16.msra.mxu0 %v3352
          %3612 = vmatprep.subr.bf16.mxu0 0
          %3613 = vmatpush1.bf16.msra.mxu0 %v3353
          %3614 = vmatprep.subr.bf16.mxu0 0
          %3615 = vmatpush1.bf16.msra.mxu0 %v3354
          %3616 = vmatprep.subr.bf16.mxu0 0
          %3617 = vmatpush1.bf16.msra.mxu0 %v3355
          %3618 = vmatprep.subr.bf16.mxu0 0
          %3619 = vmatpush1.bf16.msra.mxu0 %v3356
          %3620 = vmatprep.subr.bf16.mxu0 0
          %3621 = vmatpush1.bf16.msra.mxu0 %v3357
          %3622 = vmatprep.subr.bf16.mxu0 0
          %3623 = vmatpush1.bf16.msra.mxu0 %v3358
          %3624 = vmatprep.subr.bf16.mxu0 0
          %3625 = vmatpush1.bf16.msra.mxu0 %v3359
          %3626 = vmatprep.subr.bf16.mxu0 0
          %3627 = vmatpush1.bf16.msra.mxu0 %v3360
          %3628 = vmatprep.subr.bf16.mxu0 0
          %3629 = vmatpush1.bf16.msra.mxu0 %v3361
          %3630 = vmatprep.subr.bf16.mxu0 0
          %3631 = vmatpush1.bf16.msra.mxu0 %v3362
          %3632 = vmatprep.subr.bf16.mxu0 0
          %3633 = vmatpush1.bf16.msra.mxu0 %v3363
          %3634 = vmatprep.subr.bf16.mxu0 0
          %3635 = vmatpush1.bf16.msra.mxu0 %v3364
          %3636 = vmatprep.subr.bf16.mxu0 0
          %3637 = vmatpush1.bf16.msra.mxu0 %v3365
          %3638 = vmatprep.mubr.bf16.mxu0 %v2560
          %3639 = vmatmul.mubr.bf16.gmra.mrb[0].mxu0 %v2559
          %v3640 = vpop.f32.mrb[0].mxu0
          %v3641 = vadd.f32 %v2836, %v3640
          %v3642 = vpop.f32.mrb[0].mxu0
          %v3643 = vpop.f32.mrb[0].mxu0
          %v3644 = vadd.f32 %v2836, %v3643
          %v3645 = vpop.f32.mrb[0].mxu0
          %3646 = vdwg.mxu0
          %3647 = vmatprep.subr.bf16.mxu0 0
          %3648 = vmatpush1.bf16.msra.mxu0 %v3366
          %3649 = vmatprep.subr.bf16.mxu0 0
          %3650 = vmatpush1.bf16.msra.mxu0 %v3367
          %3651 = vmatprep.subr.bf16.mxu0 0
          %3652 = vmatpush1.bf16.msra.mxu0 %v3368
          %3653 = vmatprep.subr.bf16.mxu0 0
          %3654 = vmatpush1.bf16.msra.mxu0 %v3369
          %3655 = vmatprep.subr.bf16.mxu0 0
          %3656 = vmatpush1.bf16.msra.mxu0 %v3370
          %3657 = vmatprep.subr.bf16.mxu0 0
          %3658 = vmatpush1.bf16.msra.mxu0 %v3371
          %3659 = vmatprep.subr.bf16.mxu0 0
          %3660 = vmatpush1.bf16.msra.mxu0 %v3372
          %3661 = vmatprep.subr.bf16.mxu0 0
          %3662 = vmatpush1.bf16.msra.mxu0 %v3373
          %3663 = vmatprep.subr.bf16.mxu0 0
          %3664 = vmatpush1.bf16.msra.mxu0 %v3374
          %3665 = vmatprep.subr.bf16.mxu0 0
          %3666 = vmatpush1.bf16.msra.mxu0 %v3375
          %3667 = vmatprep.subr.bf16.mxu0 0
          %3668 = vmatpush1.bf16.msra.mxu0 %v3376
          %3669 = vmatprep.subr.bf16.mxu0 0
          %3670 = vmatpush1.bf16.msra.mxu0 %v3377
          %3671 = vmatprep.subr.bf16.mxu0 0
          %3672 = vmatpush1.bf16.msra.mxu0 %v3378
          %3673 = vmatprep.subr.bf16.mxu0 0
          %3674 = vmatpush1.bf16.msra.mxu0 %v3379
          %3675 = vmatprep.subr.bf16.mxu0 0
          %3676 = vmatpush1.bf16.msra.mxu0 %v3380
          %3677 = vmatprep.subr.bf16.mxu0 0
          %3678 = vmatpush1.bf16.msra.mxu0 %v3381
          %3679 = vmatprep.mubr.bf16.mxu0 %v2562
          %3680 = vmatmul.mubr.bf16.gmra.mrb[0].mxu0 %v2561
          %v3681 = vpop.f32.mrb[0].mxu0
          %v3682 = vadd.f32 %v3641, %v3681
          %v3683 = vpop.f32.mrb[0].mxu0
          %v3684 = vpop.f32.mrb[0].mxu0
          %v3685 = vadd.f32 %v3644, %v3684
          %v3686 = vpop.f32.mrb[0].mxu0
          %3687 = vdwg.mxu0
          %3688 = vmatprep.subr.bf16.mxu0 0
          %3689 = vmatpush1.bf16.msra.mxu0 %v3382
          %3690 = vmatprep.subr.bf16.mxu0 0
          %3691 = vmatpush1.bf16.msra.mxu0 %v3383
          %3692 = vmatprep.subr.bf16.mxu0 0
          %3693 = vmatpush1.bf16.msra.mxu0 %v3384
          %3694 = vmatprep.subr.bf16.mxu0 0
          %3695 = vmatpush1.bf16.msra.mxu0 %v3385
          %3696 = vmatprep.subr.bf16.mxu0 0
          %3697 = vmatpush1.bf16.msra.mxu0 %v3386
          %3698 = vmatprep.subr.bf16.mxu0 0
          %3699 = vmatpush1.bf16.msra.mxu0 %v3387
          %3700 = vmatprep.subr.bf16.mxu0 0
          %3701 = vmatpush1.bf16.msra.mxu0 %v3388
          %3702 = vmatprep.subr.bf16.mxu0 0
          %3703 = vmatpush1.bf16.msra.mxu0 %v3389
          %3704 = vmatprep.subr.bf16.mxu0 0
          %3705 = vmatpush1.bf16.msra.mxu0 %v3390
          %3706 = vmatprep.subr.bf16.mxu0 0
          %3707 = vmatpush1.bf16.msra.mxu0 %v3391
          %3708 = vmatprep.subr.bf16.mxu0 0
          %3709 = vmatpush1.bf16.msra.mxu0 %v3392
          %3710 = vmatprep.subr.bf16.mxu0 0
          %3711 = vmatpush1.bf16.msra.mxu0 %v3393
          %3712 = vmatprep.subr.bf16.mxu0 0
          %3713 = vmatpush1.bf16.msra.mxu0 %v3394
          %3714 = vmatprep.subr.bf16.mxu0 0
          %3715 = vmatpush1.bf16.msra.mxu0 %v3395
          %3716 = vmatprep.subr.bf16.mxu0 0
          %3717 = vmatpush1.bf16.msra.mxu0 %v3396
          %3718 = vmatprep.subr.bf16.mxu0 0
          %3719 = vmatpush1.bf16.msra.mxu0 %v3397
          %3720 = vmatprep.mubr.bf16.mxu0 %v2564
          %3721 = vmatmul.mubr.bf16.gmra.mrb[0].mxu0 %v2563
          %v3722 = vpop.f32.mrb[0].mxu0
          %v3723 = vadd.f32 %v3682, %v3722
          %v3724 = vpop.f32.mrb[0].mxu0
          %v3725 = vpop.f32.mrb[0].mxu0
          %v3726 = vadd.f32 %v3685, %v3725
          %v3727 = vpop.f32.mrb[0].mxu0
          %3728 = vdwg.mxu0
          %3729 = vmatprep.subr.bf16.mxu0 0
          %3730 = vmatpush1.bf16.msra.mxu0 %v3398
          %3731 = vmatprep.subr.bf16.mxu0 0
          %3732 = vmatpush1.bf16.msra.mxu0 %v3399
          %3733 = vmatprep.subr.bf16.mxu0 0
          %3734 = vmatpush1.bf16.msra.mxu0 %v3400
          %3735 = vmatprep.subr.bf16.mxu0 0
          %3736 = vmatpush1.bf16.msra.mxu0 %v3401
          %3737 = vmatprep.subr.bf16.mxu0 0
          %3738 = vmatpush1.bf16.msra.mxu0 %v3402
          %3739 = vmatprep.subr.bf16.mxu0 0
          %3740 = vmatpush1.bf16.msra.mxu0 %v3403
          %3741 = vmatprep.subr.bf16.mxu0 0
          %3742 = vmatpush1.bf16.msra.mxu0 %v3404
          %3743 = vmatprep.subr.bf16.mxu0 0
          %3744 = vmatpush1.bf16.msra.mxu0 %v3405
          %3745 = vmatprep.subr.bf16.mxu0 0
          %3746 = vmatpush1.bf16.msra.mxu0 %v3406
          %3747 = vmatprep.subr.bf16.mxu0 0
          %3748 = vmatpush1.bf16.msra.mxu0 %v3407
          %3749 = vmatprep.subr.bf16.mxu0 0
          %3750 = vmatpush1.bf16.msra.mxu0 %v3408
          %3751 = vmatprep.subr.bf16.mxu0 0
          %3752 = vmatpush1.bf16.msra.mxu0 %v3409
          %3753 = vmatprep.subr.bf16.mxu0 0
          %3754 = vmatpush1.bf16.msra.mxu0 %v3410
          %3755 = vmatprep.subr.bf16.mxu0 0
          %3756 = vmatpush1.bf16.msra.mxu0 %v3411
          %3757 = vmatprep.subr.bf16.mxu0 0
          %3758 = vmatpush1.bf16.msra.mxu0 %v3412
          %3759 = vmatprep.subr.bf16.mxu0 0
          %3760 = vmatpush1.bf16.msra.mxu0 %v3413
          %3761 = vmatprep.mubr.bf16.mxu0 %v2566
          %3762 = vmatmul.mubr.bf16.gmra.mrb[0].mxu0 %v2565
          %v3763 = vpop.f32.mrb[0].mxu0
          %v3764 = vadd.f32 %v3723, %v3763
          %v3765 = vpop.f32.mrb[0].mxu0
          %v3766 = vpop.f32.mrb[0].mxu0
          %v3767 = vadd.f32 %v3726, %v3766
          %v3768 = vpop.f32.mrb[0].mxu0
          %3769 = vdwg.mxu0
          %3770 = vmatprep.subr.bf16.mxu0 0
          %3771 = vmatpush1.bf16.msra.mxu0 %v3414
          %3772 = vmatprep.subr.bf16.mxu0 0
          %3773 = vmatpush1.bf16.msra.mxu0 %v3415
          %3774 = vmatprep.subr.bf16.mxu0 0
          %3775 = vmatpush1.bf16.msra.mxu0 %v3416
          %3776 = vmatprep.subr.bf16.mxu0 0
          %3777 = vmatpush1.bf16.msra.mxu0 %v3417
          %3778 = vmatprep.subr.bf16.mxu0 0
          %3779 = vmatpush1.bf16.msra.mxu0 %v3418
          %3780 = vmatprep.subr.bf16.mxu0 0
          %3781 = vmatpush1.bf16.msra.mxu0 %v3419
          %3782 = vmatprep.subr.bf16.mxu0 0
          %3783 = vmatpush1.bf16.msra.mxu0 %v3420
          %3784 = vmatprep.subr.bf16.mxu0 0
          %3785 = vmatpush1.bf16.msra.mxu0 %v3421
          %3786 = vmatprep.subr.bf16.mxu0 0
          %3787 = vmatpush1.bf16.msra.mxu0 %v3422
          %3788 = vmatprep.subr.bf16.mxu0 0
          %3789 = vmatpush1.bf16.msra.mxu0 %v3423
          %3790 = vmatprep.subr.bf16.mxu0 0
          %3791 = vmatpush1.bf16.msra.mxu0 %v3424
          %3792 = vmatprep.subr.bf16.mxu0 0
          %3793 = vmatpush1.bf16.msra.mxu0 %v3425
          %3794 = vmatprep.subr.bf16.mxu0 0
          %3795 = vmatpush1.bf16.msra.mxu0 %v3426
          %3796 = vmatprep.subr.bf16.mxu0 0
          %3797 = vmatpush1.bf16.msra.mxu0 %v3427
          %3798 = vmatprep.subr.bf16.mxu0 0
          %3799 = vmatpush1.bf16.msra.mxu0 %v3428
          %3800 = vmatprep.subr.bf16.mxu0 0
          %3801 = vmatpush1.bf16.msra.mxu0 %v3429
          %3802 = vmatprep.mubr.bf16.mxu0 %v2568
          %3803 = vmatmul.mubr.bf16.gmra.mrb[0].mxu0 %v2567
          %v3804 = vpop.f32.mrb[0].mxu0
          %v3805 = vadd.f32 %v3764, %v3804
          %v3806 = vpop.f32.mrb[0].mxu0
          %v3807 = vpop.f32.mrb[0].mxu0
          %v3808 = vadd.f32 %v3767, %v3807
          %v3809 = vpop.f32.mrb[0].mxu0
          %3810 = vdwg.mxu0
          %3811 = vmatprep.subr.bf16.mxu0 0
          %3812 = vmatpush1.bf16.msra.mxu0 %v3430
          %3813 = vmatprep.subr.bf16.mxu0 0
          %3814 = vmatpush1.bf16.msra.mxu0 %v3431
          %3815 = vmatprep.subr.bf16.mxu0 0
          %3816 = vmatpush1.bf16.msra.mxu0 %v3432
          %3817 = vmatprep.subr.bf16.mxu0 0
          %3818 = vmatpush1.bf16.msra.mxu0 %v3433
          %3819 = vmatprep.subr.bf16.mxu0 0
          %3820 = vmatpush1.bf16.msra.mxu0 %v3434
          %3821 = vmatprep.subr.bf16.mxu0 0
          %3822 = vmatpush1.bf16.msra.mxu0 %v3435
          %3823 = vmatprep.subr.bf16.mxu0 0
          %3824 = vmatpush1.bf16.msra.mxu0 %v3436
          %3825 = vmatprep.subr.bf16.mxu0 0
          %3826 = vmatpush1.bf16.msra.mxu0 %v3437
          %3827 = vmatprep.subr.bf16.mxu0 0
          %3828 = vmatpush1.bf16.msra.mxu0 %v3438
          %3829 = vmatprep.subr.bf16.mxu0 0
          %3830 = vmatpush1.bf16.msra.mxu0 %v3439
          %3831 = vmatprep.subr.bf16.mxu0 0
          %3832 = vmatpush1.bf16.msra.mxu0 %v3440
          %3833 = vmatprep.subr.bf16.mxu0 0
          %3834 = vmatpush1.bf16.msra.mxu0 %v3441
          %3835 = vmatprep.subr.bf16.mxu0 0
          %3836 = vmatpush1.bf16.msra.mxu0 %v3442
          %3837 = vmatprep.subr.bf16.mxu0 0
          %3838 = vmatpush1.bf16.msra.mxu0 %v3443
          %3839 = vmatprep.subr.bf16.mxu0 0
          %3840 = vmatpush1.bf16.msra.mxu0 %v3444
          %3841 = vmatprep.subr.bf16.mxu0 0
          %3842 = vmatpush1.bf16.msra.mxu0 %v3445
          %3843 = vmatprep.mubr.bf16.mxu0 %v2570
          %3844 = vmatmul.mubr.bf16.gmra.mrb[0].mxu0 %v2569
          %v3845 = vpop.f32.mrb[0].mxu0
          %v3846 = vadd.f32 %v3805, %v3845
          %v3847 = vpop.f32.mrb[0].mxu0
          %v3848 = vpop.f32.mrb[0].mxu0
          %v3849 = vadd.f32 %v3808, %v3848
          %v3850 = vpop.f32.mrb[0].mxu0
          %3851 = vdwg.mxu0
          %3852 = vmatprep.subr.bf16.mxu0 0
          %3853 = vmatpush1.bf16.msra.mxu0 %v3446
          %3854 = vmatprep.subr.bf16.mxu0 0
          %3855 = vmatpush1.bf16.msra.mxu0 %v3447
          %3856 = vmatprep.subr.bf16.mxu0 0
          %3857 = vmatpush1.bf16.msra.mxu0 %v3448
          %3858 = vmatprep.subr.bf16.mxu0 0
          %3859 = vmatpush1.bf16.msra.mxu0 %v3449
          %3860 = vmatprep.subr.bf16.mxu0 0
          %3861 = vmatpush1.bf16.msra.mxu0 %v3450
          %3862 = vmatprep.subr.bf16.mxu0 0
          %3863 = vmatpush1.bf16.msra.mxu0 %v3451
          %3864 = vmatprep.subr.bf16.mxu0 0
          %3865 = vmatpush1.bf16.msra.mxu0 %v3452
          %3866 = vmatprep.subr.bf16.mxu0 0
          %3867 = vmatpush1.bf16.msra.mxu0 %v3453
          %3868 = vmatprep.subr.bf16.mxu0 0
          %3869 = vmatpush1.bf16.msra.mxu0 %v3454
          %3870 = vmatprep.subr.bf16.mxu0 0
          %3871 = vmatpush1.bf16.msra.mxu0 %v3455
          %3872 = vmatprep.subr.bf16.mxu0 0
          %3873 = vmatpush1.bf16.msra.mxu0 %v3456
          %3874 = vmatprep.subr.bf16.mxu0 0
          %3875 = vmatpush1.bf16.msra.mxu0 %v3457
          %3876 = vmatprep.subr.bf16.mxu0 0
          %3877 = vmatpush1.bf16.msra.mxu0 %v3458
          %3878 = vmatprep.subr.bf16.mxu0 0
          %3879 = vmatpush1.bf16.msra.mxu0 %v3459
          %3880 = vmatprep.subr.bf16.mxu0 0
          %3881 = vmatpush1.bf16.msra.mxu0 %v3460
          %3882 = vmatprep.subr.bf16.mxu0 0
          %3883 = vmatpush1.bf16.msra.mxu0 %v3461
          %3884 = vmatprep.mubr.bf16.mxu0 %v2572
          %3885 = vmatmul.mubr.bf16.gmra.mrb[0].mxu0 %v2571
          %v3886 = vpop.f32.mrb[0].mxu0
          %v3887 = vadd.f32 %v3846, %v3886
          %v3888 = vpop.f32.mrb[0].mxu0
          %v3889 = vpop.f32.mrb[0].mxu0
          %v3890 = vadd.f32 %v3849, %v3889
          %v3891 = vpop.f32.mrb[0].mxu0
          %3892 = vdwg.mxu0
          %3893 = vmatprep.subr.bf16.mxu0 0
          %3894 = vmatpush1.bf16.msra.mxu0 %v3462
          %3895 = vmatprep.subr.bf16.mxu0 0
          %3896 = vmatpush1.bf16.msra.mxu0 %v3463
          %3897 = vmatprep.subr.bf16.mxu0 0
          %3898 = vmatpush1.bf16.msra.mxu0 %v3464
          %3899 = vmatprep.subr.bf16.mxu0 0
          %3900 = vmatpush1.bf16.msra.mxu0 %v3465
          %3901 = vmatprep.subr.bf16.mxu0 0
          %3902 = vmatpush1.bf16.msra.mxu0 %v3466
          %3903 = vmatprep.subr.bf16.mxu0 0
          %3904 = vmatpush1.bf16.msra.mxu0 %v3467
          %3905 = vmatprep.subr.bf16.mxu0 0
          %3906 = vmatpush1.bf16.msra.mxu0 %v3468
          %3907 = vmatprep.subr.bf16.mxu0 0
          %3908 = vmatpush1.bf16.msra.mxu0 %v3469
          %3909 = vmatprep.subr.bf16.mxu0 0
          %3910 = vmatpush1.bf16.msra.mxu0 %v3470
          %3911 = vmatprep.subr.bf16.mxu0 0
          %3912 = vmatpush1.bf16.msra.mxu0 %v3471
          %3913 = vmatprep.subr.bf16.mxu0 0
          %3914 = vmatpush1.bf16.msra.mxu0 %v3472
          %3915 = vmatprep.subr.bf16.mxu0 0
          %3916 = vmatpush1.bf16.msra.mxu0 %v3473
          %3917 = vmatprep.subr.bf16.mxu0 0
          %3918 = vmatpush1.bf16.msra.mxu0 %v3474
          %3919 = vmatprep.subr.bf16.mxu0 0
          %3920 = vmatpush1.bf16.msra.mxu0 %v3475
          %3921 = vmatprep.subr.bf16.mxu0 0
          %3922 = vmatpush1.bf16.msra.mxu0 %v3476
          %3923 = vmatprep.subr.bf16.mxu0 0
          %3924 = vmatpush1.bf16.msra.mxu0 %v3477
          %3925 = vmatprep.mubr.bf16.mxu0 %v2574
          %3926 = vmatmul.mubr.bf16.gmra.mrb[0].mxu0 %v2573
          %v3927 = vpop.f32.mrb[0].mxu0
          %v3928 = vadd.f32 %v3887, %v3927
          %v3929 = vpop.f32.mrb[0].mxu0
          %v3930 = vpop.f32.mrb[0].mxu0
          %v3931 = vadd.f32 %v3890, %v3930
          %v3932 = vpop.f32.mrb[0].mxu0
          %3933 = vdwg.mxu0
          %v3934 = vadd.f32 %v1901, %v3928
          %v3935 = vadd.f32 %v1902, %v3931
          %v3936 = vld [vmem:[%s615 + $0x1] sm:$0x1]
          %v3937 = vld [vmem:[%s619 + $0x1] sm:$0x1]
          %v3938 = vsel %vm701, %v3934, 0.0
          %3939 = vadd.xlane.f32.xlu0 %v3938
          %v3940 = vpop.xlane.xlu0 %3939
          %v3941 = vsel %vm701, %v3935, 0.0
          %3942 = vadd.xlane.f32.xlu0 %v3941
          %v3943 = vpop.xlane.xlu0 %3942
          %v3944 = vmul.f32 %v3940, %v1870
          %v3945 = vmul.f32 %v3943, %v1870
          %v3946 = vsub.f32 %v3934, %v3944
          %v3947 = vsub.f32 %v3935, %v3945
          %v3948 = vmul.f32 %v3946, %v3946
          %v3949 = vmul.f32 %v3947, %v3947
          %v3950 = vsel %vm701, %v3948, 0.0
          %3951 = vadd.xlane.f32.xlu0 %v3950
          %v3952 = vpop.xlane.xlu0 %3951
          %v3953 = vsel %vm701, %v3949, 0.0
          %3954 = vadd.xlane.f32.xlu0 %v3953
          %v3955 = vpop.xlane.xlu0 %3954
          %v3956 = vmul.f32 %v3952, %v1870
          %v3957 = vmul.f32 %v3955, %v1870
          %v3958 = vadd.f32 %v3956, 1e-05
          %v3959 = vadd.f32 %v3957, 1e-05
          %v3960 = vrsqrt.pop %v3958
          %v3961 = vrsqrt.pop %v3959
          %v3962 = vmul.f32 %v3946, %v3960
          %v3963 = vmul.f32 %v3947, %v3961
          %v3964 = vlaneseq
          %v3965 = vshrl.u32 %v3964, 7
          %v3966 = vsub.s32 0, %v3965
          %v3967 = vrot.slane %v3936, %v3966
          %v3968 = vmul.f32 %v3962, %v3967
          %v3969 = vmul.f32 %v3963, %v3967
          %v3970 = vlaneseq
          %v3971 = vshrl.u32 %v3970, 7
          %v3972 = vsub.s32 0, %v3971
          %v3973 = vrot.slane %v3937, %v3972
          %v3974 = vadd.f32 %v3968, %v3973
          %v3975 = vadd.f32 %v3969, %v3973
          %3976 = vst.msk [vmem:[#allocation2] sm:$0xff] %vm701, %v3974
          %3977 = vst.msk [vmem:[#allocation2 + $0x8] sm:$0xff] %vm701, %v3975
        $region88: #{transformer_trader.1} parent=79 // pred_fallthru
          _
        %p3978 = scmp.eq.s32.totalorder %s27, 1
        // Predicated region
        $region89: #{transformer_trader.1} parent=79 // pred_check
          %p3979 = pneg %p3978
        $region90: #{transformer_trader.1} parent=79 // pred_check_branch
          %3981 = sbr.rel (%p3979) target = $region92
        $region91: #{transformer_trader.1} parent=79 // pred_region
          %v3982 = vlaneseq
          %v3983 = vshrl.u32 %v3982, 7
          %v3984 = vsub.s32 7, %v3983
          %v3985 = vrot.slane %v750, %v3984
          %v3986 = vlaneseq
          %v3987 = vshrl.u32 %v3986, 7
          %v3988 = vsub.s32 7, %v3987
          %v3989 = vrot.slane %v754, %v3988
          %v3990 = vmul.f32 %v3985, %v752
          %v3991 = vmul.f32 %v3989, %v756
          %v3992 = vpack.c.bf16 %v3991, %v3990
          %v3996 = vunpack.c.l.b16 %v647
          %v3997 = vunpack.c.l.b16 %v648
          %v3998 = vunpack.c.l.b16 %v649
          %v3999 = vpack.c.b16 %v3997, %v3996
          %v4000 = vpack.c.b16 %v3998, %v3998
          %v4003 = vsel %vm701, %v3992, 0
          %v4006 = vsel %vm705, %v4000, 0
          %4008 = vmatprep.subr.bf16.mxu0 0
          %4009 = vmatpush1.bf16.msra.mxu0 %v3999
          %4010 = vmatprep.subr.bf16.mxu0 0
          %4011 = vmatpush1.bf16.msra.mxu0 %v4006
          %4012 = vmatprep.subr.bf16.mxu0 0
          %4013 = vmatpush1.bf16.msra.mxu0 0
          %4014 = vmatprep.subr.bf16.mxu0 0
          %4015 = vmatpush1.bf16.msra.mxu0 0
          %4016 = vmatprep.subr.bf16.mxu0 0
          %4017 = vmatpush1.bf16.msra.mxu0 0
          %4018 = vmatprep.subr.bf16.mxu0 0
          %4019 = vmatpush1.bf16.msra.mxu0 0
          %4020 = vmatprep.subr.bf16.mxu0 0
          %4021 = vmatpush1.bf16.msra.mxu0 0
          %4022 = vmatprep.subr.bf16.mxu0 0
          %4023 = vmatpush1.bf16.msra.mxu0 0
          %4024 = vmatprep.subr.bf16.mxu0 0
          %4025 = vmatpush1.bf16.msra.mxu0 0
          %4026 = vmatprep.subr.bf16.mxu0 0
          %4027 = vmatpush1.bf16.msra.mxu0 0
          %4028 = vmatprep.subr.bf16.mxu0 0
          %4029 = vmatpush1.bf16.msra.mxu0 0
          %4030 = vmatprep.subr.bf16.mxu0 0
          %4031 = vmatpush1.bf16.msra.mxu0 0
          %4032 = vmatprep.subr.bf16.mxu0 0
          %4033 = vmatpush1.bf16.msra.mxu0 0
          %4034 = vmatprep.subr.bf16.mxu0 0
          %4035 = vmatpush1.bf16.msra.mxu0 0
          %4036 = vmatprep.subr.bf16.mxu0 0
          %4037 = vmatpush1.bf16.msra.mxu0 0
          %4038 = vmatprep.subr.bf16.mxu0 0
          %4039 = vmatpush1.bf16.msra.mxu0 0
          %4040 = vmatprep.mubr.bf16.mxu0 0
          %4041 = vmatmul.mubr.bf16.gmra.mrb[0].mxu0 %v4003
          %v4042 = vpop.f32.mrb[0].mxu0
          %v4043 = vadd.f32 0.0, %v4042
          %v4044 = vpop.f32.mrb[0].mxu0
          %v4045 = vpop.f32.mrb[0].mxu0
          %v4046 = vadd.f32 0.0, %v4045
          %v4047 = vpop.f32.mrb[0].mxu0
          %4048 = vdwg.mxu0
          %v4049 = vmul.f32 %v4043, 0.5
          %v4050 = vmul.f32 %v4046, 0.5
          %vm4051 = vcmask 39936
          %v4052 = vsel %vm4051, %v4049, -inf
          %v4053 = vrot.slane %v4052, 4
          %v4054 = vmax.f32 %v4052, %v4053
          %v4055 = vrot.slane %v4054, 2
          %v4056 = vmax.f32 %v4054, %v4055
          %v4057 = vrot.slane %v4056, 1
          %v4058 = vmax.f32 %v4056, %v4057
          %v4059 = vsel %vm4051, %v4050, -inf
          %v4060 = vrot.slane %v4059, 4
          %v4061 = vmax.f32 %v4059, %v4060
          %v4062 = vrot.slane %v4061, 2
          %v4063 = vmax.f32 %v4061, %v4062
          %v4064 = vrot.slane %v4063, 1
          %v4065 = vmax.f32 %v4063, %v4064
          %v4066 = vsub.f32 %v4049, %v4058
          %v4067 = vsub.f32 %v4050, %v4065
          %v4068 = vmul.f32 %v4066, 1.442695
          %v4069 = vpow.pop %v4068
          %v4070 = vmul.f32 %v4067, 1.442695
          %v4071 = vpow.pop %v4070
          %v4072 = vsel %vm4051, %v4069, 0.0
          %v4073 = vrot.slane %v4072, 4
          %v4074 = vadd.f32 %v4072, %v4073
          %v4075 = vrot.slane %v4074, 2
          %v4076 = vadd.f32 %v4074, %v4075
          %v4077 = vrot.slane %v4076, 1
          %v4078 = vadd.f32 %v4076, %v4077
          %v4079 = vsel %vm4051, %v4071, 0.0
          %v4080 = vrot.slane %v4079, 4
          %v4081 = vadd.f32 %v4079, %v4080
          %v4082 = vrot.slane %v4081, 2
          %v4083 = vadd.f32 %v4081, %v4082
          %v4084 = vrot.slane %v4083, 1
          %v4085 = vadd.f32 %v4083, %v4084
          %v4086 = vrcp.pop %v4078
          %v4087 = vrcp.pop %v4085
          %v4088 = vmul.f32 %v4069, %v4086
          %v4089 = vmul.f32 %v4071, %v4087
          %v4090 = vpack.c.bf16 %v4089, %v4088
          %v4092 = vsel %vm4051, %v4090, 0
          %vm4094 = vcmask 1042432
          %v4095 = vsel %vm705, 4294967295, 65535
          %v4096 = vsel %vm4094, %v4095, 0
          %v4098 = vand.u32 %v650, %v4096
          %4100 = vmatprep.subr.bf16.mxu0 0
          %4101 = vmatpush1.bf16.msra.mxu0 %v4098
          %4102 = vmatprep.subr.bf16.mxu0 0
          %4103 = vmatpush1.bf16.msra.mxu0 0
          %4104 = vmatprep.subr.bf16.mxu0 0
          %4105 = vmatpush1.bf16.msra.mxu0 0
          %4106 = vmatprep.subr.bf16.mxu0 0
          %4107 = vmatpush1.bf16.msra.mxu0 0
          %4108 = vmatprep.subr.bf16.mxu0 0
          %4109 = vmatpush1.bf16.msra.mxu0 0
          %4110 = vmatprep.subr.bf16.mxu0 0
          %4111 = vmatpush1.bf16.msra.mxu0 0
          %4112 = vmatprep.subr.bf16.mxu0 0
          %4113 = vmatpush1.bf16.msra.mxu0 0
          %4114 = vmatprep.subr.bf16.mxu0 0
          %4115 = vmatpush1.bf16.msra.mxu0 0
          %4116 = vmatprep.subr.bf16.mxu0 0
          %4117 = vmatpush1.bf16.msra.mxu0 0
          %4118 = vmatprep.subr.bf16.mxu0 0
          %4119 = vmatpush1.bf16.msra.mxu0 0
          %4120 = vmatprep.subr.bf16.mxu0 0
          %4121 = vmatpush1.bf16.msra.mxu0 0
          %4122 = vmatprep.subr.bf16.mxu0 0
          %4123 = vmatpush1.bf16.msra.mxu0 0
          %4124 = vmatprep.subr.bf16.mxu0 0
          %4125 = vmatpush1.bf16.msra.mxu0 0
          %4126 = vmatprep.subr.bf16.mxu0 0
          %4127 = vmatpush1.bf16.msra.mxu0 0
          %4128 = vmatprep.subr.bf16.mxu0 0
          %4129 = vmatpush1.bf16.msra.mxu0 0
          %4130 = vmatprep.subr.bf16.mxu0 0
          %4131 = vmatpush1.bf16.msra.mxu0 0
          %4132 = vmatprep.mubr.bf16.mxu0 0
          %4133 = vmatmul.mubr.bf16.gmra.mrb[0].mxu0 %v4092
          %v4134 = vpop.f32.mrb[0].mxu0
          %v4135 = vadd.f32 0.0, %v4134
          %v4136 = vpop.f32.mrb[0].mxu0
          %v4137 = vpop.f32.mrb[0].mxu0
          %v4138 = vadd.f32 0.0, %v4137
          %v4139 = vpop.f32.mrb[0].mxu0
          %4140 = vdwg.mxu0
          %v4141 = vmul.f32 %v4135, %v793
          %v4142 = vmul.f32 %v4138, %v796
          %v4143 = vsel %vm701, %v4141, 0.0
          %v4144 = vrot.slane %v4143, 4
          %v4145 = vadd.f32 %v4143, %v4144
          %v4146 = vrot.slane %v4145, 2
          %v4147 = vadd.f32 %v4145, %v4146
          %v4148 = vrot.slane %v4147, 1
          %v4149 = vadd.f32 %v4147, %v4148
          %v4150 = vsel %vm701, %v4142, 0.0
          %v4151 = vrot.slane %v4150, 4
          %v4152 = vadd.f32 %v4150, %v4151
          %v4153 = vrot.slane %v4152, 2
          %v4154 = vadd.f32 %v4152, %v4153
          %v4155 = vrot.slane %v4154, 1
          %v4156 = vadd.f32 %v4154, %v4155
          %v4157 = vpack.c.bf16 %v4149, %v4149
          %v4158 = vpack.c.bf16 %v4156, %v4156
          %v4159 = vld [vmem:[%s608] sm:$0xf]
          %v4160 = vld [vmem:[%s608 + $0x4] sm:$0xf]
          %v4161 = vld [vmem:[%s608 + $0x8] sm:$0x3]
          %v4162 = vld [vmem:[%s611] sm:$0x1]
          %v4164 = vlaneseq
          %v4165 = vshrl.u32 %v4164, 7
          %v4166 = vsub.s32 0, %v4165
          %v4167 = vrot.slane %v4162, %v4166
          %v4171 = vunpack.c.l.b16 %v4157
          %v4172 = vunpack.c.l.b16 %v4158
          %vm4173 = vcmask 1041409
          %v4174 = vsel %vm4173, %v4172, %v4171
          %v4175 = vpack.c.b16 %v4174, %v4174
          %v4179 = vunpack.c.l.b16 %v4159
          %v4180 = vunpack.c.l.b16 %v4160
          %v4181 = vunpack.c.l.b16 %v4161
          %v4182 = vpack.c.b16 %v4180, %v4179
          %v4183 = vpack.c.b16 %v4181, %v4181
          %v4186 = vsel %vm701, %v4175, 0
          %v4189 = vsel %vm705, %v4183, 0
          %4191 = vmatprep.subr.bf16.mxu0 0
          %4192 = vmatpush1.bf16.msra.mxu0 %v4182
          %4193 = vmatprep.subr.bf16.mxu0 0
          %4194 = vmatpush1.bf16.msra.mxu0 %v4189
          %4195 = vmatprep.subr.bf16.mxu0 0
          %4196 = vmatpush1.bf16.msra.mxu0 0
          %4197 = vmatprep.subr.bf16.mxu0 0
          %4198 = vmatpush1.bf16.msra.mxu0 0
          %4199 = vmatprep.subr.bf16.mxu0 0
          %4200 = vmatpush1.bf16.msra.mxu0 0
          %4201 = vmatprep.subr.bf16.mxu0 0
          %4202 = vmatpush1.bf16.msra.mxu0 0
          %4203 = vmatprep.subr.bf16.mxu0 0
          %4204 = vmatpush1.bf16.msra.mxu0 0
          %4205 = vmatprep.subr.bf16.mxu0 0
          %4206 = vmatpush1.bf16.msra.mxu0 0
          %4207 = vmatprep.subr.bf16.mxu0 0
          %4208 = vmatpush1.bf16.msra.mxu0 0
          %4209 = vmatprep.subr.bf16.mxu0 0
          %4210 = vmatpush1.bf16.msra.mxu0 0
          %4211 = vmatprep.subr.bf16.mxu0 0
          %4212 = vmatpush1.bf16.msra.mxu0 0
          %4213 = vmatprep.subr.bf16.mxu0 0
          %4214 = vmatpush1.bf16.msra.mxu0 0
          %4215 = vmatprep.subr.bf16.mxu0 0
          %4216 = vmatpush1.bf16.msra.mxu0 0
          %4217 = vmatprep.subr.bf16.mxu0 0
          %4218 = vmatpush1.bf16.msra.mxu0 0
          %4219 = vmatprep.subr.bf16.mxu0 0
          %4220 = vmatpush1.bf16.msra.mxu0 0
          %4221 = vmatprep.subr.bf16.mxu0 0
          %4222 = vmatpush1.bf16.msra.mxu0 0
          %4223 = vmatprep.mubr.bf16.mxu0 0
          %4224 = vmatmul.mubr.bf16.gmra.mrb[0].mxu0 %v4186
          %v4225 = vpop.f32.mrb[0].mxu0
          %v4226 = vadd.f32 %v4167, %v4225
          %v4227 = vpop.f32.mrb[0].mxu0
          %v4228 = vpop.f32.mrb[0].mxu0
          %v4229 = vpop.f32.mrb[0].mxu0
          %4230 = vdwg.mxu0
          %v4232 = vrot.slane %v4226, 1
          %v4233 = vrot.slane %v4226, 2
          %v4236 = vadd.f32 %v651, %v4232
          %v4237 = vadd.f32 %v652, %v4233
          %v4238 = vld [vmem:[%s615] sm:$0x1]
          %v4239 = vld [vmem:[%s619] sm:$0x1]
          %v4242 = vrot.slane %v4237, 7
          %vm4245 = vcmask 162823
          %v4246 = vsel %vm4245, %v4236, 0.0
          %4247 = vadd.xlane.f32.xlu0 %v4246
          %v4248 = vpop.xlane.xlu0 %4247
          %vm4249 = vcmask 155648
          %v4250 = vsel %vm4249, %v4242, 0.0
          %4251 = vadd.xlane.f32.xlu0 %v4250
          %v4252 = vpop.xlane.xlu0 %4251
          %v4253 = vrcp.pop 20.0
          %v4254 = vmul.f32 %v4248, %v4253
          %v4255 = vmul.f32 %v4252, %v4253
          %v4258 = vrot.slane %v4255, 1
          %v4261 = vsub.f32 %v4236, %v4254
          %v4262 = vsub.f32 %v4237, %v4258
          %v4263 = vmul.f32 %v4261, %v4261
          %v4264 = vmul.f32 %v4262, %v4262
          %v4267 = vrot.slane %v4264, 7
          %v4270 = vsel %vm4245, %v4263, 0.0
          %4271 = vadd.xlane.f32.xlu0 %v4270
          %v4272 = vpop.xlane.xlu0 %4271
          %v4273 = vsel %vm4249, %v4267, 0.0
          %4274 = vadd.xlane.f32.xlu0 %v4273
          %v4275 = vpop.xlane.xlu0 %4274
          %v4276 = vmul.f32 %v4272, %v4253
          %v4277 = vmul.f32 %v4275, %v4253
          %v4278 = vadd.f32 %v4276, 1e-05
          %v4279 = vadd.f32 %v4277, 1e-05
          %v4280 = vrsqrt.pop %v4278
          %v4281 = vrsqrt.pop %v4279
          %v4284 = vrot.slane %v4281, 1
          %v4287 = vmul.f32 %v4261, %v4280
          %v4288 = vmul.f32 %v4262, %v4284
          %v4289 = vlaneseq
          %v4290 = vshrl.u32 %v4289, 7
          %v4291 = vsub.s32 0, %v4290
          %v4292 = vrot.slane %v4238, %v4291
          %v4293 = vmul.f32 %v4287, %v4292
          %v4294 = vmul.f32 %v4288, %v4292
          %v4295 = vlaneseq
          %v4296 = vshrl.u32 %v4295, 7
          %v4297 = vsub.s32 0, %v4296
          %v4298 = vrot.slane %v4239, %v4297
          %v4299 = vadd.f32 %v4293, %v4298
          %v4300 = vadd.f32 %v4294, %v4298
          %v4301 = vpack.c.bf16 %v4299, %v4299
          %v4302 = vpack.c.bf16 %v4300, %v4300
          %v4303 = vld [vmem:[%s624] sm:$0xff]
          %v4304 = vld [vmem:[%s624 + $0x8] sm:$0xff]
          %v4305 = vld [vmem:[%s624 + $0x10] sm:$0xff]
          %v4306 = vld [vmem:[%s624 + $0x18] sm:$0xff]
          %v4307 = vld [vmem:[%s624 + $0x20] sm:$0xff]
          %v4308 = vld [vmem:[%s624 + $0x28] sm:$0xff]
          %v4309 = vld [vmem:[%s624 + $0x30] sm:$0xff]
          %v4310 = vld [vmem:[%s624 + $0x38] sm:$0xff]
          %v4311 = vld [vmem:[%s624 + $0x40] sm:$0xff]
          %v4312 = vld [vmem:[%s624 + $0x48] sm:$0xff]
          %v4313 = vld [vmem:[%s624 + $0x50] sm:$0xff]
          %v4314 = vld [vmem:[%s624 + $0x58] sm:$0xff]
          %v4315 = vld [vmem:[%s624 + $0x60] sm:$0xff]
          %v4316 = vld [vmem:[%s624 + $0x68] sm:$0xff]
          %v4317 = vld [vmem:[%s624 + $0x70] sm:$0xff]
          %v4318 = vld [vmem:[%s624 + $0x78] sm:$0xff]
          %v4319 = vld [vmem:[%s624 + $0x80] sm:$0x33]
          %v4320 = vld [vmem:[%s624 + $0x88] sm:$0x33]
          %v4321 = vld [vmem:[%s624 + $0x90] sm:$0x33]
          %v4322 = vld [vmem:[%s624 + $0x98] sm:$0x33]
          %v4323 = vld [vmem:[%s624 + $0xa0] sm:$0x33]
          %v4324 = vld [vmem:[%s624 + $0xa8] sm:$0x33]
          %v4325 = vld [vmem:[%s624 + $0xb0] sm:$0x33]
          %v4326 = vld [vmem:[%s624 + $0xb8] sm:$0x33]
          %v4327 = vld [vmem:[%s628] sm:$0xff]
          %v4328 = vld [vmem:[%s628 + $0x8] sm:$0xff]
          %v4331 = vlaneseq
          %v4332 = vshrl.u32 %v4331, 7
          %v4333 = vsub.s32 0, %v4332
          %v4334 = vrot.slane %v4327, %v4333
          %v4335 = vlaneseq
          %v4336 = vshrl.u32 %v4335, 7
          %v4337 = vsub.s32 1, %v4336
          %v4338 = vrot.slane %v4327, %v4337
          %v4339 = vlaneseq
          %v4340 = vshrl.u32 %v4339, 7
          %v4341 = vsub.s32 2, %v4340
          %v4342 = vrot.slane %v4327, %v4341
          %v4343 = vlaneseq
          %v4344 = vshrl.u32 %v4343, 7
          %v4345 = vsub.s32 3, %v4344
          %v4346 = vrot.slane %v4327, %v4345
          %v4347 = vlaneseq
          %v4348 = vshrl.u32 %v4347, 7
          %v4349 = vsub.s32 4, %v4348
          %v4350 = vrot.slane %v4327, %v4349
          %v4351 = vlaneseq
          %v4352 = vshrl.u32 %v4351, 7
          %v4353 = vsub.s32 5, %v4352
          %v4354 = vrot.slane %v4327, %v4353
          %v4355 = vlaneseq
          %v4356 = vshrl.u32 %v4355, 7
          %v4357 = vsub.s32 6, %v4356
          %v4358 = vrot.slane %v4327, %v4357
          %v4359 = vlaneseq
          %v4360 = vshrl.u32 %v4359, 7
          %v4361 = vsub.s32 7, %v4360
          %v4362 = vrot.slane %v4327, %v4361
          %v4363 = vlaneseq
          %v4364 = vshrl.u32 %v4363, 7
          %v4365 = vsub.s32 0, %v4364
          %v4366 = vrot.slane %v4328, %v4365
          %v4367 = vlaneseq
          %v4368 = vshrl.u32 %v4367, 7
          %v4369 = vsub.s32 1, %v4368
          %v4370 = vrot.slane %v4328, %v4369
          %v4371 = vlaneseq
          %v4372 = vshrl.u32 %v4371, 7
          %v4373 = vsub.s32 2, %v4372
          %v4374 = vrot.slane %v4328, %v4373
          %v4375 = vlaneseq
          %v4376 = vshrl.u32 %v4375, 7
          %v4377 = vsub.s32 3, %v4376
          %v4378 = vrot.slane %v4328, %v4377
          %v4379 = vlaneseq
          %v4380 = vshrl.u32 %v4379, 7
          %v4381 = vsub.s32 4, %v4380
          %v4382 = vrot.slane %v4328, %v4381
          %v4383 = vlaneseq
          %v4384 = vshrl.u32 %v4383, 7
          %v4385 = vsub.s32 5, %v4384
          %v4386 = vrot.slane %v4328, %v4385
          %v4387 = vlaneseq
          %v4388 = vshrl.u32 %v4387, 7
          %v4389 = vsub.s32 6, %v4388
          %v4390 = vrot.slane %v4328, %v4389
          %v4391 = vlaneseq
          %v4392 = vshrl.u32 %v4391, 7
          %v4393 = vsub.s32 7, %v4392
          %v4394 = vrot.slane %v4328, %v4393
          %v4413 = vunpack.c.l.b16 %v4301
          %v4414 = vunpack.c.l.b16 %v4302
          %v4415 = vrot.slane %v4413, 7
          %v4416 = vrot.slane %v4414, 6
          %v4417 = vsel %vm4173, %v4416, %v4415
          %v4418 = vpack.c.b16 %v4417, %v4417
          %v4443 = vunpack.c.l.b16 %v4303
          %v4444 = vunpack.c.h.b16 %v4303
          %v4445 = vunpack.c.l.b16 %v4304
          %v4446 = vunpack.c.h.b16 %v4304
          %v4447 = vunpack.c.l.b16 %v4305
          %v4448 = vunpack.c.h.b16 %v4305
          %v4449 = vunpack.c.l.b16 %v4306
          %v4450 = vunpack.c.h.b16 %v4306
          %v4451 = vunpack.c.l.b16 %v4307
          %v4452 = vunpack.c.h.b16 %v4307
          %v4453 = vunpack.c.l.b16 %v4308
          %v4454 = vunpack.c.h.b16 %v4308
          %v4455 = vunpack.c.l.b16 %v4309
          %v4456 = vunpack.c.h.b16 %v4309
          %v4457 = vunpack.c.l.b16 %v4310
          %v4458 = vunpack.c.h.b16 %v4310
          %v4459 = vunpack.c.l.b16 %v4311
          %v4460 = vunpack.c.h.b16 %v4311
          %v4461 = vunpack.c.l.b16 %v4312
          %v4462 = vunpack.c.h.b16 %v4312
          %v4463 = vunpack.c.l.b16 %v4313
          %v4464 = vunpack.c.h.b16 %v4313
          %v4465 = vunpack.c.l.b16 %v4314
          %v4466 = vunpack.c.h.b16 %v4314
          %v4467 = vunpack.c.l.b16 %v4315
          %v4468 = vunpack.c.h.b16 %v4315
          %v4469 = vunpack.c.l.b16 %v4316
          %v4470 = vunpack.c.h.b16 %v4316
          %v4471 = vunpack.c.l.b16 %v4317
          %v4472 = vunpack.c.h.b16 %v4317
          %v4473 = vunpack.c.l.b16 %v4318
          %v4474 = vunpack.c.h.b16 %v4318
          %v4475 = vunpack.c.l.b16 %v4319
          %v4476 = vunpack.c.h.b16 %v4319
          %v4477 = vunpack.c.l.b16 %v4320
          %v4478 = vunpack.c.h.b16 %v4320
          %v4479 = vunpack.c.l.b16 %v4321
          %v4480 = vunpack.c.h.b16 %v4321
          %v4481 = vunpack.c.l.b16 %v4322
          %v4482 = vunpack.c.h.b16 %v4322
          %v4483 = vunpack.c.l.b16 %v4323
          %v4484 = vunpack.c.h.b16 %v4323
          %v4485 = vunpack.c.l.b16 %v4324
          %v4486 = vunpack.c.h.b16 %v4324
          %v4487 = vunpack.c.l.b16 %v4325
          %v4488 = vunpack.c.h.b16 %v4325
          %v4489 = vunpack.c.l.b16 %v4326
          %v4490 = vunpack.c.h.b16 %v4326
          %v4491 = vpack.c.b16 %v4459, %v4443
          %v4492 = vpack.c.b16 %v4460, %v4444
          %v4493 = vpack.c.b16 %v4461, %v4445
          %v4494 = vpack.c.b16 %v4462, %v4446
          %v4495 = vpack.c.b16 %v4463, %v4447
          %v4496 = vpack.c.b16 %v4464, %v4448
          %v4497 = vpack.c.b16 %v4465, %v4449
          %v4498 = vpack.c.b16 %v4466, %v4450
          %v4499 = vpack.c.b16 %v4467, %v4451
          %v4500 = vpack.c.b16 %v4468, %v4452
          %v4501 = vpack.c.b16 %v4469, %v4453
          %v4502 = vpack.c.b16 %v4470, %v4454
          %v4503 = vpack.c.b16 %v4471, %v4455
          %v4504 = vpack.c.b16 %v4472, %v4456
          %v4505 = vpack.c.b16 %v4473, %v4457
          %v4506 = vpack.c.b16 %v4474, %v4458
          %v4507 = vpack.c.b16 %v4475, %v4475
          %v4508 = vpack.c.b16 %v4476, %v4476
          %v4509 = vpack.c.b16 %v4477, %v4477
          %v4510 = vpack.c.b16 %v4478, %v4478
          %v4511 = vpack.c.b16 %v4479, %v4479
          %v4512 = vpack.c.b16 %v4480, %v4480
          %v4513 = vpack.c.b16 %v4481, %v4481
          %v4514 = vpack.c.b16 %v4482, %v4482
          %v4515 = vpack.c.b16 %v4483, %v4483
          %v4516 = vpack.c.b16 %v4484, %v4484
          %v4517 = vpack.c.b16 %v4485, %v4485
          %v4518 = vpack.c.b16 %v4486, %v4486
          %v4519 = vpack.c.b16 %v4487, %v4487
          %v4520 = vpack.c.b16 %v4488, %v4488
          %v4521 = vpack.c.b16 %v4489, %v4489
          %v4522 = vpack.c.b16 %v4490, %v4490
          %v4540 = vsel %vm701, %v4418, 0
          %v4543 = vsel %vm705, %v4507, 0
          %v4546 = vsel %vm705, %v4508, 0
          %v4549 = vsel %vm705, %v4509, 0
          %v4552 = vsel %vm705, %v4510, 0
          %v4555 = vsel %vm705, %v4511, 0
          %v4558 = vsel %vm705, %v4512, 0
          %v4561 = vsel %vm705, %v4513, 0
          %v4564 = vsel %vm705, %v4514, 0
          %v4567 = vsel %vm705, %v4515, 0
          %v4570 = vsel %vm705, %v4516, 0
          %v4573 = vsel %vm705, %v4517, 0
          %v4576 = vsel %vm705, %v4518, 0
          %v4579 = vsel %vm705, %v4519, 0
          %v4582 = vsel %vm705, %v4520, 0
          %v4585 = vsel %vm705, %v4521, 0
          %v4588 = vsel %vm705, %v4522, 0
          %4590 = vmatprep.subr.bf16.mxu0 %v4492
          %4591 = vmatpush1.bf16.msra.mxu0 %v4491
          %4592 = vmatprep.subr.bf16.mxu0 %v4546
          %4593 = vmatpush1.bf16.msra.mxu0 %v4543
          %4594 = vmatprep.subr.bf16.mxu0 0
          %4595 = vmatpush1.bf16.msra.mxu0 0
          %4596 = vmatprep.subr.bf16.mxu0 0
          %4597 = vmatpush1.bf16.msra.mxu0 0
          %4598 = vmatprep.subr.bf16.mxu0 0
          %4599 = vmatpush1.bf16.msra.mxu0 0
          %4600 = vmatprep.subr.bf16.mxu0 0
          %4601 = vmatpush1.bf16.msra.mxu0 0
          %4602 = vmatprep.subr.bf16.mxu0 0
          %4603 = vmatpush1.bf16.msra.mxu0 0
          %4604 = vmatprep.subr.bf16.mxu0 0
          %4605 = vmatpush1.bf16.msra.mxu0 0
          %4606 = vmatprep.subr.bf16.mxu0 0
          %4607 = vmatpush1.bf16.msra.mxu0 0
          %4608 = vmatprep.subr.bf16.mxu0 0
          %4609 = vmatpush1.bf16.msra.mxu0 0
          %4610 = vmatprep.subr.bf16.mxu0 0
          %4611 = vmatpush1.bf16.msra.mxu0 0
          %4612 = vmatprep.subr.bf16.mxu0 0
          %4613 = vmatpush1.bf16.msra.mxu0 0
          %4614 = vmatprep.subr.bf16.mxu0 0
          %4615 = vmatpush1.bf16.msra.mxu0 0
          %4616 = vmatprep.subr.bf16.mxu0 0
          %4617 = vmatpush1.bf16.msra.mxu0 0
          %4618 = vmatprep.subr.bf16.mxu0 0
          %4619 = vmatpush1.bf16.msra.mxu0 0
          %4620 = vmatprep.subr.bf16.mxu0 0
          %4621 = vmatpush1.bf16.msra.mxu0 0
          %4622 = vmatprep.mubr.bf16.mxu0 0
          %4623 = vmatmul.mubr.bf16.gmra.mrb[0].mxu0 %v4540
          %v4624 = vpop.f32.mrb[0].mxu0
          %v4625 = vadd.f32 %v4334, %v4624
          %v4626 = vpop.f32.mrb[0].mxu0
          %v4627 = vadd.f32 %v4338, %v4626
          %v4628 = vpop.f32.mrb[0].mxu0
          %v4629 = vpop.f32.mrb[0].mxu0
          %4630 = vdwg.mxu0
          %4631 = vmatprep.subr.bf16.mxu0 %v4494
          %4632 = vmatpush1.bf16.msra.mxu0 %v4493
          %4633 = vmatprep.subr.bf16.mxu0 %v4552
          %4634 = vmatpush1.bf16.msra.mxu0 %v4549
          %4635 = vmatprep.subr.bf16.mxu0 0
          %4636 = vmatpush1.bf16.msra.mxu0 0
          %4637 = vmatprep.subr.bf16.mxu0 0
          %4638 = vmatpush1.bf16.msra.mxu0 0
          %4639 = vmatprep.subr.bf16.mxu0 0
          %4640 = vmatpush1.bf16.msra.mxu0 0
          %4641 = vmatprep.subr.bf16.mxu0 0
          %4642 = vmatpush1.bf16.msra.mxu0 0
          %4643 = vmatprep.subr.bf16.mxu0 0
          %4644 = vmatpush1.bf16.msra.mxu0 0
          %4645 = vmatprep.subr.bf16.mxu0 0
          %4646 = vmatpush1.bf16.msra.mxu0 0
          %4647 = vmatprep.subr.bf16.mxu0 0
          %4648 = vmatpush1.bf16.msra.mxu0 0
          %4649 = vmatprep.subr.bf16.mxu0 0
          %4650 = vmatpush1.bf16.msra.mxu0 0
          %4651 = vmatprep.subr.bf16.mxu0 0
          %4652 = vmatpush1.bf16.msra.mxu0 0
          %4653 = vmatprep.subr.bf16.mxu0 0
          %4654 = vmatpush1.bf16.msra.mxu0 0
          %4655 = vmatprep.subr.bf16.mxu0 0
          %4656 = vmatpush1.bf16.msra.mxu0 0
          %4657 = vmatprep.subr.bf16.mxu0 0
          %4658 = vmatpush1.bf16.msra.mxu0 0
          %4659 = vmatprep.subr.bf16.mxu0 0
          %4660 = vmatpush1.bf16.msra.mxu0 0
          %4661 = vmatprep.subr.bf16.mxu0 0
          %4662 = vmatpush1.bf16.msra.mxu0 0
          %4663 = vmatprep.mubr.bf16.mxu0 0
          %4664 = vmatmul.mubr.bf16.gmra.mrb[0].mxu0 %v4540
          %v4665 = vpop.f32.mrb[0].mxu0
          %v4666 = vadd.f32 %v4342, %v4665
          %v4667 = vpop.f32.mrb[0].mxu0
          %v4668 = vadd.f32 %v4346, %v4667
          %v4669 = vpop.f32.mrb[0].mxu0
          %v4670 = vpop.f32.mrb[0].mxu0
          %4671 = vdwg.mxu0
          %4672 = vmatprep.subr.bf16.mxu0 %v4496
          %4673 = vmatpush1.bf16.msra.mxu0 %v4495
          %4674 = vmatprep.subr.bf16.mxu0 %v4558
          %4675 = vmatpush1.bf16.msra.mxu0 %v4555
          %4676 = vmatprep.subr.bf16.mxu0 0
          %4677 = vmatpush1.bf16.msra.mxu0 0
          %4678 = vmatprep.subr.bf16.mxu0 0
          %4679 = vmatpush1.bf16.msra.mxu0 0
          %4680 = vmatprep.subr.bf16.mxu0 0
          %4681 = vmatpush1.bf16.msra.mxu0 0
          %4682 = vmatprep.subr.bf16.mxu0 0
          %4683 = vmatpush1.bf16.msra.mxu0 0
          %4684 = vmatprep.subr.bf16.mxu0 0
          %4685 = vmatpush1.bf16.msra.mxu0 0
          %4686 = vmatprep.subr.bf16.mxu0 0
          %4687 = vmatpush1.bf16.msra.mxu0 0
          %4688 = vmatprep.subr.bf16.mxu0 0
          %4689 = vmatpush1.bf16.msra.mxu0 0
          %4690 = vmatprep.subr.bf16.mxu0 0
          %4691 = vmatpush1.bf16.msra.mxu0 0
          %4692 = vmatprep.subr.bf16.mxu0 0
          %4693 = vmatpush1.bf16.msra.mxu0 0
          %4694 = vmatprep.subr.bf16.mxu0 0
          %4695 = vmatpush1.bf16.msra.mxu0 0
          %4696 = vmatprep.subr.bf16.mxu0 0
          %4697 = vmatpush1.bf16.msra.mxu0 0
          %4698 = vmatprep.subr.bf16.mxu0 0
          %4699 = vmatpush1.bf16.msra.mxu0 0
          %4700 = vmatprep.subr.bf16.mxu0 0
          %4701 = vmatpush1.bf16.msra.mxu0 0
          %4702 = vmatprep.subr.bf16.mxu0 0
          %4703 = vmatpush1.bf16.msra.mxu0 0
          %4704 = vmatprep.mubr.bf16.mxu0 0
          %4705 = vmatmul.mubr.bf16.gmra.mrb[0].mxu0 %v4540
          %v4706 = vpop.f32.mrb[0].mxu0
          %v4707 = vadd.f32 %v4350, %v4706
          %v4708 = vpop.f32.mrb[0].mxu0
          %v4709 = vadd.f32 %v4354, %v4708
          %v4710 = vpop.f32.mrb[0].mxu0
          %v4711 = vpop.f32.mrb[0].mxu0
          %4712 = vdwg.mxu0
          %4713 = vmatprep.subr.bf16.mxu0 %v4498
          %4714 = vmatpush1.bf16.msra.mxu0 %v4497
          %4715 = vmatprep.subr.bf16.mxu0 %v4564
          %4716 = vmatpush1.bf16.msra.mxu0 %v4561
          %4717 = vmatprep.subr.bf16.mxu0 0
          %4718 = vmatpush1.bf16.msra.mxu0 0
          %4719 = vmatprep.subr.bf16.mxu0 0
          %4720 = vmatpush1.bf16.msra.mxu0 0
          %4721 = vmatprep.subr.bf16.mxu0 0
          %4722 = vmatpush1.bf16.msra.mxu0 0
          %4723 = vmatprep.subr.bf16.mxu0 0
          %4724 = vmatpush1.bf16.msra.mxu0 0
          %4725 = vmatprep.subr.bf16.mxu0 0
          %4726 = vmatpush1.bf16.msra.mxu0 0
          %4727 = vmatprep.subr.bf16.mxu0 0
          %4728 = vmatpush1.bf16.msra.mxu0 0
          %4729 = vmatprep.subr.bf16.mxu0 0
          %4730 = vmatpush1.bf16.msra.mxu0 0
          %4731 = vmatprep.subr.bf16.mxu0 0
          %4732 = vmatpush1.bf16.msra.mxu0 0
          %4733 = vmatprep.subr.bf16.mxu0 0
          %4734 = vmatpush1.bf16.msra.mxu0 0
          %4735 = vmatprep.subr.bf16.mxu0 0
          %4736 = vmatpush1.bf16.msra.mxu0 0
          %4737 = vmatprep.subr.bf16.mxu0 0
          %4738 = vmatpush1.bf16.msra.mxu0 0
          %4739 = vmatprep.subr.bf16.mxu0 0
          %4740 = vmatpush1.bf16.msra.mxu0 0
          %4741 = vmatprep.subr.bf16.mxu0 0
          %4742 = vmatpush1.bf16.msra.mxu0 0
          %4743 = vmatprep.subr.bf16.mxu0 0
          %4744 = vmatpush1.bf16.msra.mxu0 0
          %4745 = vmatprep.mubr.bf16.mxu0 0
          %4746 = vmatmul.mubr.bf16.gmra.mrb[0].mxu0 %v4540
          %v4747 = vpop.f32.mrb[0].mxu0
          %v4748 = vadd.f32 %v4358, %v4747
          %v4749 = vpop.f32.mrb[0].mxu0
          %v4750 = vadd.f32 %v4362, %v4749
          %v4751 = vpop.f32.mrb[0].mxu0
          %v4752 = vpop.f32.mrb[0].mxu0
          %4753 = vdwg.mxu0
          %4754 = vmatprep.subr.bf16.mxu0 %v4500
          %4755 = vmatpush1.bf16.msra.mxu0 %v4499
          %4756 = vmatprep.subr.bf16.mxu0 %v4570
          %4757 = vmatpush1.bf16.msra.mxu0 %v4567
          %4758 = vmatprep.subr.bf16.mxu0 0
          %4759 = vmatpush1.bf16.msra.mxu0 0
          %4760 = vmatprep.subr.bf16.mxu0 0
          %4761 = vmatpush1.bf16.msra.mxu0 0
          %4762 = vmatprep.subr.bf16.mxu0 0
          %4763 = vmatpush1.bf16.msra.mxu0 0
          %4764 = vmatprep.subr.bf16.mxu0 0
          %4765 = vmatpush1.bf16.msra.mxu0 0
          %4766 = vmatprep.subr.bf16.mxu0 0
          %4767 = vmatpush1.bf16.msra.mxu0 0
          %4768 = vmatprep.subr.bf16.mxu0 0
          %4769 = vmatpush1.bf16.msra.mxu0 0
          %4770 = vmatprep.subr.bf16.mxu0 0
          %4771 = vmatpush1.bf16.msra.mxu0 0
          %4772 = vmatprep.subr.bf16.mxu0 0
          %4773 = vmatpush1.bf16.msra.mxu0 0
          %4774 = vmatprep.subr.bf16.mxu0 0
          %4775 = vmatpush1.bf16.msra.mxu0 0
          %4776 = vmatprep.subr.bf16.mxu0 0
          %4777 = vmatpush1.bf16.msra.mxu0 0
          %4778 = vmatprep.subr.bf16.mxu0 0
          %4779 = vmatpush1.bf16.msra.mxu0 0
          %4780 = vmatprep.subr.bf16.mxu0 0
          %4781 = vmatpush1.bf16.msra.mxu0 0
          %4782 = vmatprep.subr.bf16.mxu0 0
          %4783 = vmatpush1.bf16.msra.mxu0 0
          %4784 = vmatprep.subr.bf16.mxu0 0
          %4785 = vmatpush1.bf16.msra.mxu0 0
          %4786 = vmatprep.mubr.bf16.mxu0 0
          %4787 = vmatmul.mubr.bf16.gmra.mrb[0].mxu0 %v4540
          %v4788 = vpop.f32.mrb[0].mxu0
          %v4789 = vadd.f32 %v4366, %v4788
          %v4790 = vpop.f32.mrb[0].mxu0
          %v4791 = vadd.f32 %v4370, %v4790
          %v4792 = vpop.f32.mrb[0].mxu0
          %v4793 = vpop.f32.mrb[0].mxu0
          %4794 = vdwg.mxu0
          %4795 = vmatprep.subr.bf16.mxu0 %v4502
          %4796 = vmatpush1.bf16.msra.mxu0 %v4501
          %4797 = vmatprep.subr.bf16.mxu0 %v4576
          %4798 = vmatpush1.bf16.msra.mxu0 %v4573
          %4799 = vmatprep.subr.bf16.mxu0 0
          %4800 = vmatpush1.bf16.msra.mxu0 0
          %4801 = vmatprep.subr.bf16.mxu0 0
          %4802 = vmatpush1.bf16.msra.mxu0 0
          %4803 = vmatprep.subr.bf16.mxu0 0
          %4804 = vmatpush1.bf16.msra.mxu0 0
          %4805 = vmatprep.subr.bf16.mxu0 0
          %4806 = vmatpush1.bf16.msra.mxu0 0
          %4807 = vmatprep.subr.bf16.mxu0 0
          %4808 = vmatpush1.bf16.msra.mxu0 0
          %4809 = vmatprep.subr.bf16.mxu0 0
          %4810 = vmatpush1.bf16.msra.mxu0 0
          %4811 = vmatprep.subr.bf16.mxu0 0
          %4812 = vmatpush1.bf16.msra.mxu0 0
          %4813 = vmatprep.subr.bf16.mxu0 0
          %4814 = vmatpush1.bf16.msra.mxu0 0
          %4815 = vmatprep.subr.bf16.mxu0 0
          %4816 = vmatpush1.bf16.msra.mxu0 0
          %4817 = vmatprep.subr.bf16.mxu0 0
          %4818 = vmatpush1.bf16.msra.mxu0 0
          %4819 = vmatprep.subr.bf16.mxu0 0
          %4820 = vmatpush1.bf16.msra.mxu0 0
          %4821 = vmatprep.subr.bf16.mxu0 0
          %4822 = vmatpush1.bf16.msra.mxu0 0
          %4823 = vmatprep.subr.bf16.mxu0 0
          %4824 = vmatpush1.bf16.msra.mxu0 0
          %4825 = vmatprep.subr.bf16.mxu0 0
          %4826 = vmatpush1.bf16.msra.mxu0 0
          %4827 = vmatprep.mubr.bf16.mxu0 0
          %4828 = vmatmul.mubr.bf16.gmra.mrb[0].mxu0 %v4540
          %v4829 = vpop.f32.mrb[0].mxu0
          %v4830 = vadd.f32 %v4374, %v4829
          %v4831 = vpop.f32.mrb[0].mxu0
          %v4832 = vadd.f32 %v4378, %v4831
          %v4833 = vpop.f32.mrb[0].mxu0
          %v4834 = vpop.f32.mrb[0].mxu0
          %4835 = vdwg.mxu0
          %4836 = vmatprep.subr.bf16.mxu0 %v4504
          %4837 = vmatpush1.bf16.msra.mxu0 %v4503
          %4838 = vmatprep.subr.bf16.mxu0 %v4582
          %4839 = vmatpush1.bf16.msra.mxu0 %v4579
          %4840 = vmatprep.subr.bf16.mxu0 0
          %4841 = vmatpush1.bf16.msra.mxu0 0
          %4842 = vmatprep.subr.bf16.mxu0 0
          %4843 = vmatpush1.bf16.msra.mxu0 0
          %4844 = vmatprep.subr.bf16.mxu0 0
          %4845 = vmatpush1.bf16.msra.mxu0 0
          %4846 = vmatprep.subr.bf16.mxu0 0
          %4847 = vmatpush1.bf16.msra.mxu0 0
          %4848 = vmatprep.subr.bf16.mxu0 0
          %4849 = vmatpush1.bf16.msra.mxu0 0
          %4850 = vmatprep.subr.bf16.mxu0 0
          %4851 = vmatpush1.bf16.msra.mxu0 0
          %4852 = vmatprep.subr.bf16.mxu0 0
          %4853 = vmatpush1.bf16.msra.mxu0 0
          %4854 = vmatprep.subr.bf16.mxu0 0
          %4855 = vmatpush1.bf16.msra.mxu0 0
          %4856 = vmatprep.subr.bf16.mxu0 0
          %4857 = vmatpush1.bf16.msra.mxu0 0
          %4858 = vmatprep.subr.bf16.mxu0 0
          %4859 = vmatpush1.bf16.msra.mxu0 0
          %4860 = vmatprep.subr.bf16.mxu0 0
          %4861 = vmatpush1.bf16.msra.mxu0 0
          %4862 = vmatprep.subr.bf16.mxu0 0
          %4863 = vmatpush1.bf16.msra.mxu0 0
          %4864 = vmatprep.subr.bf16.mxu0 0
          %4865 = vmatpush1.bf16.msra.mxu0 0
          %4866 = vmatprep.subr.bf16.mxu0 0
          %4867 = vmatpush1.bf16.msra.mxu0 0
          %4868 = vmatprep.mubr.bf16.mxu0 0
          %4869 = vmatmul.mubr.bf16.gmra.mrb[0].mxu0 %v4540
          %v4870 = vpop.f32.mrb[0].mxu0
          %v4871 = vadd.f32 %v4382, %v4870
          %v4872 = vpop.f32.mrb[0].mxu0
          %v4873 = vadd.f32 %v4386, %v4872
          %v4874 = vpop.f32.mrb[0].mxu0
          %v4875 = vpop.f32.mrb[0].mxu0
          %4876 = vdwg.mxu0
          %4877 = vmatprep.subr.bf16.mxu0 %v4506
          %4878 = vmatpush1.bf16.msra.mxu0 %v4505
          %4879 = vmatprep.subr.bf16.mxu0 %v4588
          %4880 = vmatpush1.bf16.msra.mxu0 %v4585
          %4881 = vmatprep.subr.bf16.mxu0 0
          %4882 = vmatpush1.bf16.msra.mxu0 0
          %4883 = vmatprep.subr.bf16.mxu0 0
          %4884 = vmatpush1.bf16.msra.mxu0 0
          %4885 = vmatprep.subr.bf16.mxu0 0
          %4886 = vmatpush1.bf16.msra.mxu0 0
          %4887 = vmatprep.subr.bf16.mxu0 0
          %4888 = vmatpush1.bf16.msra.mxu0 0
          %4889 = vmatprep.subr.bf16.mxu0 0
          %4890 = vmatpush1.bf16.msra.mxu0 0
          %4891 = vmatprep.subr.bf16.mxu0 0
          %4892 = vmatpush1.bf16.msra.mxu0 0
          %4893 = vmatprep.subr.bf16.mxu0 0
          %4894 = vmatpush1.bf16.msra.mxu0 0
          %4895 = vmatprep.subr.bf16.mxu0 0
          %4896 = vmatpush1.bf16.msra.mxu0 0
          %4897 = vmatprep.subr.bf16.mxu0 0
          %4898 = vmatpush1.bf16.msra.mxu0 0
          %4899 = vmatprep.subr.bf16.mxu0 0
          %4900 = vmatpush1.bf16.msra.mxu0 0
          %4901 = vmatprep.subr.bf16.mxu0 0
          %4902 = vmatpush1.bf16.msra.mxu0 0
          %4903 = vmatprep.subr.bf16.mxu0 0
          %4904 = vmatpush1.bf16.msra.mxu0 0
          %4905 = vmatprep.subr.bf16.mxu0 0
          %4906 = vmatpush1.bf16.msra.mxu0 0
          %4907 = vmatprep.subr.bf16.mxu0 0
          %4908 = vmatpush1.bf16.msra.mxu0 0
          %4909 = vmatprep.mubr.bf16.mxu0 0
          %4910 = vmatmul.mubr.bf16.gmra.mrb[0].mxu0 %v4540
          %v4911 = vpop.f32.mrb[0].mxu0
          %v4912 = vadd.f32 %v4390, %v4911
          %v4913 = vpop.f32.mrb[0].mxu0
          %v4914 = vadd.f32 %v4394, %v4913
          %v4915 = vpop.f32.mrb[0].mxu0
          %v4916 = vpop.f32.mrb[0].mxu0
          %4917 = vdwg.mxu0
          %v4918 = vmax.f32 %v4625, 0.0
          %v4919 = vmax.f32 %v4627, 0.0
          %v4920 = vmax.f32 %v4666, 0.0
          %v4921 = vmax.f32 %v4668, 0.0
          %v4922 = vmax.f32 %v4707, 0.0
          %v4923 = vmax.f32 %v4709, 0.0
          %v4924 = vmax.f32 %v4748, 0.0
          %v4925 = vmax.f32 %v4750, 0.0
          %v4926 = vmax.f32 %v4789, 0.0
          %v4927 = vmax.f32 %v4791, 0.0
          %v4928 = vmax.f32 %v4830, 0.0
          %v4929 = vmax.f32 %v4832, 0.0
          %v4930 = vmax.f32 %v4871, 0.0
          %v4931 = vmax.f32 %v4873, 0.0
          %v4932 = vmax.f32 %v4912, 0.0
          %v4933 = vmax.f32 %v4914, 0.0
          %v4934 = vpack.c.bf16 %v4918, %v4918
          %v4935 = vpack.c.bf16 %v4919, %v4919
          %v4936 = vpack.c.bf16 %v4920, %v4920
          %v4937 = vpack.c.bf16 %v4921, %v4921
          %v4938 = vpack.c.bf16 %v4922, %v4922
          %v4939 = vpack.c.bf16 %v4923, %v4923
          %v4940 = vpack.c.bf16 %v4924, %v4924
          %v4941 = vpack.c.bf16 %v4925, %v4925
          %v4942 = vpack.c.bf16 %v4926, %v4926
          %v4943 = vpack.c.bf16 %v4927, %v4927
          %v4944 = vpack.c.bf16 %v4928, %v4928
          %v4945 = vpack.c.bf16 %v4929, %v4929
          %v4946 = vpack.c.bf16 %v4930, %v4930
          %v4947 = vpack.c.bf16 %v4931, %v4931
          %v4948 = vpack.c.bf16 %v4932, %v4932
          %v4949 = vpack.c.bf16 %v4933, %v4933
          %v4950 = vld [vmem:[%s633] sm:$0xf]
          %v4951 = vld [vmem:[%s633 + $0x4] sm:$0xf]
          %v4952 = vld [vmem:[%s633 + $0x8] sm:$0xf]
          %v4953 = vld [vmem:[%s633 + $0xc] sm:$0xf]
          %v4954 = vld [vmem:[%s633 + $0x10] sm:$0xf]
          %v4955 = vld [vmem:[%s633 + $0x14] sm:$0xf]
          %v4956 = vld [vmem:[%s633 + $0x18] sm:$0xf]
          %v4957 = vld [vmem:[%s633 + $0x1c] sm:$0xf]
          %v4958 = vld [vmem:[%s633 + $0x20] sm:$0xf]
          %v4959 = vld [vmem:[%s633 + $0x24] sm:$0xf]
          %v4960 = vld [vmem:[%s633 + $0x28] sm:$0xf]
          %v4961 = vld [vmem:[%s633 + $0x2c] sm:$0xf]
          %v4962 = vld [vmem:[%s633 + $0x30] sm:$0xf]
          %v4963 = vld [vmem:[%s633 + $0x34] sm:$0xf]
          %v4964 = vld [vmem:[%s633 + $0x38] sm:$0xf]
          %v4965 = vld [vmem:[%s633 + $0x3c] sm:$0xf]
          %v4966 = vld [vmem:[%s633 + $0x40] sm:$0xf]
          %v4967 = vld [vmem:[%s633 + $0x44] sm:$0xf]
          %v4968 = vld [vmem:[%s633 + $0x48] sm:$0xf]
          %v4969 = vld [vmem:[%s633 + $0x4c] sm:$0xf]
          %v4970 = vld [vmem:[%s633 + $0x50] sm:$0xf]
          %v4971 = vld [vmem:[%s633 + $0x54] sm:$0xf]
          %v4972 = vld [vmem:[%s633 + $0x58] sm:$0xf]
          %v4973 = vld [vmem:[%s633 + $0x5c] sm:$0xf]
          %v4974 = vld [vmem:[%s633 + $0x60] sm:$0xf]
          %v4975 = vld [vmem:[%s633 + $0x64] sm:$0xf]
          %v4976 = vld [vmem:[%s633 + $0x68] sm:$0xf]
          %v4977 = vld [vmem:[%s633 + $0x6c] sm:$0xf]
          %v4978 = vld [vmem:[%s633 + $0x70] sm:$0xf]
          %v4979 = vld [vmem:[%s633 + $0x74] sm:$0xf]
          %v4980 = vld [vmem:[%s633 + $0x78] sm:$0xf]
          %v4981 = vld [vmem:[%s633 + $0x7c] sm:$0xf]
          %v4982 = vld [vmem:[%s633 + $0x80] sm:$0xf]
          %v4983 = vld [vmem:[%s633 + $0x84] sm:$0xf]
          %v4984 = vld [vmem:[%s633 + $0x88] sm:$0xf]
          %v4985 = vld [vmem:[%s633 + $0x8c] sm:$0xf]
          %v4986 = vld [vmem:[%s633 + $0x90] sm:$0xf]
          %v4987 = vld [vmem:[%s633 + $0x94] sm:$0xf]
          %v4988 = vld [vmem:[%s633 + $0x98] sm:$0xf]
          %v4989 = vld [vmem:[%s633 + $0x9c] sm:$0xf]
          %v4990 = vld [vmem:[%s633 + $0xa0] sm:$0xf]
          %v4991 = vld [vmem:[%s633 + $0xa4] sm:$0xf]
          %v4992 = vld [vmem:[%s633 + $0xa8] sm:$0xf]
          %v4993 = vld [vmem:[%s633 + $0xac] sm:$0xf]
          %v4994 = vld [vmem:[%s633 + $0xb0] sm:$0xf]
          %v4995 = vld [vmem:[%s633 + $0xb4] sm:$0xf]
          %v4996 = vld [vmem:[%s633 + $0xb8] sm:$0xf]
          %v4997 = vld [vmem:[%s633 + $0xbc] sm:$0xf]
          %v4998 = vld [vmem:[%s633 + $0xc0] sm:$0xf]
          %v4999 = vld [vmem:[%s633 + $0xc4] sm:$0xf]
          %v5000 = vld [vmem:[%s633 + $0xc8] sm:$0xf]
          %v5001 = vld [vmem:[%s633 + $0xcc] sm:$0xf]
          %v5002 = vld [vmem:[%s633 + $0xd0] sm:$0xf]
          %v5003 = vld [vmem:[%s633 + $0xd4] sm:$0xf]
          %v5004 = vld [vmem:[%s633 + $0xd8] sm:$0xf]
          %v5005 = vld [vmem:[%s633 + $0xdc] sm:$0xf]
          %v5006 = vld [vmem:[%s633 + $0xe0] sm:$0xf]
          %v5007 = vld [vmem:[%s633 + $0xe4] sm:$0xf]
          %v5008 = vld [vmem:[%s633 + $0xe8] sm:$0xf]
          %v5009 = vld [vmem:[%s633 + $0xec] sm:$0xf]
          %v5010 = vld [vmem:[%s633 + $0xf0] sm:$0xf]
          %v5011 = vld [vmem:[%s633 + $0xf4] sm:$0xf]
          %v5012 = vld [vmem:[%s633 + $0xf8] sm:$0xf]
          %v5013 = vld [vmem:[%s633 + $0xfc] sm:$0xf]
          %v5014 = vld [vmem:[%s633 + $0x100] sm:$0xf]
          %v5015 = vld [vmem:[%s633 + $0x104] sm:$0xf]
          %v5016 = vld [vmem:[%s633 + $0x108] sm:$0xf]
          %v5017 = vld [vmem:[%s633 + $0x10c] sm:$0xf]
          %v5018 = vld [vmem:[%s633 + $0x110] sm:$0xf]
          %v5019 = vld [vmem:[%s633 + $0x114] sm:$0xf]
          %v5020 = vld [vmem:[%s633 + $0x118] sm:$0xf]
          %v5021 = vld [vmem:[%s633 + $0x11c] sm:$0xf]
          %v5022 = vld [vmem:[%s633 + $0x120] sm:$0xf]
          %v5023 = vld [vmem:[%s633 + $0x124] sm:$0xf]
          %v5024 = vld [vmem:[%s633 + $0x128] sm:$0xf]
          %v5025 = vld [vmem:[%s633 + $0x12c] sm:$0xf]
          %v5026 = vld [vmem:[%s633 + $0x130] sm:$0xf]
          %v5027 = vld [vmem:[%s633 + $0x134] sm:$0xf]
          %v5028 = vld [vmem:[%s633 + $0x138] sm:$0xf]
          %v5029 = vld [vmem:[%s633 + $0x13c] sm:$0xf]
          %v5030 = vld [vmem:[%s633 + $0x140] sm:$0xf]
          %v5031 = vld [vmem:[%s633 + $0x144] sm:$0xf]
          %v5032 = vld [vmem:[%s633 + $0x148] sm:$0xf]
          %v5033 = vld [vmem:[%s633 + $0x14c] sm:$0xf]
          %v5034 = vld [vmem:[%s633 + $0x150] sm:$0xf]
          %v5035 = vld [vmem:[%s633 + $0x154] sm:$0xf]
          %v5036 = vld [vmem:[%s633 + $0x158] sm:$0xf]
          %v5037 = vld [vmem:[%s633 + $0x15c] sm:$0xf]
          %v5038 = vld [vmem:[%s633 + $0x160] sm:$0xf]
          %v5039 = vld [vmem:[%s633 + $0x164] sm:$0xf]
          %v5040 = vld [vmem:[%s633 + $0x168] sm:$0xf]
          %v5041 = vld [vmem:[%s633 + $0x16c] sm:$0xf]
          %v5042 = vld [vmem:[%s633 + $0x170] sm:$0xf]
          %v5043 = vld [vmem:[%s633 + $0x174] sm:$0xf]
          %v5044 = vld [vmem:[%s633 + $0x178] sm:$0xf]
          %v5045 = vld [vmem:[%s633 + $0x17c] sm:$0xf]
          %v5046 = vld [vmem:[%s633 + $0x180] sm:$0xf]
          %v5047 = vld [vmem:[%s633 + $0x184] sm:$0xf]
          %v5048 = vld [vmem:[%s633 + $0x188] sm:$0xf]
          %v5049 = vld [vmem:[%s633 + $0x18c] sm:$0xf]
          %v5050 = vld [vmem:[%s633 + $0x190] sm:$0xf]
          %v5051 = vld [vmem:[%s633 + $0x194] sm:$0xf]
          %v5052 = vld [vmem:[%s633 + $0x198] sm:$0xf]
          %v5053 = vld [vmem:[%s633 + $0x19c] sm:$0xf]
          %v5054 = vld [vmem:[%s633 + $0x1a0] sm:$0xf]
          %v5055 = vld [vmem:[%s633 + $0x1a4] sm:$0xf]
          %v5056 = vld [vmem:[%s633 + $0x1a8] sm:$0xf]
          %v5057 = vld [vmem:[%s633 + $0x1ac] sm:$0xf]
          %v5058 = vld [vmem:[%s633 + $0x1b0] sm:$0xf]
          %v5059 = vld [vmem:[%s633 + $0x1b4] sm:$0xf]
          %v5060 = vld [vmem:[%s633 + $0x1b8] sm:$0xf]
          %v5061 = vld [vmem:[%s633 + $0x1bc] sm:$0xf]
          %v5062 = vld [vmem:[%s633 + $0x1c0] sm:$0xf]
          %v5063 = vld [vmem:[%s633 + $0x1c4] sm:$0xf]
          %v5064 = vld [vmem:[%s633 + $0x1c8] sm:$0xf]
          %v5065 = vld [vmem:[%s633 + $0x1cc] sm:$0xf]
          %v5066 = vld [vmem:[%s633 + $0x1d0] sm:$0xf]
          %v5067 = vld [vmem:[%s633 + $0x1d4] sm:$0xf]
          %v5068 = vld [vmem:[%s633 + $0x1d8] sm:$0xf]
          %v5069 = vld [vmem:[%s633 + $0x1dc] sm:$0xf]
          %v5070 = vld [vmem:[%s633 + $0x1e0] sm:$0xf]
          %v5071 = vld [vmem:[%s633 + $0x1e4] sm:$0xf]
          %v5072 = vld [vmem:[%s633 + $0x1e8] sm:$0xf]
          %v5073 = vld [vmem:[%s633 + $0x1ec] sm:$0xf]
          %v5074 = vld [vmem:[%s633 + $0x1f0] sm:$0xf]
          %v5075 = vld [vmem:[%s633 + $0x1f4] sm:$0xf]
          %v5076 = vld [vmem:[%s633 + $0x1f8] sm:$0xf]
          %v5077 = vld [vmem:[%s633 + $0x1fc] sm:$0xf]
          %v5078 = vld [vmem:[%s633 + $0x200] sm:$0xf]
          %v5079 = vld [vmem:[%s633 + $0x204] sm:$0xf]
          %v5080 = vld [vmem:[%s633 + $0x208] sm:$0xf]
          %v5081 = vld [vmem:[%s633 + $0x20c] sm:$0xf]
          %v5082 = vld [vmem:[%s633 + $0x210] sm:$0xf]
          %v5083 = vld [vmem:[%s633 + $0x214] sm:$0xf]
          %v5084 = vld [vmem:[%s633 + $0x218] sm:$0xf]
          %v5085 = vld [vmem:[%s633 + $0x21c] sm:$0xf]
          %v5086 = vld [vmem:[%s633 + $0x220] sm:$0xf]
          %v5087 = vld [vmem:[%s633 + $0x224] sm:$0xf]
          %v5088 = vld [vmem:[%s633 + $0x228] sm:$0xf]
          %v5089 = vld [vmem:[%s633 + $0x22c] sm:$0xf]
          %v5090 = vld [vmem:[%s633 + $0x230] sm:$0xf]
          %v5091 = vld [vmem:[%s633 + $0x234] sm:$0xf]
          %v5092 = vld [vmem:[%s633 + $0x238] sm:$0xf]
          %v5093 = vld [vmem:[%s633 + $0x23c] sm:$0xf]
          %v5094 = vld [vmem:[%s633 + $0x240] sm:$0xf]
          %v5095 = vld [vmem:[%s633 + $0x244] sm:$0xf]
          %v5096 = vld [vmem:[%s633 + $0x248] sm:$0xf]
          %v5097 = vld [vmem:[%s633 + $0x24c] sm:$0xf]
          %v5098 = vld [vmem:[%s633 + $0x250] sm:$0xf]
          %v5099 = vld [vmem:[%s633 + $0x254] sm:$0xf]
          %v5100 = vld [vmem:[%s633 + $0x258] sm:$0xf]
          %v5101 = vld [vmem:[%s633 + $0x25c] sm:$0xf]
          %v5102 = vld [vmem:[%s633 + $0x260] sm:$0xf]
          %v5103 = vld [vmem:[%s633 + $0x264] sm:$0xf]
          %v5104 = vld [vmem:[%s633 + $0x268] sm:$0xf]
          %v5105 = vld [vmem:[%s633 + $0x26c] sm:$0xf]
          %v5106 = vld [vmem:[%s633 + $0x270] sm:$0xf]
          %v5107 = vld [vmem:[%s633 + $0x274] sm:$0xf]
          %v5108 = vld [vmem:[%s633 + $0x278] sm:$0xf]
          %v5109 = vld [vmem:[%s633 + $0x27c] sm:$0xf]
          %v5110 = vld [vmem:[%s633 + $0x280] sm:$0xf]
          %v5111 = vld [vmem:[%s633 + $0x284] sm:$0xf]
          %v5112 = vld [vmem:[%s633 + $0x288] sm:$0xf]
          %v5113 = vld [vmem:[%s633 + $0x28c] sm:$0xf]
          %v5114 = vld [vmem:[%s633 + $0x290] sm:$0xf]
          %v5115 = vld [vmem:[%s633 + $0x294] sm:$0xf]
          %v5116 = vld [vmem:[%s633 + $0x298] sm:$0xf]
          %v5117 = vld [vmem:[%s633 + $0x29c] sm:$0xf]
          %v5118 = vld [vmem:[%s633 + $0x2a0] sm:$0xf]
          %v5119 = vld [vmem:[%s633 + $0x2a4] sm:$0xf]
          %v5120 = vld [vmem:[%s633 + $0x2a8] sm:$0xf]
          %v5121 = vld [vmem:[%s633 + $0x2ac] sm:$0xf]
          %v5122 = vld [vmem:[%s633 + $0x2b0] sm:$0xf]
          %v5123 = vld [vmem:[%s633 + $0x2b4] sm:$0xf]
          %v5124 = vld [vmem:[%s633 + $0x2b8] sm:$0xf]
          %v5125 = vld [vmem:[%s633 + $0x2bc] sm:$0xf]
          %v5126 = vld [vmem:[%s633 + $0x2c0] sm:$0xf]
          %v5127 = vld [vmem:[%s633 + $0x2c4] sm:$0xf]
          %v5128 = vld [vmem:[%s633 + $0x2c8] sm:$0xf]
          %v5129 = vld [vmem:[%s633 + $0x2cc] sm:$0xf]
          %v5130 = vld [vmem:[%s633 + $0x2d0] sm:$0xf]
          %v5131 = vld [vmem:[%s633 + $0x2d4] sm:$0xf]
          %v5132 = vld [vmem:[%s633 + $0x2d8] sm:$0xf]
          %v5133 = vld [vmem:[%s633 + $0x2dc] sm:$0xf]
          %v5134 = vld [vmem:[%s633 + $0x2e0] sm:$0xf]
          %v5135 = vld [vmem:[%s633 + $0x2e4] sm:$0xf]
          %v5136 = vld [vmem:[%s633 + $0x2e8] sm:$0xf]
          %v5137 = vld [vmem:[%s633 + $0x2ec] sm:$0xf]
          %v5138 = vld [vmem:[%s633 + $0x2f0] sm:$0xf]
          %v5139 = vld [vmem:[%s633 + $0x2f4] sm:$0xf]
          %v5140 = vld [vmem:[%s633 + $0x2f8] sm:$0xf]
          %v5141 = vld [vmem:[%s633 + $0x2fc] sm:$0xf]
          %v5142 = vld [vmem:[%s633 + $0x300] sm:$0xf]
          %v5143 = vld [vmem:[%s633 + $0x304] sm:$0xf]
          %v5144 = vld [vmem:[%s633 + $0x308] sm:$0xf]
          %v5145 = vld [vmem:[%s633 + $0x30c] sm:$0xf]
          %v5146 = vld [vmem:[%s633 + $0x310] sm:$0xf]
          %v5147 = vld [vmem:[%s633 + $0x314] sm:$0xf]
          %v5148 = vld [vmem:[%s633 + $0x318] sm:$0xf]
          %v5149 = vld [vmem:[%s633 + $0x31c] sm:$0xf]
          %v5150 = vld [vmem:[%s633 + $0x320] sm:$0xf]
          %v5151 = vld [vmem:[%s633 + $0x324] sm:$0xf]
          %v5152 = vld [vmem:[%s633 + $0x328] sm:$0xf]
          %v5153 = vld [vmem:[%s633 + $0x32c] sm:$0xf]
          %v5154 = vld [vmem:[%s633 + $0x330] sm:$0xf]
          %v5155 = vld [vmem:[%s633 + $0x334] sm:$0xf]
          %v5156 = vld [vmem:[%s633 + $0x338] sm:$0xf]
          %v5157 = vld [vmem:[%s633 + $0x33c] sm:$0xf]
          %v5158 = vld [vmem:[%s633 + $0x340] sm:$0xf]
          %v5159 = vld [vmem:[%s633 + $0x344] sm:$0xf]
          %v5160 = vld [vmem:[%s633 + $0x348] sm:$0xf]
          %v5161 = vld [vmem:[%s633 + $0x34c] sm:$0xf]
          %v5162 = vld [vmem:[%s633 + $0x350] sm:$0xf]
          %v5163 = vld [vmem:[%s633 + $0x354] sm:$0xf]
          %v5164 = vld [vmem:[%s633 + $0x358] sm:$0xf]
          %v5165 = vld [vmem:[%s633 + $0x35c] sm:$0xf]
          %v5166 = vld [vmem:[%s633 + $0x360] sm:$0xf]
          %v5167 = vld [vmem:[%s633 + $0x364] sm:$0xf]
          %v5168 = vld [vmem:[%s633 + $0x368] sm:$0xf]
          %v5169 = vld [vmem:[%s633 + $0x36c] sm:$0xf]
          %v5170 = vld [vmem:[%s633 + $0x370] sm:$0xf]
          %v5171 = vld [vmem:[%s633 + $0x374] sm:$0xf]
          %v5172 = vld [vmem:[%s633 + $0x378] sm:$0xf]
          %v5173 = vld [vmem:[%s633 + $0x37c] sm:$0xf]
          %v5174 = vld [vmem:[%s633 + $0x380] sm:$0xf]
          %v5175 = vld [vmem:[%s633 + $0x384] sm:$0xf]
          %v5176 = vld [vmem:[%s633 + $0x388] sm:$0xf]
          %v5177 = vld [vmem:[%s633 + $0x38c] sm:$0xf]
          %v5178 = vld [vmem:[%s633 + $0x390] sm:$0xf]
          %v5179 = vld [vmem:[%s633 + $0x394] sm:$0xf]
          %v5180 = vld [vmem:[%s633 + $0x398] sm:$0xf]
          %v5181 = vld [vmem:[%s633 + $0x39c] sm:$0xf]
          %v5182 = vld [vmem:[%s633 + $0x3a0] sm:$0xf]
          %v5183 = vld [vmem:[%s633 + $0x3a4] sm:$0xf]
          %v5184 = vld [vmem:[%s633 + $0x3a8] sm:$0xf]
          %v5185 = vld [vmem:[%s633 + $0x3ac] sm:$0xf]
          %v5186 = vld [vmem:[%s633 + $0x3b0] sm:$0xf]
          %v5187 = vld [vmem:[%s633 + $0x3b4] sm:$0xf]
          %v5188 = vld [vmem:[%s633 + $0x3b8] sm:$0xf]
          %v5189 = vld [vmem:[%s633 + $0x3bc] sm:$0xf]
          %v5190 = vld [vmem:[%s633 + $0x3c0] sm:$0xf]
          %v5191 = vld [vmem:[%s633 + $0x3c4] sm:$0xf]
          %v5192 = vld [vmem:[%s633 + $0x3c8] sm:$0xf]
          %v5193 = vld [vmem:[%s633 + $0x3cc] sm:$0xf]
          %v5194 = vld [vmem:[%s633 + $0x3d0] sm:$0xf]
          %v5195 = vld [vmem:[%s633 + $0x3d4] sm:$0xf]
          %v5196 = vld [vmem:[%s633 + $0x3d8] sm:$0xf]
          %v5197 = vld [vmem:[%s633 + $0x3dc] sm:$0xf]
          %v5198 = vld [vmem:[%s633 + $0x3e0] sm:$0xf]
          %v5199 = vld [vmem:[%s633 + $0x3e4] sm:$0xf]
          %v5200 = vld [vmem:[%s633 + $0x3e8] sm:$0xf]
          %v5201 = vld [vmem:[%s633 + $0x3ec] sm:$0xf]
          %v5202 = vld [vmem:[%s633 + $0x3f0] sm:$0xf]
          %v5203 = vld [vmem:[%s633 + $0x3f4] sm:$0xf]
          %v5204 = vld [vmem:[%s633 + $0x3f8] sm:$0xf]
          %v5205 = vld [vmem:[%s633 + $0x3fc] sm:$0xf]
          %v5206 = vld [vmem:[%s636] sm:$0x1]
          %v5208 = vlaneseq
          %v5209 = vshrl.u32 %v5208, 7
          %v5210 = vsub.s32 0, %v5209
          %v5211 = vrot.slane %v5206, %v5210
          %v5469 = vunpack.c.l.b16 %v4950
          %v5470 = vunpack.c.l.b16 %v4951
          %v5471 = vunpack.c.l.b16 %v4952
          %v5472 = vunpack.c.l.b16 %v4953
          %v5473 = vunpack.c.l.b16 %v4954
          %v5474 = vunpack.c.l.b16 %v4955
          %v5475 = vunpack.c.l.b16 %v4956
          %v5476 = vunpack.c.l.b16 %v4957
          %v5477 = vunpack.c.l.b16 %v4958
          %v5478 = vunpack.c.l.b16 %v4959
          %v5479 = vunpack.c.l.b16 %v4960
          %v5480 = vunpack.c.l.b16 %v4961
          %v5481 = vunpack.c.l.b16 %v4962
          %v5482 = vunpack.c.l.b16 %v4963
          %v5483 = vunpack.c.l.b16 %v4964
          %v5484 = vunpack.c.l.b16 %v4965
          %v5485 = vunpack.c.l.b16 %v4966
          %v5486 = vunpack.c.l.b16 %v4967
          %v5487 = vunpack.c.l.b16 %v4968
          %v5488 = vunpack.c.l.b16 %v4969
          %v5489 = vunpack.c.l.b16 %v4970
          %v5490 = vunpack.c.l.b16 %v4971
          %v5491 = vunpack.c.l.b16 %v4972
          %v5492 = vunpack.c.l.b16 %v4973
          %v5493 = vunpack.c.l.b16 %v4974
          %v5494 = vunpack.c.l.b16 %v4975
          %v5495 = vunpack.c.l.b16 %v4976
          %v5496 = vunpack.c.l.b16 %v4977
          %v5497 = vunpack.c.l.b16 %v4978
          %v5498 = vunpack.c.l.b16 %v4979
          %v5499 = vunpack.c.l.b16 %v4980
          %v5500 = vunpack.c.l.b16 %v4981
          %v5501 = vunpack.c.l.b16 %v4982
          %v5502 = vunpack.c.l.b16 %v4983
          %v5503 = vunpack.c.l.b16 %v4984
          %v5504 = vunpack.c.l.b16 %v4985
          %v5505 = vunpack.c.l.b16 %v4986
          %v5506 = vunpack.c.l.b16 %v4987
          %v5507 = vunpack.c.l.b16 %v4988
          %v5508 = vunpack.c.l.b16 %v4989
          %v5509 = vunpack.c.l.b16 %v4990
          %v5510 = vunpack.c.l.b16 %v4991
          %v5511 = vunpack.c.l.b16 %v4992
          %v5512 = vunpack.c.l.b16 %v4993
          %v5513 = vunpack.c.l.b16 %v4994
          %v5514 = vunpack.c.l.b16 %v4995
          %v5515 = vunpack.c.l.b16 %v4996
          %v5516 = vunpack.c.l.b16 %v4997
          %v5517 = vunpack.c.l.b16 %v4998
          %v5518 = vunpack.c.l.b16 %v4999
          %v5519 = vunpack.c.l.b16 %v5000
          %v5520 = vunpack.c.l.b16 %v5001
          %v5521 = vunpack.c.l.b16 %v5002
          %v5522 = vunpack.c.l.b16 %v5003
          %v5523 = vunpack.c.l.b16 %v5004
          %v5524 = vunpack.c.l.b16 %v5005
          %v5525 = vunpack.c.l.b16 %v5006
          %v5526 = vunpack.c.l.b16 %v5007
          %v5527 = vunpack.c.l.b16 %v5008
          %v5528 = vunpack.c.l.b16 %v5009
          %v5529 = vunpack.c.l.b16 %v5010
          %v5530 = vunpack.c.l.b16 %v5011
          %v5531 = vunpack.c.l.b16 %v5012
          %v5532 = vunpack.c.l.b16 %v5013
          %v5533 = vunpack.c.l.b16 %v5014
          %v5534 = vunpack.c.l.b16 %v5015
          %v5535 = vunpack.c.l.b16 %v5016
          %v5536 = vunpack.c.l.b16 %v5017
          %v5537 = vunpack.c.l.b16 %v5018
          %v5538 = vunpack.c.l.b16 %v5019
          %v5539 = vunpack.c.l.b16 %v5020
          %v5540 = vunpack.c.l.b16 %v5021
          %v5541 = vunpack.c.l.b16 %v5022
          %v5542 = vunpack.c.l.b16 %v5023
          %v5543 = vunpack.c.l.b16 %v5024
          %v5544 = vunpack.c.l.b16 %v5025
          %v5545 = vunpack.c.l.b16 %v5026
          %v5546 = vunpack.c.l.b16 %v5027
          %v5547 = vunpack.c.l.b16 %v5028
          %v5548 = vunpack.c.l.b16 %v5029
          %v5549 = vunpack.c.l.b16 %v5030
          %v5550 = vunpack.c.l.b16 %v5031
          %v5551 = vunpack.c.l.b16 %v5032
          %v5552 = vunpack.c.l.b16 %v5033
          %v5553 = vunpack.c.l.b16 %v5034
          %v5554 = vunpack.c.l.b16 %v5035
          %v5555 = vunpack.c.l.b16 %v5036
          %v5556 = vunpack.c.l.b16 %v5037
          %v5557 = vunpack.c.l.b16 %v5038
          %v5558 = vunpack.c.l.b16 %v5039
          %v5559 = vunpack.c.l.b16 %v5040
          %v5560 = vunpack.c.l.b16 %v5041
          %v5561 = vunpack.c.l.b16 %v5042
          %v5562 = vunpack.c.l.b16 %v5043
          %v5563 = vunpack.c.l.b16 %v5044
          %v5564 = vunpack.c.l.b16 %v5045
          %v5565 = vunpack.c.l.b16 %v5046
          %v5566 = vunpack.c.l.b16 %v5047
          %v5567 = vunpack.c.l.b16 %v5048
          %v5568 = vunpack.c.l.b16 %v5049
          %v5569 = vunpack.c.l.b16 %v5050
          %v5570 = vunpack.c.l.b16 %v5051
          %v5571 = vunpack.c.l.b16 %v5052
          %v5572 = vunpack.c.l.b16 %v5053
          %v5573 = vunpack.c.l.b16 %v5054
          %v5574 = vunpack.c.l.b16 %v5055
          %v5575 = vunpack.c.l.b16 %v5056
          %v5576 = vunpack.c.l.b16 %v5057
          %v5577 = vunpack.c.l.b16 %v5058
          %v5578 = vunpack.c.l.b16 %v5059
          %v5579 = vunpack.c.l.b16 %v5060
          %v5580 = vunpack.c.l.b16 %v5061
          %v5581 = vunpack.c.l.b16 %v5062
          %v5582 = vunpack.c.l.b16 %v5063
          %v5583 = vunpack.c.l.b16 %v5064
          %v5584 = vunpack.c.l.b16 %v5065
          %v5585 = vunpack.c.l.b16 %v5066
          %v5586 = vunpack.c.l.b16 %v5067
          %v5587 = vunpack.c.l.b16 %v5068
          %v5588 = vunpack.c.l.b16 %v5069
          %v5589 = vunpack.c.l.b16 %v5070
          %v5590 = vunpack.c.l.b16 %v5071
          %v5591 = vunpack.c.l.b16 %v5072
          %v5592 = vunpack.c.l.b16 %v5073
          %v5593 = vunpack.c.l.b16 %v5074
          %v5594 = vunpack.c.l.b16 %v5075
          %v5595 = vunpack.c.l.b16 %v5076
          %v5596 = vunpack.c.l.b16 %v5077
          %v5597 = vunpack.c.l.b16 %v5078
          %v5598 = vunpack.c.l.b16 %v5079
          %v5599 = vunpack.c.l.b16 %v5080
          %v5600 = vunpack.c.l.b16 %v5081
          %v5601 = vunpack.c.l.b16 %v5082
          %v5602 = vunpack.c.l.b16 %v5083
          %v5603 = vunpack.c.l.b16 %v5084
          %v5604 = vunpack.c.l.b16 %v5085
          %v5605 = vunpack.c.l.b16 %v5086
          %v5606 = vunpack.c.l.b16 %v5087
          %v5607 = vunpack.c.l.b16 %v5088
          %v5608 = vunpack.c.l.b16 %v5089
          %v5609 = vunpack.c.l.b16 %v5090
          %v5610 = vunpack.c.l.b16 %v5091
          %v5611 = vunpack.c.l.b16 %v5092
          %v5612 = vunpack.c.l.b16 %v5093
          %v5613 = vunpack.c.l.b16 %v5094
          %v5614 = vunpack.c.l.b16 %v5095
          %v5615 = vunpack.c.l.b16 %v5096
          %v5616 = vunpack.c.l.b16 %v5097
          %v5617 = vunpack.c.l.b16 %v5098
          %v5618 = vunpack.c.l.b16 %v5099
          %v5619 = vunpack.c.l.b16 %v5100
          %v5620 = vunpack.c.l.b16 %v5101
          %v5621 = vunpack.c.l.b16 %v5102
          %v5622 = vunpack.c.l.b16 %v5103
          %v5623 = vunpack.c.l.b16 %v5104
          %v5624 = vunpack.c.l.b16 %v5105
          %v5625 = vunpack.c.l.b16 %v5106
          %v5626 = vunpack.c.l.b16 %v5107
          %v5627 = vunpack.c.l.b16 %v5108
          %v5628 = vunpack.c.l.b16 %v5109
          %v5629 = vunpack.c.l.b16 %v5110
          %v5630 = vunpack.c.l.b16 %v5111
          %v5631 = vunpack.c.l.b16 %v5112
          %v5632 = vunpack.c.l.b16 %v5113
          %v5633 = vunpack.c.l.b16 %v5114
          %v5634 = vunpack.c.l.b16 %v5115
          %v5635 = vunpack.c.l.b16 %v5116
          %v5636 = vunpack.c.l.b16 %v5117
          %v5637 = vunpack.c.l.b16 %v5118
          %v5638 = vunpack.c.l.b16 %v5119
          %v5639 = vunpack.c.l.b16 %v5120
          %v5640 = vunpack.c.l.b16 %v5121
          %v5641 = vunpack.c.l.b16 %v5122
          %v5642 = vunpack.c.l.b16 %v5123
          %v5643 = vunpack.c.l.b16 %v5124
          %v5644 = vunpack.c.l.b16 %v5125
          %v5645 = vunpack.c.l.b16 %v5126
          %v5646 = vunpack.c.l.b16 %v5127
          %v5647 = vunpack.c.l.b16 %v5128
          %v5648 = vunpack.c.l.b16 %v5129
          %v5649 = vunpack.c.l.b16 %v5130
          %v5650 = vunpack.c.l.b16 %v5131
          %v5651 = vunpack.c.l.b16 %v5132
          %v5652 = vunpack.c.l.b16 %v5133
          %v5653 = vunpack.c.l.b16 %v5134
          %v5654 = vunpack.c.l.b16 %v5135
          %v5655 = vunpack.c.l.b16 %v5136
          %v5656 = vunpack.c.l.b16 %v5137
          %v5657 = vunpack.c.l.b16 %v5138
          %v5658 = vunpack.c.l.b16 %v5139
          %v5659 = vunpack.c.l.b16 %v5140
          %v5660 = vunpack.c.l.b16 %v5141
          %v5661 = vunpack.c.l.b16 %v5142
          %v5662 = vunpack.c.l.b16 %v5143
          %v5663 = vunpack.c.l.b16 %v5144
          %v5664 = vunpack.c.l.b16 %v5145
          %v5665 = vunpack.c.l.b16 %v5146
          %v5666 = vunpack.c.l.b16 %v5147
          %v5667 = vunpack.c.l.b16 %v5148
          %v5668 = vunpack.c.l.b16 %v5149
          %v5669 = vunpack.c.l.b16 %v5150
          %v5670 = vunpack.c.l.b16 %v5151
          %v5671 = vunpack.c.l.b16 %v5152
          %v5672 = vunpack.c.l.b16 %v5153
          %v5673 = vunpack.c.l.b16 %v5154
          %v5674 = vunpack.c.l.b16 %v5155
          %v5675 = vunpack.c.l.b16 %v5156
          %v5676 = vunpack.c.l.b16 %v5157
          %v5677 = vunpack.c.l.b16 %v5158
          %v5678 = vunpack.c.l.b16 %v5159
          %v5679 = vunpack.c.l.b16 %v5160
          %v5680 = vunpack.c.l.b16 %v5161
          %v5681 = vunpack.c.l.b16 %v5162
          %v5682 = vunpack.c.l.b16 %v5163
          %v5683 = vunpack.c.l.b16 %v5164
          %v5684 = vunpack.c.l.b16 %v5165
          %v5685 = vunpack.c.l.b16 %v5166
          %v5686 = vunpack.c.l.b16 %v5167
          %v5687 = vunpack.c.l.b16 %v5168
          %v5688 = vunpack.c.l.b16 %v5169
          %v5689 = vunpack.c.l.b16 %v5170
          %v5690 = vunpack.c.l.b16 %v5171
          %v5691 = vunpack.c.l.b16 %v5172
          %v5692 = vunpack.c.l.b16 %v5173
          %v5693 = vunpack.c.l.b16 %v5174
          %v5694 = vunpack.c.l.b16 %v5175
          %v5695 = vunpack.c.l.b16 %v5176
          %v5696 = vunpack.c.l.b16 %v5177
          %v5697 = vunpack.c.l.b16 %v5178
          %v5698 = vunpack.c.l.b16 %v5179
          %v5699 = vunpack.c.l.b16 %v5180
          %v5700 = vunpack.c.l.b16 %v5181
          %v5701 = vunpack.c.l.b16 %v5182
          %v5702 = vunpack.c.l.b16 %v5183
          %v5703 = vunpack.c.l.b16 %v5184
          %v5704 = vunpack.c.l.b16 %v5185
          %v5705 = vunpack.c.l.b16 %v5186
          %v5706 = vunpack.c.l.b16 %v5187
          %v5707 = vunpack.c.l.b16 %v5188
          %v5708 = vunpack.c.l.b16 %v5189
          %v5709 = vunpack.c.l.b16 %v5190
          %v5710 = vunpack.c.l.b16 %v5191
          %v5711 = vunpack.c.l.b16 %v5192
          %v5712 = vunpack.c.l.b16 %v5193
          %v5713 = vunpack.c.l.b16 %v5194
          %v5714 = vunpack.c.l.b16 %v5195
          %v5715 = vunpack.c.l.b16 %v5196
          %v5716 = vunpack.c.l.b16 %v5197
          %v5717 = vunpack.c.l.b16 %v5198
          %v5718 = vunpack.c.l.b16 %v5199
          %v5719 = vunpack.c.l.b16 %v5200
          %v5720 = vunpack.c.l.b16 %v5201
          %v5721 = vunpack.c.l.b16 %v5202
          %v5722 = vunpack.c.l.b16 %v5203
          %v5723 = vunpack.c.l.b16 %v5204
          %v5724 = vunpack.c.l.b16 %v5205
          %v5725 = vpack.c.b16 %v5470, %v5469
          %v5726 = vpack.c.b16 %v5472, %v5471
          %v5727 = vpack.c.b16 %v5474, %v5473
          %v5728 = vpack.c.b16 %v5476, %v5475
          %v5729 = vpack.c.b16 %v5478, %v5477
          %v5730 = vpack.c.b16 %v5480, %v5479
          %v5731 = vpack.c.b16 %v5482, %v5481
          %v5732 = vpack.c.b16 %v5484, %v5483
          %v5733 = vpack.c.b16 %v5486, %v5485
          %v5734 = vpack.c.b16 %v5488, %v5487
          %v5735 = vpack.c.b16 %v5490, %v5489
          %v5736 = vpack.c.b16 %v5492, %v5491
          %v5737 = vpack.c.b16 %v5494, %v5493
          %v5738 = vpack.c.b16 %v5496, %v5495
          %v5739 = vpack.c.b16 %v5498, %v5497
          %v5740 = vpack.c.b16 %v5500, %v5499
          %v5741 = vpack.c.b16 %v5502, %v5501
          %v5742 = vpack.c.b16 %v5504, %v5503
          %v5743 = vpack.c.b16 %v5506, %v5505
          %v5744 = vpack.c.b16 %v5508, %v5507
          %v5745 = vpack.c.b16 %v5510, %v5509
          %v5746 = vpack.c.b16 %v5512, %v5511
          %v5747 = vpack.c.b16 %v5514, %v5513
          %v5748 = vpack.c.b16 %v5516, %v5515
          %v5749 = vpack.c.b16 %v5518, %v5517
          %v5750 = vpack.c.b16 %v5520, %v5519
          %v5751 = vpack.c.b16 %v5522, %v5521
          %v5752 = vpack.c.b16 %v5524, %v5523
          %v5753 = vpack.c.b16 %v5526, %v5525
          %v5754 = vpack.c.b16 %v5528, %v5527
          %v5755 = vpack.c.b16 %v5530, %v5529
          %v5756 = vpack.c.b16 %v5532, %v5531
          %v5757 = vpack.c.b16 %v5534, %v5533
          %v5758 = vpack.c.b16 %v5536, %v5535
          %v5759 = vpack.c.b16 %v5538, %v5537
          %v5760 = vpack.c.b16 %v5540, %v5539
          %v5761 = vpack.c.b16 %v5542, %v5541
          %v5762 = vpack.c.b16 %v5544, %v5543
          %v5763 = vpack.c.b16 %v5546, %v5545
          %v5764 = vpack.c.b16 %v5548, %v5547
          %v5765 = vpack.c.b16 %v5550, %v5549
          %v5766 = vpack.c.b16 %v5552, %v5551
          %v5767 = vpack.c.b16 %v5554, %v5553
          %v5768 = vpack.c.b16 %v5556, %v5555
          %v5769 = vpack.c.b16 %v5558, %v5557
          %v5770 = vpack.c.b16 %v5560, %v5559
          %v5771 = vpack.c.b16 %v5562, %v5561
          %v5772 = vpack.c.b16 %v5564, %v5563
          %v5773 = vpack.c.b16 %v5566, %v5565
          %v5774 = vpack.c.b16 %v5568, %v5567
          %v5775 = vpack.c.b16 %v5570, %v5569
          %v5776 = vpack.c.b16 %v5572, %v5571
          %v5777 = vpack.c.b16 %v5574, %v5573
          %v5778 = vpack.c.b16 %v5576, %v5575
          %v5779 = vpack.c.b16 %v5578, %v5577
          %v5780 = vpack.c.b16 %v5580, %v5579
          %v5781 = vpack.c.b16 %v5582, %v5581
          %v5782 = vpack.c.b16 %v5584, %v5583
          %v5783 = vpack.c.b16 %v5586, %v5585
          %v5784 = vpack.c.b16 %v5588, %v5587
          %v5785 = vpack.c.b16 %v5590, %v5589
          %v5786 = vpack.c.b16 %v5592, %v5591
          %v5787 = vpack.c.b16 %v5594, %v5593
          %v5788 = vpack.c.b16 %v5596, %v5595
          %v5789 = vpack.c.b16 %v5598, %v5597
          %v5790 = vpack.c.b16 %v5600, %v5599
          %v5791 = vpack.c.b16 %v5602, %v5601
          %v5792 = vpack.c.b16 %v5604, %v5603
          %v5793 = vpack.c.b16 %v5606, %v5605
          %v5794 = vpack.c.b16 %v5608, %v5607
          %v5795 = vpack.c.b16 %v5610, %v5609
          %v5796 = vpack.c.b16 %v5612, %v5611
          %v5797 = vpack.c.b16 %v5614, %v5613
          %v5798 = vpack.c.b16 %v5616, %v5615
          %v5799 = vpack.c.b16 %v5618, %v5617
          %v5800 = vpack.c.b16 %v5620, %v5619
          %v5801 = vpack.c.b16 %v5622, %v5621
          %v5802 = vpack.c.b16 %v5624, %v5623
          %v5803 = vpack.c.b16 %v5626, %v5625
          %v5804 = vpack.c.b16 %v5628, %v5627
          %v5805 = vpack.c.b16 %v5630, %v5629
          %v5806 = vpack.c.b16 %v5632, %v5631
          %v5807 = vpack.c.b16 %v5634, %v5633
          %v5808 = vpack.c.b16 %v5636, %v5635
          %v5809 = vpack.c.b16 %v5638, %v5637
          %v5810 = vpack.c.b16 %v5640, %v5639
          %v5811 = vpack.c.b16 %v5642, %v5641
          %v5812 = vpack.c.b16 %v5644, %v5643
          %v5813 = vpack.c.b16 %v5646, %v5645
          %v5814 = vpack.c.b16 %v5648, %v5647
          %v5815 = vpack.c.b16 %v5650, %v5649
          %v5816 = vpack.c.b16 %v5652, %v5651
          %v5817 = vpack.c.b16 %v5654, %v5653
          %v5818 = vpack.c.b16 %v5656, %v5655
          %v5819 = vpack.c.b16 %v5658, %v5657
          %v5820 = vpack.c.b16 %v5660, %v5659
          %v5821 = vpack.c.b16 %v5662, %v5661
          %v5822 = vpack.c.b16 %v5664, %v5663
          %v5823 = vpack.c.b16 %v5666, %v5665
          %v5824 = vpack.c.b16 %v5668, %v5667
          %v5825 = vpack.c.b16 %v5670, %v5669
          %v5826 = vpack.c.b16 %v5672, %v5671
          %v5827 = vpack.c.b16 %v5674, %v5673
          %v5828 = vpack.c.b16 %v5676, %v5675
          %v5829 = vpack.c.b16 %v5678, %v5677
          %v5830 = vpack.c.b16 %v5680, %v5679
          %v5831 = vpack.c.b16 %v5682, %v5681
          %v5832 = vpack.c.b16 %v5684, %v5683
          %v5833 = vpack.c.b16 %v5686, %v5685
          %v5834 = vpack.c.b16 %v5688, %v5687
          %v5835 = vpack.c.b16 %v5690, %v5689
          %v5836 = vpack.c.b16 %v5692, %v5691
          %v5837 = vpack.c.b16 %v5694, %v5693
          %v5838 = vpack.c.b16 %v5696, %v5695
          %v5839 = vpack.c.b16 %v5698, %v5697
          %v5840 = vpack.c.b16 %v5700, %v5699
          %v5841 = vpack.c.b16 %v5702, %v5701
          %v5842 = vpack.c.b16 %v5704, %v5703
          %v5843 = vpack.c.b16 %v5706, %v5705
          %v5844 = vpack.c.b16 %v5708, %v5707
          %v5845 = vpack.c.b16 %v5710, %v5709
          %v5846 = vpack.c.b16 %v5712, %v5711
          %v5847 = vpack.c.b16 %v5714, %v5713
          %v5848 = vpack.c.b16 %v5716, %v5715
          %v5849 = vpack.c.b16 %v5718, %v5717
          %v5850 = vpack.c.b16 %v5720, %v5719
          %v5851 = vpack.c.b16 %v5722, %v5721
          %v5852 = vpack.c.b16 %v5724, %v5723
          %5981 = vmatprep.subr.bf16.mxu0 0
          %5982 = vmatpush1.bf16.msra.mxu0 %v5725
          %5983 = vmatprep.subr.bf16.mxu0 0
          %5984 = vmatpush1.bf16.msra.mxu0 %v5726
          %5985 = vmatprep.subr.bf16.mxu0 0
          %5986 = vmatpush1.bf16.msra.mxu0 %v5727
          %5987 = vmatprep.subr.bf16.mxu0 0
          %5988 = vmatpush1.bf16.msra.mxu0 %v5728
          %5989 = vmatprep.subr.bf16.mxu0 0
          %5990 = vmatpush1.bf16.msra.mxu0 %v5729
          %5991 = vmatprep.subr.bf16.mxu0 0
          %5992 = vmatpush1.bf16.msra.mxu0 %v5730
          %5993 = vmatprep.subr.bf16.mxu0 0
          %5994 = vmatpush1.bf16.msra.mxu0 %v5731
          %5995 = vmatprep.subr.bf16.mxu0 0
          %5996 = vmatpush1.bf16.msra.mxu0 %v5732
          %5997 = vmatprep.subr.bf16.mxu0 0
          %5998 = vmatpush1.bf16.msra.mxu0 %v5733
          %5999 = vmatprep.subr.bf16.mxu0 0
          %6000 = vmatpush1.bf16.msra.mxu0 %v5734
          %6001 = vmatprep.subr.bf16.mxu0 0
          %6002 = vmatpush1.bf16.msra.mxu0 %v5735
          %6003 = vmatprep.subr.bf16.mxu0 0
          %6004 = vmatpush1.bf16.msra.mxu0 %v5736
          %6005 = vmatprep.subr.bf16.mxu0 0
          %6006 = vmatpush1.bf16.msra.mxu0 %v5737
          %6007 = vmatprep.subr.bf16.mxu0 0
          %6008 = vmatpush1.bf16.msra.mxu0 %v5738
          %6009 = vmatprep.subr.bf16.mxu0 0
          %6010 = vmatpush1.bf16.msra.mxu0 %v5739
          %6011 = vmatprep.subr.bf16.mxu0 0
          %6012 = vmatpush1.bf16.msra.mxu0 %v5740
          %6013 = vmatprep.mubr.bf16.mxu0 %v4935
          %6014 = vmatmul.mubr.bf16.gmra.mrb[0].mxu0 %v4934
          %v6015 = vpop.f32.mrb[0].mxu0
          %v6016 = vadd.f32 %v5211, %v6015
          %v6017 = vpop.f32.mrb[0].mxu0
          %v6018 = vpop.f32.mrb[0].mxu0
          %v6019 = vpop.f32.mrb[0].mxu0
          %6020 = vdwg.mxu0
          %6021 = vmatprep.subr.bf16.mxu0 0
          %6022 = vmatpush1.bf16.msra.mxu0 %v5741
          %6023 = vmatprep.subr.bf16.mxu0 0
          %6024 = vmatpush1.bf16.msra.mxu0 %v5742
          %6025 = vmatprep.subr.bf16.mxu0 0
          %6026 = vmatpush1.bf16.msra.mxu0 %v5743
          %6027 = vmatprep.subr.bf16.mxu0 0
          %6028 = vmatpush1.bf16.msra.mxu0 %v5744
          %6029 = vmatprep.subr.bf16.mxu0 0
          %6030 = vmatpush1.bf16.msra.mxu0 %v5745
          %6031 = vmatprep.subr.bf16.mxu0 0
          %6032 = vmatpush1.bf16.msra.mxu0 %v5746
          %6033 = vmatprep.subr.bf16.mxu0 0
          %6034 = vmatpush1.bf16.msra.mxu0 %v5747
          %6035 = vmatprep.subr.bf16.mxu0 0
          %6036 = vmatpush1.bf16.msra.mxu0 %v5748
          %6037 = vmatprep.subr.bf16.mxu0 0
          %6038 = vmatpush1.bf16.msra.mxu0 %v5749
          %6039 = vmatprep.subr.bf16.mxu0 0
          %6040 = vmatpush1.bf16.msra.mxu0 %v5750
          %6041 = vmatprep.subr.bf16.mxu0 0
          %6042 = vmatpush1.bf16.msra.mxu0 %v5751
          %6043 = vmatprep.subr.bf16.mxu0 0
          %6044 = vmatpush1.bf16.msra.mxu0 %v5752
          %6045 = vmatprep.subr.bf16.mxu0 0
          %6046 = vmatpush1.bf16.msra.mxu0 %v5753
          %6047 = vmatprep.subr.bf16.mxu0 0
          %6048 = vmatpush1.bf16.msra.mxu0 %v5754
          %6049 = vmatprep.subr.bf16.mxu0 0
          %6050 = vmatpush1.bf16.msra.mxu0 %v5755
          %6051 = vmatprep.subr.bf16.mxu0 0
          %6052 = vmatpush1.bf16.msra.mxu0 %v5756
          %6053 = vmatprep.mubr.bf16.mxu0 %v4937
          %6054 = vmatmul.mubr.bf16.gmra.mrb[0].mxu0 %v4936
          %v6055 = vpop.f32.mrb[0].mxu0
          %v6056 = vadd.f32 %v6016, %v6055
          %v6057 = vpop.f32.mrb[0].mxu0
          %v6058 = vpop.f32.mrb[0].mxu0
          %v6059 = vpop.f32.mrb[0].mxu0
          %6060 = vdwg.mxu0
          %6061 = vmatprep.subr.bf16.mxu0 0
          %6062 = vmatpush1.bf16.msra.mxu0 %v5757
          %6063 = vmatprep.subr.bf16.mxu0 0
          %6064 = vmatpush1.bf16.msra.mxu0 %v5758
          %6065 = vmatprep.subr.bf16.mxu0 0
          %6066 = vmatpush1.bf16.msra.mxu0 %v5759
          %6067 = vmatprep.subr.bf16.mxu0 0
          %6068 = vmatpush1.bf16.msra.mxu0 %v5760
          %6069 = vmatprep.subr.bf16.mxu0 0
          %6070 = vmatpush1.bf16.msra.mxu0 %v5761
          %6071 = vmatprep.subr.bf16.mxu0 0
          %6072 = vmatpush1.bf16.msra.mxu0 %v5762
          %6073 = vmatprep.subr.bf16.mxu0 0
          %6074 = vmatpush1.bf16.msra.mxu0 %v5763
          %6075 = vmatprep.subr.bf16.mxu0 0
          %6076 = vmatpush1.bf16.msra.mxu0 %v5764
          %6077 = vmatprep.subr.bf16.mxu0 0
          %6078 = vmatpush1.bf16.msra.mxu0 %v5765
          %6079 = vmatprep.subr.bf16.mxu0 0
          %6080 = vmatpush1.bf16.msra.mxu0 %v5766
          %6081 = vmatprep.subr.bf16.mxu0 0
          %6082 = vmatpush1.bf16.msra.mxu0 %v5767
          %6083 = vmatprep.subr.bf16.mxu0 0
          %6084 = vmatpush1.bf16.msra.mxu0 %v5768
          %6085 = vmatprep.subr.bf16.mxu0 0
          %6086 = vmatpush1.bf16.msra.mxu0 %v5769
          %6087 = vmatprep.subr.bf16.mxu0 0
          %6088 = vmatpush1.bf16.msra.mxu0 %v5770
          %6089 = vmatprep.subr.bf16.mxu0 0
          %6090 = vmatpush1.bf16.msra.mxu0 %v5771
          %6091 = vmatprep.subr.bf16.mxu0 0
          %6092 = vmatpush1.bf16.msra.mxu0 %v5772
          %6093 = vmatprep.mubr.bf16.mxu0 %v4939
          %6094 = vmatmul.mubr.bf16.gmra.mrb[0].mxu0 %v4938
          %v6095 = vpop.f32.mrb[0].mxu0
          %v6096 = vadd.f32 %v6056, %v6095
          %v6097 = vpop.f32.mrb[0].mxu0
          %v6098 = vpop.f32.mrb[0].mxu0
          %v6099 = vpop.f32.mrb[0].mxu0
          %6100 = vdwg.mxu0
          %6101 = vmatprep.subr.bf16.mxu0 0
          %6102 = vmatpush1.bf16.msra.mxu0 %v5773
          %6103 = vmatprep.subr.bf16.mxu0 0
          %6104 = vmatpush1.bf16.msra.mxu0 %v5774
          %6105 = vmatprep.subr.bf16.mxu0 0
          %6106 = vmatpush1.bf16.msra.mxu0 %v5775
          %6107 = vmatprep.subr.bf16.mxu0 0
          %6108 = vmatpush1.bf16.msra.mxu0 %v5776
          %6109 = vmatprep.subr.bf16.mxu0 0
          %6110 = vmatpush1.bf16.msra.mxu0 %v5777
          %6111 = vmatprep.subr.bf16.mxu0 0
          %6112 = vmatpush1.bf16.msra.mxu0 %v5778
          %6113 = vmatprep.subr.bf16.mxu0 0
          %6114 = vmatpush1.bf16.msra.mxu0 %v5779
          %6115 = vmatprep.subr.bf16.mxu0 0
          %6116 = vmatpush1.bf16.msra.mxu0 %v5780
          %6117 = vmatprep.subr.bf16.mxu0 0
          %6118 = vmatpush1.bf16.msra.mxu0 %v5781
          %6119 = vmatprep.subr.bf16.mxu0 0
          %6120 = vmatpush1.bf16.msra.mxu0 %v5782
          %6121 = vmatprep.subr.bf16.mxu0 0
          %6122 = vmatpush1.bf16.msra.mxu0 %v5783
          %6123 = vmatprep.subr.bf16.mxu0 0
          %6124 = vmatpush1.bf16.msra.mxu0 %v5784
          %6125 = vmatprep.subr.bf16.mxu0 0
          %6126 = vmatpush1.bf16.msra.mxu0 %v5785
          %6127 = vmatprep.subr.bf16.mxu0 0
          %6128 = vmatpush1.bf16.msra.mxu0 %v5786
          %6129 = vmatprep.subr.bf16.mxu0 0
          %6130 = vmatpush1.bf16.msra.mxu0 %v5787
          %6131 = vmatprep.subr.bf16.mxu0 0
          %6132 = vmatpush1.bf16.msra.mxu0 %v5788
          %6133 = vmatprep.mubr.bf16.mxu0 %v4941
          %6134 = vmatmul.mubr.bf16.gmra.mrb[0].mxu0 %v4940
          %v6135 = vpop.f32.mrb[0].mxu0
          %v6136 = vadd.f32 %v6096, %v6135
          %v6137 = vpop.f32.mrb[0].mxu0
          %v6138 = vpop.f32.mrb[0].mxu0
          %v6139 = vpop.f32.mrb[0].mxu0
          %6140 = vdwg.mxu0
          %6141 = vmatprep.subr.bf16.mxu0 0
          %6142 = vmatpush1.bf16.msra.mxu0 %v5789
          %6143 = vmatprep.subr.bf16.mxu0 0
          %6144 = vmatpush1.bf16.msra.mxu0 %v5790
          %6145 = vmatprep.subr.bf16.mxu0 0
          %6146 = vmatpush1.bf16.msra.mxu0 %v5791
          %6147 = vmatprep.subr.bf16.mxu0 0
          %6148 = vmatpush1.bf16.msra.mxu0 %v5792
          %6149 = vmatprep.subr.bf16.mxu0 0
          %6150 = vmatpush1.bf16.msra.mxu0 %v5793
          %6151 = vmatprep.subr.bf16.mxu0 0
          %6152 = vmatpush1.bf16.msra.mxu0 %v5794
          %6153 = vmatprep.subr.bf16.mxu0 0
          %6154 = vmatpush1.bf16.msra.mxu0 %v5795
          %6155 = vmatprep.subr.bf16.mxu0 0
          %6156 = vmatpush1.bf16.msra.mxu0 %v5796
          %6157 = vmatprep.subr.bf16.mxu0 0
          %6158 = vmatpush1.bf16.msra.mxu0 %v5797
          %6159 = vmatprep.subr.bf16.mxu0 0
          %6160 = vmatpush1.bf16.msra.mxu0 %v5798
          %6161 = vmatprep.subr.bf16.mxu0 0
          %6162 = vmatpush1.bf16.msra.mxu0 %v5799
          %6163 = vmatprep.subr.bf16.mxu0 0
          %6164 = vmatpush1.bf16.msra.mxu0 %v5800
          %6165 = vmatprep.subr.bf16.mxu0 0
          %6166 = vmatpush1.bf16.msra.mxu0 %v5801
          %6167 = vmatprep.subr.bf16.mxu0 0
          %6168 = vmatpush1.bf16.msra.mxu0 %v5802
          %6169 = vmatprep.subr.bf16.mxu0 0
          %6170 = vmatpush1.bf16.msra.mxu0 %v5803
          %6171 = vmatprep.subr.bf16.mxu0 0
          %6172 = vmatpush1.bf16.msra.mxu0 %v5804
          %6173 = vmatprep.mubr.bf16.mxu0 %v4943
          %6174 = vmatmul.mubr.bf16.gmra.mrb[0].mxu0 %v4942
          %v6175 = vpop.f32.mrb[0].mxu0
          %v6176 = vadd.f32 %v6136, %v6175
          %v6177 = vpop.f32.mrb[0].mxu0
          %v6178 = vpop.f32.mrb[0].mxu0
          %v6179 = vpop.f32.mrb[0].mxu0
          %6180 = vdwg.mxu0
          %6181 = vmatprep.subr.bf16.mxu0 0
          %6182 = vmatpush1.bf16.msra.mxu0 %v5805
          %6183 = vmatprep.subr.bf16.mxu0 0
          %6184 = vmatpush1.bf16.msra.mxu0 %v5806
          %6185 = vmatprep.subr.bf16.mxu0 0
          %6186 = vmatpush1.bf16.msra.mxu0 %v5807
          %6187 = vmatprep.subr.bf16.mxu0 0
          %6188 = vmatpush1.bf16.msra.mxu0 %v5808
          %6189 = vmatprep.subr.bf16.mxu0 0
          %6190 = vmatpush1.bf16.msra.mxu0 %v5809
          %6191 = vmatprep.subr.bf16.mxu0 0
          %6192 = vmatpush1.bf16.msra.mxu0 %v5810
          %6193 = vmatprep.subr.bf16.mxu0 0
          %6194 = vmatpush1.bf16.msra.mxu0 %v5811
          %6195 = vmatprep.subr.bf16.mxu0 0
          %6196 = vmatpush1.bf16.msra.mxu0 %v5812
          %6197 = vmatprep.subr.bf16.mxu0 0
          %6198 = vmatpush1.bf16.msra.mxu0 %v5813
          %6199 = vmatprep.subr.bf16.mxu0 0
          %6200 = vmatpush1.bf16.msra.mxu0 %v5814
          %6201 = vmatprep.subr.bf16.mxu0 0
          %6202 = vmatpush1.bf16.msra.mxu0 %v5815
          %6203 = vmatprep.subr.bf16.mxu0 0
          %6204 = vmatpush1.bf16.msra.mxu0 %v5816
          %6205 = vmatprep.subr.bf16.mxu0 0
          %6206 = vmatpush1.bf16.msra.mxu0 %v5817
          %6207 = vmatprep.subr.bf16.mxu0 0
          %6208 = vmatpush1.bf16.msra.mxu0 %v5818
          %6209 = vmatprep.subr.bf16.mxu0 0
          %6210 = vmatpush1.bf16.msra.mxu0 %v5819
          %6211 = vmatprep.subr.bf16.mxu0 0
          %6212 = vmatpush1.bf16.msra.mxu0 %v5820
          %6213 = vmatprep.mubr.bf16.mxu0 %v4945
          %6214 = vmatmul.mubr.bf16.gmra.mrb[0].mxu0 %v4944
          %v6215 = vpop.f32.mrb[0].mxu0
          %v6216 = vadd.f32 %v6176, %v6215
          %v6217 = vpop.f32.mrb[0].mxu0
          %v6218 = vpop.f32.mrb[0].mxu0
          %v6219 = vpop.f32.mrb[0].mxu0
          %6220 = vdwg.mxu0
          %6221 = vmatprep.subr.bf16.mxu0 0
          %6222 = vmatpush1.bf16.msra.mxu0 %v5821
          %6223 = vmatprep.subr.bf16.mxu0 0
          %6224 = vmatpush1.bf16.msra.mxu0 %v5822
          %6225 = vmatprep.subr.bf16.mxu0 0
          %6226 = vmatpush1.bf16.msra.mxu0 %v5823
          %6227 = vmatprep.subr.bf16.mxu0 0
          %6228 = vmatpush1.bf16.msra.mxu0 %v5824
          %6229 = vmatprep.subr.bf16.mxu0 0
          %6230 = vmatpush1.bf16.msra.mxu0 %v5825
          %6231 = vmatprep.subr.bf16.mxu0 0
          %6232 = vmatpush1.bf16.msra.mxu0 %v5826
          %6233 = vmatprep.subr.bf16.mxu0 0
          %6234 = vmatpush1.bf16.msra.mxu0 %v5827
          %6235 = vmatprep.subr.bf16.mxu0 0
          %6236 = vmatpush1.bf16.msra.mxu0 %v5828
          %6237 = vmatprep.subr.bf16.mxu0 0
          %6238 = vmatpush1.bf16.msra.mxu0 %v5829
          %6239 = vmatprep.subr.bf16.mxu0 0
          %6240 = vmatpush1.bf16.msra.mxu0 %v5830
          %6241 = vmatprep.subr.bf16.mxu0 0
          %6242 = vmatpush1.bf16.msra.mxu0 %v5831
          %6243 = vmatprep.subr.bf16.mxu0 0
          %6244 = vmatpush1.bf16.msra.mxu0 %v5832
          %6245 = vmatprep.subr.bf16.mxu0 0
          %6246 = vmatpush1.bf16.msra.mxu0 %v5833
          %6247 = vmatprep.subr.bf16.mxu0 0
          %6248 = vmatpush1.bf16.msra.mxu0 %v5834
          %6249 = vmatprep.subr.bf16.mxu0 0
          %6250 = vmatpush1.bf16.msra.mxu0 %v5835
          %6251 = vmatprep.subr.bf16.mxu0 0
          %6252 = vmatpush1.bf16.msra.mxu0 %v5836
          %6253 = vmatprep.mubr.bf16.mxu0 %v4947
          %6254 = vmatmul.mubr.bf16.gmra.mrb[0].mxu0 %v4946
          %v6255 = vpop.f32.mrb[0].mxu0
          %v6256 = vadd.f32 %v6216, %v6255
          %v6257 = vpop.f32.mrb[0].mxu0
          %v6258 = vpop.f32.mrb[0].mxu0
          %v6259 = vpop.f32.mrb[0].mxu0
          %6260 = vdwg.mxu0
          %6261 = vmatprep.subr.bf16.mxu0 0
          %6262 = vmatpush1.bf16.msra.mxu0 %v5837
          %6263 = vmatprep.subr.bf16.mxu0 0
          %6264 = vmatpush1.bf16.msra.mxu0 %v5838
          %6265 = vmatprep.subr.bf16.mxu0 0
          %6266 = vmatpush1.bf16.msra.mxu0 %v5839
          %6267 = vmatprep.subr.bf16.mxu0 0
          %6268 = vmatpush1.bf16.msra.mxu0 %v5840
          %6269 = vmatprep.subr.bf16.mxu0 0
          %6270 = vmatpush1.bf16.msra.mxu0 %v5841
          %6271 = vmatprep.subr.bf16.mxu0 0
          %6272 = vmatpush1.bf16.msra.mxu0 %v5842
          %6273 = vmatprep.subr.bf16.mxu0 0
          %6274 = vmatpush1.bf16.msra.mxu0 %v5843
          %6275 = vmatprep.subr.bf16.mxu0 0
          %6276 = vmatpush1.bf16.msra.mxu0 %v5844
          %6277 = vmatprep.subr.bf16.mxu0 0
          %6278 = vmatpush1.bf16.msra.mxu0 %v5845
          %6279 = vmatprep.subr.bf16.mxu0 0
          %6280 = vmatpush1.bf16.msra.mxu0 %v5846
          %6281 = vmatprep.subr.bf16.mxu0 0
          %6282 = vmatpush1.bf16.msra.mxu0 %v5847
          %6283 = vmatprep.subr.bf16.mxu0 0
          %6284 = vmatpush1.bf16.msra.mxu0 %v5848
          %6285 = vmatprep.subr.bf16.mxu0 0
          %6286 = vmatpush1.bf16.msra.mxu0 %v5849
          %6287 = vmatprep.subr.bf16.mxu0 0
          %6288 = vmatpush1.bf16.msra.mxu0 %v5850
          %6289 = vmatprep.subr.bf16.mxu0 0
          %6290 = vmatpush1.bf16.msra.mxu0 %v5851
          %6291 = vmatprep.subr.bf16.mxu0 0
          %6292 = vmatpush1.bf16.msra.mxu0 %v5852
          %6293 = vmatprep.mubr.bf16.mxu0 %v4949
          %6294 = vmatmul.mubr.bf16.gmra.mrb[0].mxu0 %v4948
          %v6295 = vpop.f32.mrb[0].mxu0
          %v6296 = vadd.f32 %v6256, %v6295
          %v6297 = vpop.f32.mrb[0].mxu0
          %v6298 = vpop.f32.mrb[0].mxu0
          %v6299 = vpop.f32.mrb[0].mxu0
          %6300 = vdwg.mxu0
          %v6302 = vrot.slane %v6296, 1
          %v6303 = vrot.slane %v6296, 2
          %v6306 = vadd.f32 %v4299, %v6302
          %v6307 = vadd.f32 %v4300, %v6303
          %v6308 = vld [vmem:[%s615 + $0x1] sm:$0x1]
          %v6309 = vld [vmem:[%s619 + $0x1] sm:$0x1]
          %v6312 = vrot.slane %v6307, 7
          %v6315 = vsel %vm4245, %v6306, 0.0
          %6316 = vadd.xlane.f32.xlu0 %v6315
          %v6317 = vpop.xlane.xlu0 %6316
          %v6318 = vsel %vm4249, %v6312, 0.0
          %6319 = vadd.xlane.f32.xlu0 %v6318
          %v6320 = vpop.xlane.xlu0 %6319
          %v6321 = vmul.f32 %v6317, %v4253
          %v6322 = vmul.f32 %v6320, %v4253
          %v6325 = vrot.slane %v6322, 1
          %v6328 = vsub.f32 %v6306, %v6321
          %v6329 = vsub.f32 %v6307, %v6325
          %v6330 = vmul.f32 %v6328, %v6328
          %v6331 = vmul.f32 %v6329, %v6329
          %v6334 = vrot.slane %v6331, 7
          %v6337 = vsel %vm4245, %v6330, 0.0
          %6338 = vadd.xlane.f32.xlu0 %v6337
          %v6339 = vpop.xlane.xlu0 %6338
          %v6340 = vsel %vm4249, %v6334, 0.0
          %6341 = vadd.xlane.f32.xlu0 %v6340
          %v6342 = vpop.xlane.xlu0 %6341
          %v6343 = vmul.f32 %v6339, %v4253
          %v6344 = vmul.f32 %v6342, %v4253
          %v6345 = vadd.f32 %v6343, 1e-05
          %v6346 = vadd.f32 %v6344, 1e-05
          %v6347 = vrsqrt.pop %v6345
          %v6348 = vrsqrt.pop %v6346
          %v6351 = vrot.slane %v6348, 1
          %v6354 = vmul.f32 %v6328, %v6347
          %v6355 = vmul.f32 %v6329, %v6351
          %v6356 = vlaneseq
          %v6357 = vshrl.u32 %v6356, 7
          %v6358 = vsub.s32 0, %v6357
          %v6359 = vrot.slane %v6308, %v6358
          %v6360 = vmul.f32 %v6354, %v6359
          %v6361 = vmul.f32 %v6355, %v6359
          %v6362 = vlaneseq
          %v6363 = vshrl.u32 %v6362, 7
          %v6364 = vsub.s32 0, %v6363
          %v6365 = vrot.slane %v6309, %v6364
          %v6366 = vadd.f32 %v6360, %v6365
          %v6367 = vadd.f32 %v6361, %v6365
          %v6368 = vpack.c.bf16 %v6366, %v6366
          %v6369 = vpack.c.bf16 %v6367, %v6367
          %v6370 = vld [vmem:[%s13] sm:$0xf]
          %v6371 = vld [vmem:[%s13 + $0x4] sm:$0xf]
          %v6372 = vld [vmem:[%s13 + $0x8] sm:$0x3]
          %v6373 = vld [vmem:[%s14] sm:$0x1]
          %v6375 = vlaneseq
          %v6376 = vshrl.u32 %v6375, 7
          %v6377 = vsub.s32 0, %v6376
          %v6378 = vrot.slane %v6373, %v6377
          %v6382 = vunpack.c.l.b16 %v6368
          %v6383 = vunpack.c.l.b16 %v6369
          %v6384 = vrot.slane %v6382, 7
          %v6385 = vrot.slane %v6383, 6
          %v6386 = vsel %vm4173, %v6385, %v6384
          %v6387 = vpack.c.b16 %v6386, %v6386
          %v6391 = vunpack.c.l.b16 %v6370
          %v6392 = vunpack.c.l.b16 %v6371
          %v6393 = vunpack.c.l.b16 %v6372
          %v6394 = vpack.c.b16 %v6392, %v6391
          %v6395 = vpack.c.b16 %v6393, %v6393
          %v6398 = vsel %vm701, %v6387, 0
          %v6401 = vsel %vm705, %v6395, 0
          %6403 = vmatprep.subr.bf16.mxu0 0
          %6404 = vmatpush1.bf16.msra.mxu0 %v6394
          %6405 = vmatprep.subr.bf16.mxu0 0
          %6406 = vmatpush1.bf16.msra.mxu0 %v6401
          %6407 = vmatprep.subr.bf16.mxu0 0
          %6408 = vmatpush1.bf16.msra.mxu0 0
          %6409 = vmatprep.subr.bf16.mxu0 0
          %6410 = vmatpush1.bf16.msra.mxu0 0
          %6411 = vmatprep.subr.bf16.mxu0 0
          %6412 = vmatpush1.bf16.msra.mxu0 0
          %6413 = vmatprep.subr.bf16.mxu0 0
          %6414 = vmatpush1.bf16.msra.mxu0 0
          %6415 = vmatprep.subr.bf16.mxu0 0
          %6416 = vmatpush1.bf16.msra.mxu0 0
          %6417 = vmatprep.subr.bf16.mxu0 0
          %6418 = vmatpush1.bf16.msra.mxu0 0
          %6419 = vmatprep.subr.bf16.mxu0 0
          %6420 = vmatpush1.bf16.msra.mxu0 0
          %6421 = vmatprep.subr.bf16.mxu0 0
          %6422 = vmatpush1.bf16.msra.mxu0 0
          %6423 = vmatprep.subr.bf16.mxu0 0
          %6424 = vmatpush1.bf16.msra.mxu0 0
          %6425 = vmatprep.subr.bf16.mxu0 0
          %6426 = vmatpush1.bf16.msra.mxu0 0
          %6427 = vmatprep.subr.bf16.mxu0 0
          %6428 = vmatpush1.bf16.msra.mxu0 0
          %6429 = vmatprep.subr.bf16.mxu0 0
          %6430 = vmatpush1.bf16.msra.mxu0 0
          %6431 = vmatprep.subr.bf16.mxu0 0
          %6432 = vmatpush1.bf16.msra.mxu0 0
          %6433 = vmatprep.subr.bf16.mxu0 0
          %6434 = vmatpush1.bf16.msra.mxu0 0
          %6435 = vmatprep.mubr.bf16.mxu0 0
          %6436 = vmatmul.mubr.bf16.gmra.mrb[0].mxu0 %v6398
          %v6437 = vpop.f32.mrb[0].mxu0
          %v6438 = vadd.f32 %v6378, %v6437
          %v6439 = vpop.f32.mrb[0].mxu0
          %v6440 = vpop.f32.mrb[0].mxu0
          %v6441 = vpop.f32.mrb[0].mxu0
          %6442 = vdwg.mxu0
          %v6443 = vtanh.pop %v6438
          %vm6444 = vcmask 50176
          %6445 = vst.msk [vmem:[#allocation3] sm:$0x3] %vm6444, %v6443
        $region92: #{transformer_trader.1} parent=79 // pred_fallthru
          _
        // Predicated region
        $region93: #{transformer_trader.1} parent=79 // pred_check
          %p6446 = pneg %p405
        $region94: #{transformer_trader.1} parent=79 // pred_check_branch
          %6448 = sbr.rel (%p6446) target = $region96
        $region95: #{transformer_trader.1} parent=79 // pred_region
          %s6450 = ssub.s32 32, 32
          %6451 = vsyncadd [#allocation4], %s6450
          %s6453 = sshll.u32 [#allocation3], 4
          %s6454 = int_to_ptr.vmem [resolvable:$true] %s6453
          %6456 = dma.vmem_to_hbm [thread:$0]  %s6454, 32, %s15, [#allocation4]
        $region96: #{transformer_trader.1} parent=79 // pred_fallthru
          _
        // Predicated region
        $region97: #{transformer_trader.1} parent=79 // pred_check
          %p6457 = pneg %p405
        $region98: #{transformer_trader.1} parent=79 // pred_check_branch
          %6459 = sbr.rel (%p6457) target = $region100
        $region99: #{transformer_trader.1} parent=79 // pred_region
          %6460 = dma.done [#allocation4], 32
        $region100: #{transformer_trader.1} parent=79 // pred_fallthru
          _
      $region80: #{transformer_trader.1} parent=5 // pred_fallthru
        _
      %p6461 = scmp.le.s32.totalorder 2, %s22
      // Predicated region
      $region101: #{transformer_trader.1} parent=5 // pred_check
        %p6462 = pneg %p6461
      $region102: #{transformer_trader.1} parent=5 // pred_check_branch
        %6464 = sbr.rel (%p6462) target = $region104
      $region103: #{transformer_trader.1} parent=5 // pred_region
        %s6465 = ssub.s32 %s22, 2
      $region104: #{transformer_trader.1} parent=5 // pred_fallthru
        _
    $region6: #{transformer_trader.1} parent=1 // loop_footer
      %s26 = sadd.s32 1, %s22
    $region7: #{transformer_trader.1} parent=1 // loop_footer_branch
      %21 = sbr.rel target = $region3
    $region8: #{transformer_trader.1} parent=1 // loop_exit
      _
    %6466 = vsyncpa [#allocation4], 1
    %s6467 = scalar_lea.sflag [#allocation4], 1
    %6468 = vsyncpa %s6467, 1

</llo_original>
